<compile_context>
chip_gen: v7x
topology: tpu7x:2x2x1
jax: 0.10.0
libtpu: 0.0.40
codegen_flags: <defaults>
</compile_context>

<pallas_src>
import jax
import jax.numpy as jnp
from jax.experimental import pallas as pl
from jax.experimental.pallas import tpu as pltpu

IN_F, H1, H2, H3, OUT_F = 12, 512, 1024, 512, 2
K_PAD = 128     # lane-padded input feature dim (12 -> 128)
OUT_PAD = 128   # lane-padded output dim (2 -> 128)
SUB = 8         # f32 sublane multiple


def _round_up(x, m):
    return (x + m - 1) // m * m


def _mlp_kernel(x_ref,
                w1_ref, b1_ref,
                w2_ref, b2_ref,
                w3_ref, b3_ref,
                w4_ref, b4_ref,
                o_ref):
    # Fused hot path: 4 bf16 MXU matmuls (f32 accumulation) + 3 ReLUs.
    # All weights are VMEM-resident across the batch grid (constant index_map).
    h = jnp.dot(x_ref[...].astype(jnp.bfloat16), w1_ref[...],
                preferred_element_type=jnp.float32) + b1_ref[...]
    h = jnp.maximum(h, 0.0)                       # ReLU (Dropout = identity, eval)

    h = jnp.dot(h.astype(jnp.bfloat16), w2_ref[...],
                preferred_element_type=jnp.float32) + b2_ref[...]
    h = jnp.maximum(h, 0.0)

    h = jnp.dot(h.astype(jnp.bfloat16), w3_ref[...],
                preferred_element_type=jnp.float32) + b3_ref[...]
    h = jnp.maximum(h, 0.0)

    h = jnp.dot(h.astype(jnp.bfloat16), w4_ref[...],
                preferred_element_type=jnp.float32) + b4_ref[...]
    o_ref[...] = h                                # lane-dense (TB, 128) store


def prepare_params(params):
    """Quantize/pad PyTorch-layout params ((in,out) W, (out,) b) for the kernel."""
    (w1, b1), (w2, b2), (w3, b3), (w4, b4) = params
    w1p = jnp.zeros((K_PAD, H1), jnp.bfloat16).at[:IN_F, :].set(
        w1.astype(jnp.bfloat16))
    w4p = jnp.zeros((H3, OUT_PAD), jnp.bfloat16).at[:, :OUT_F].set(
        w4.astype(jnp.bfloat16))
    b4p = jnp.zeros((1, OUT_PAD), jnp.float32).at[:, :OUT_F].set(
        b4.reshape(1, -1).astype(jnp.float32))
    return (w1p, b1.reshape(1, -1).astype(jnp.float32),
            w2.astype(jnp.bfloat16), b2.reshape(1, -1).astype(jnp.float32),
            w3.astype(jnp.bfloat16), b3.reshape(1, -1).astype(jnp.float32),
            w4p, b4p)


def pe_model_forward(x, prepped, *, block_b=256):
    """x: (B, 12) any float dtype (cast to f32 like inputs.float())."""
    w1p, b1, w2, b2, w3, b3, w4p, b4p = prepped
    B = x.shape[0]
    x = x.astype(jnp.float32)

    # Batch tile: up to 256 rows, sublane-aligned; pad the tail tile with zeros.
    tb = min(block_b, _round_up(max(B, 1), SUB))
    b_pad = _round_up(B, tb)
    x_pad = jnp.zeros((b_pad, K_PAD), jnp.float32).at[:B, :IN_F].set(x)

    tile = lambda i: (i, 0)     # batch-indexed x/out tiles
    const = lambda i: (0, 0)    # weights: one DMA, resident across the grid

    flops = 2 * b_pad * (K_PAD * H1 + H1 * H2 + H2 * H3 + H3 * OUT_PAD)
    bytes_accessed = (
        (w1p.size + w2.size + w3.size + w4p.size) * 2         # bf16 weights
        + (b1.size + b2.size + b3.size + b4p.size) * 4         # f32 biases
        + b_pad * (K_PAD + OUT_PAD) * 4)                       # x in / out

    out = pl.pallas_call(
        _mlp_kernel,
        out_shape=jax.ShapeDtypeStruct((b_pad, OUT_PAD), jnp.float32),
        grid_spec=pltpu.PrefetchScalarGridSpec(
            num_scalar_prefetch=0,
            grid=(b_pad // tb,),
            in_specs=[
                pl.BlockSpec((tb, K_PAD), tile),
                pl.BlockSpec((K_PAD, H1), const),
                pl.BlockSpec((1, H1), const),
                pl.BlockSpec((H1, H2), const),
                pl.BlockSpec((1, H2), const),
                pl.BlockSpec((H2, H3), const),
                pl.BlockSpec((1, H3), const),
                pl.BlockSpec((H3, OUT_PAD), const),
                pl.BlockSpec((1, OUT_PAD), const),
            ],
            out_specs=pl.BlockSpec((tb, OUT_PAD), tile),
        ),
        compiler_params=pltpu.CompilerParams(
            dimension_semantics=("parallel",),
            vmem_limit_bytes=16 << 20,
        ),
        cost_estimate=pl.CostEstimate(
            flops=flops, transcendentals=0, bytes_accessed=bytes_accessed),
    )(x_pad, w1p, b1, w2, b2, w3, b3, w4p, b4p)

    return out[:B, :OUT_F]


def init_params(key):
    """PyTorch nn.Linear-style uniform init; weights stored (in, out)."""
    layer_dims = [(IN_F, H1), (H1, H2), (H2, H3), (H3, OUT_F)]
    params = []
    for fan_in, fan_out in layer_dims:
        key, kw, kb = jax.random.split(key, 3)
        bound = 1.0 / float(fan_in) ** 0.5
        w = jax.random.uniform(kw, (fan_in, fan_out), jnp.float32, -bound, bound)
        b = jax.random.uniform(kb, (fan_out,), jnp.float32, -bound, bound)
        params.append((w, b))
    return params


def reference_forward(x, prepped):
    """Pure-JAX reference with the same bf16 weight/activation quantization."""
    w1p, b1, w2, b2, w3, b3, w4p, b4p = prepped
    B = x.shape[0]
    h = jnp.zeros((B, K_PAD), jnp.float32).at[:, :IN_F].set(x.astype(jnp.float32))
    layers = [(w1p, b1), (w2, b2), (w3, b3), (w4p, b4p)]
    for i, (w, b) in enumerate(layers):
        h = jnp.dot(h.astype(jnp.bfloat16).astype(jnp.float32),
                    w.astype(jnp.float32),
                    precision=jax.lax.Precision.HIGHEST) + b
        if i < len(layers) - 1:
            h = jnp.maximum(h, 0.0)
    return h[:, :OUT_F]


if __name__ == "__main__":
    key = jax.random.PRNGKey(0)
    key, kx = jax.random.split(key)

    B = 8  # small batch, sublane-aligned
    x = jax.random.normal(kx, (B, IN_F), jnp.float32)

    params = init_params(jax.random.PRNGKey(0))
    prepped = prepare_params(params)

    out = pe_model_forward(x, prepped)
    out = jax.block_until_ready(out)

    ref = reference_forward(x, prepped)
    assert out.shape == (B, OUT_F), out.shape
    assert jnp.allclose(out, ref, atol=2e-3, rtol=2e-3), float(
        jnp.max(jnp.abs(out - ref)))

    print("KERNEL_OK")
</pallas_src>

<mosaic_0001>
module attributes {stable_mosaic.version = 11 : i64} {
  func.func @_mlp_kernel(%arg0: i32, %arg1: memref<8x128xf32, #tpu.memory_space<vmem>>, %arg2: memref<128x512xbf16, #tpu.memory_space<vmem>>, %arg3: memref<1x512xf32, #tpu.memory_space<vmem>>, %arg4: memref<512x1024xbf16, #tpu.memory_space<vmem>>, %arg5: memref<1x1024xf32, #tpu.memory_space<vmem>>, %arg6: memref<1024x512xbf16, #tpu.memory_space<vmem>>, %arg7: memref<1x512xf32, #tpu.memory_space<vmem>>, %arg8: memref<512x128xbf16, #tpu.memory_space<vmem>>, %arg9: memref<1x128xf32, #tpu.memory_space<vmem>>, %arg10: memref<8x128xf32, #tpu.memory_space<vmem>>) attributes {dimension_semantics = [#tpu.dimension_semantics<parallel>], iteration_bounds = array<i64: 1>, scalar_prefetch = 0 : i64, scratch_operands = 0 : i64, tpu.core_type = #tpu.core_type<tc>, window_params = [{transform_indices = @transform_0, window_bounds = array<i64: 8, 128>}, {pipeline_mode = #tpu.pipeline_mode<synchronous>, transform_indices = @transform_1, window_bounds = array<i64: 128, 512>}, {pipeline_mode = #tpu.pipeline_mode<synchronous>, transform_indices = @transform_2, window_bounds = array<i64: 1, 512>}, {pipeline_mode = #tpu.pipeline_mode<synchronous>, transform_indices = @transform_3, window_bounds = array<i64: 512, 1024>}, {pipeline_mode = #tpu.pipeline_mode<synchronous>, transform_indices = @transform_4, window_bounds = array<i64: 1, 1024>}, {pipeline_mode = #tpu.pipeline_mode<synchronous>, transform_indices = @transform_5, window_bounds = array<i64: 1024, 512>}, {pipeline_mode = #tpu.pipeline_mode<synchronous>, transform_indices = @transform_6, window_bounds = array<i64: 1, 512>}, {pipeline_mode = #tpu.pipeline_mode<synchronous>, transform_indices = @transform_7, window_bounds = array<i64: 512, 128>}, {pipeline_mode = #tpu.pipeline_mode<synchronous>, transform_indices = @transform_8, window_bounds = array<i64: 1, 128>}, {transform_indices = @transform_9, window_bounds = array<i64: 8, 128>}]} {
    %c0 = arith.constant 0 : index
    %c0_0 = arith.constant 0 : index
    %0 = vector.load %arg1[%c0, %c0_0] : memref<8x128xf32, #tpu.memory_space<vmem>>, vector<8x128xf32>
    %1 = arith.truncf %0 : vector<8x128xf32> to vector<8x128xbf16>
    %c0_1 = arith.constant 0 : index
    %c0_2 = arith.constant 0 : index
    %2 = vector.load %arg2[%c0_1, %c0_2] : memref<128x512xbf16, #tpu.memory_space<vmem>>, vector<128x512xbf16>
    %cst = arith.constant dense<0.000000e+00> : vector<8x512xf32>
    %3 = tpu.matmul %1, %2, %cst {dimension_numbers = #tpu.dot_dimension_numbers<[1], [0], [0], [1], [0, 0, 1, 1], [], []>} : vector<8x128xbf16>, vector<128x512xbf16>, vector<8x512xf32> -> vector<8x512xf32>
    %c0_3 = arith.constant 0 : index
    %c0_4 = arith.constant 0 : index
    %4 = vector.load %arg3[%c0_3, %c0_4] : memref<1x512xf32, #tpu.memory_space<vmem>>, vector<1x512xf32>
    %5 = vector.broadcast %4 : vector<1x512xf32> to vector<8x512xf32>
    %6 = arith.addf %3, %5 : vector<8x512xf32>
    %cst_5 = arith.constant 0.000000e+00 : f32
    %7 = vector.broadcast %cst_5 : f32 to vector<8x512xf32>
    %8 = arith.maximumf %6, %7 : vector<8x512xf32>
    %9 = arith.truncf %8 : vector<8x512xf32> to vector<8x512xbf16>
    %c0_6 = arith.constant 0 : index
    %c0_7 = arith.constant 0 : index
    %10 = vector.load %arg4[%c0_6, %c0_7] : memref<512x1024xbf16, #tpu.memory_space<vmem>>, vector<512x1024xbf16>
    %cst_8 = arith.constant dense<0.000000e+00> : vector<8x1024xf32>
    %11 = tpu.matmul %9, %10, %cst_8 {dimension_numbers = #tpu.dot_dimension_numbers<[1], [0], [0], [1], [0, 0, 1, 1], [], []>} : vector<8x512xbf16>, vector<512x1024xbf16>, vector<8x1024xf32> -> vector<8x1024xf32>
    %c0_9 = arith.constant 0 : index
    %c0_10 = arith.constant 0 : index
    %12 = vector.load %arg5[%c0_9, %c0_10] : memref<1x1024xf32, #tpu.memory_space<vmem>>, vector<1x1024xf32>
    %13 = vector.broadcast %12 : vector<1x1024xf32> to vector<8x1024xf32>
    %14 = arith.addf %11, %13 : vector<8x1024xf32>
    %cst_11 = arith.constant 0.000000e+00 : f32
    %15 = vector.broadcast %cst_11 : f32 to vector<8x1024xf32>
    %16 = arith.maximumf %14, %15 : vector<8x1024xf32>
    %17 = arith.truncf %16 : vector<8x1024xf32> to vector<8x1024xbf16>
    %c0_12 = arith.constant 0 : index
    %c0_13 = arith.constant 0 : index
    %18 = vector.load %arg6[%c0_12, %c0_13] : memref<1024x512xbf16, #tpu.memory_space<vmem>>, vector<1024x512xbf16>
    %cst_14 = arith.constant dense<0.000000e+00> : vector<8x512xf32>
    %19 = tpu.matmul %17, %18, %cst_14 {dimension_numbers = #tpu.dot_dimension_numbers<[1], [0], [0], [1], [0, 0, 1, 1], [], []>} : vector<8x1024xbf16>, vector<1024x512xbf16>, vector<8x512xf32> -> vector<8x512xf32>
    %c0_15 = arith.constant 0 : index
    %c0_16 = arith.constant 0 : index
    %20 = vector.load %arg7[%c0_15, %c0_16] : memref<1x512xf32, #tpu.memory_space<vmem>>, vector<1x512xf32>
    %21 = vector.broadcast %20 : vector<1x512xf32> to vector<8x512xf32>
    %22 = arith.addf %19, %21 : vector<8x512xf32>
    %cst_17 = arith.constant 0.000000e+00 : f32
    %23 = vector.broadcast %cst_17 : f32 to vector<8x512xf32>
    %24 = arith.maximumf %22, %23 : vector<8x512xf32>
    %25 = arith.truncf %24 : vector<8x512xf32> to vector<8x512xbf16>
    %c0_18 = arith.constant 0 : index
    %c0_19 = arith.constant 0 : index
    %26 = vector.load %arg8[%c0_18, %c0_19] : memref<512x128xbf16, #tpu.memory_space<vmem>>, vector<512x128xbf16>
    %cst_20 = arith.constant dense<0.000000e+00> : vector<8x128xf32>
    %27 = tpu.matmul %25, %26, %cst_20 {dimension_numbers = #tpu.dot_dimension_numbers<[1], [0], [0], [1], [0, 0, 1, 1], [], []>} : vector<8x512xbf16>, vector<512x128xbf16>, vector<8x128xf32> -> vector<8x128xf32>
    %c0_21 = arith.constant 0 : index
    %c0_22 = arith.constant 0 : index
    %28 = vector.load %arg9[%c0_21, %c0_22] : memref<1x128xf32, #tpu.memory_space<vmem>>, vector<1x128xf32>
    %29 = vector.broadcast %28 : vector<1x128xf32> to vector<8x128xf32>
    %30 = arith.addf %27, %29 : vector<8x128xf32>
    %c0_23 = arith.constant 0 : index
    %c0_24 = arith.constant 0 : index
    %31 = vector.load %arg10[%c0_23, %c0_24] : memref<8x128xf32, #tpu.memory_space<vmem>>, vector<8x128xf32>
    tpu.vector_store %arg10[%c0_23, %c0_24], %30 {strides = array<i32>} : memref<8x128xf32, #tpu.memory_space<vmem>>, vector<8x128xf32>,
    return
  }
  func.func @transform_0(%arg0: i32) -> (i32, i32) {
    %c0_i32 = arith.constant 0 : i32
    %c0_i32_0 = arith.constant 0 : i32
    return %arg0, %c0_i32 : i32, i32
  }
  func.func @transform_1(%arg0: i32) -> (i32, i32) {
    %c0_i32 = arith.constant 0 : i32
    %c0_i32_0 = arith.constant 0 : i32
    %c0_i32_1 = arith.constant 0 : i32
    return %c0_i32, %c0_i32_0 : i32, i32
  }
  func.func @transform_2(%arg0: i32) -> (i32, i32) {
    %c0_i32 = arith.constant 0 : i32
    %c0_i32_0 = arith.constant 0 : i32
    %c0_i32_1 = arith.constant 0 : i32
    return %c0_i32, %c0_i32_0 : i32, i32
  }
  func.func @transform_3(%arg0: i32) -> (i32, i32) {
    %c0_i32 = arith.constant 0 : i32
    %c0_i32_0 = arith.constant 0 : i32
    %c0_i32_1 = arith.constant 0 : i32
    return %c0_i32, %c0_i32_0 : i32, i32
  }
  func.func @transform_4(%arg0: i32) -> (i32, i32) {
    %c0_i32 = arith.constant 0 : i32
    %c0_i32_0 = arith.constant 0 : i32
    %c0_i32_1 = arith.constant 0 : i32
    return %c0_i32, %c0_i32_0 : i32, i32
  }
  func.func @transform_5(%arg0: i32) -> (i32, i32) {
    %c0_i32 = arith.constant 0 : i32
    %c0_i32_0 = arith.constant 0 : i32
    %c0_i32_1 = arith.constant 0 : i32
    return %c0_i32, %c0_i32_0 : i32, i32
  }
  func.func @transform_6(%arg0: i32) -> (i32, i32) {
    %c0_i32 = arith.constant 0 : i32
    %c0_i32_0 = arith.constant 0 : i32
    %c0_i32_1 = arith.constant 0 : i32
    return %c0_i32, %c0_i32_0 : i32, i32
  }
  func.func @transform_7(%arg0: i32) -> (i32, i32) {
    %c0_i32 = arith.constant 0 : i32
    %c0_i32_0 = arith.constant 0 : i32
    %c0_i32_1 = arith.constant 0 : i32
    return %c0_i32, %c0_i32_0 : i32, i32
  }
  func.func @transform_8(%arg0: i32) -> (i32, i32) {
    %c0_i32 = arith.constant 0 : i32
    %c0_i32_0 = arith.constant 0 : i32
    %c0_i32_1 = arith.constant 0 : i32
    return %c0_i32, %c0_i32_0 : i32, i32
  }
  func.func @transform_9(%arg0: i32) -> (i32, i32) {
    %c0_i32 = arith.constant 0 : i32
    %c0_i32_0 = arith.constant 0 : i32
    return %arg0, %c0_i32 : i32, i32
  }
}

</mosaic_0001>

<llo_original>
// kernel: tpu_custom_call.1
$region0: #{tpu_custom_call.1}
  #allocation0 [shape = 'u32[]', space=smem, size = 0x4, offset = 0x4, fixed_abs, tag = 'smem constant byte address 0x4 - core index']
  #allocation1 [shape = 'u32[144,128]{1,0:T(1,128)}', space=vmem, size = 0x12000, scoped, tag = 'internal scratch']
  %s0 = inlined_call_operand.hbm [shape: f32[8,128], index: 0, kind: input, shape index: {}]
  %s1 = inlined_call_operand.hbm [shape: bf16[128,512], index: 1, kind: input, shape index: {}]
  %s2 = inlined_call_operand.vmem [shape: f32[1,512], index: 2, kind: input, shape index: {}]
  %s3 = inlined_call_operand.hbm [shape: bf16[512,1024], index: 3, kind: input, shape index: {}]
  %s4 = inlined_call_operand.vmem [shape: f32[1,1024], index: 4, kind: input, shape index: {}]
  %s5 = inlined_call_operand.hbm [shape: bf16[1024,512], index: 5, kind: input, shape index: {}]
  %s6 = inlined_call_operand.vmem [shape: f32[1,512], index: 6, kind: input, shape index: {}]
  %s7 = inlined_call_operand.hbm [shape: bf16[512,128], index: 7, kind: input, shape index: {}]
  %s8 = inlined_call_operand.vmem [shape: f32[1,128], index: 8, kind: input, shape index: {}]
  %s9 = inlined_call_operand.hbm [shape: f32[8,128], index: 9, kind: output, shape index: {}]
  %s10 = sld [smem:[#allocation0]]
  $region66: #{tpu_custom_call.1} parent=0
    _
  %s12 = ssub.s32 1, %s10
  %s13 = scalar_select 0, %s12, %s10
  $region1: #{tpu_custom_call.1} parent=0
    #allocation2 [shape = 'u8[4096]{0}', space=vmem, size = 0x1000, scoped, tag = 'input window, operand 0, single buffered']
    #allocation3 [shape = 's32[1]{0}', space=sflag, size = 0x4, scoped, tag = 'scoped memory for tpu_custom_call.1']
    #allocation4 [shape = 's32[1]{0}', space=sflag, size = 0x4, scoped, tag = 'scoped memory for tpu_custom_call.1']
    #allocation5 [shape = 'u8[131072]{0}', space=vmem, size = 0x20000, scoped, tag = 'input window, operand 1, single buffered']
    #allocation6 [shape = 's32[1]{0}', space=sflag, size = 0x4, scoped, tag = 'scoped memory for tpu_custom_call.1']
    #allocation7 [shape = 'u8[1048576]{0}', space=vmem, size = 0x100000, scoped, tag = 'input window, operand 3, single buffered']
    #allocation8 [shape = 'u8[1048576]{0}', space=vmem, size = 0x100000, scoped, tag = 'input window, operand 5, single buffered']
    #allocation9 [shape = 's32[1]{0}', space=sflag, size = 0x4, scoped, tag = 'scoped memory for tpu_custom_call.1']
    #allocation10 [shape = 'u8[131072]{0}', space=vmem, size = 0x20000, scoped, tag = 'input window, operand 7, single buffered']
    #allocation11 [shape = 'u8[4096]{0}', space=vmem, size = 0x1000, scoped, tag = 'output window, operand 0, single buffered']
    %14 = vsyncpa [#allocation3], 0
    %15 = vsyncpa [#allocation6], 0
    %16 = vsyncpa [#allocation9], 0
    %17 = vsyncpa [#allocation4], 0
    // Predicated region
    $region2: #{tpu_custom_call.1} parent=1 // pred_check
      _
    $region3: #{tpu_custom_call.1} parent=1 // pred_check_branch
      %19 = sbr.rel (0) target = $region5
    $region4: #{tpu_custom_call.1} parent=1 // pred_region
      %s21 = ssub.s32 128, 128
      %22 = vsyncadd [#allocation3], %s21
      %s24 = sshll.u32 [#allocation2], 4
      %s25 = int_to_ptr.vmem [resolvable:$true] %s24
      %27 = dma.hbm_to_vmem [thread:$0]  %s0, 128, %s25, [#allocation3]
    $region5: #{tpu_custom_call.1} parent=1 // pred_fallthru
      _
    // Predicated region
    $region6: #{tpu_custom_call.1} parent=1 // pred_check
      _
    $region7: #{tpu_custom_call.1} parent=1 // pred_check_branch
      %29 = sbr.rel (0) target = $region9
    $region8: #{tpu_custom_call.1} parent=1 // pred_region
      %s31 = ssub.s32 4096, 4096
      %32 = vsyncadd [#allocation6], %s31
      %s33 = sshll.u32 [#allocation5], 4
      %s34 = int_to_ptr.vmem [resolvable:$true] %s33
      %39 = dma.hbm_to_vmem [thread:$0]  %s1, 4096, %s34, [#allocation6], 256, 256, 16
    $region9: #{tpu_custom_call.1} parent=1 // pred_fallthru
      _
    // Predicated region
    $region10: #{tpu_custom_call.1} parent=1 // pred_check
      _
    $region11: #{tpu_custom_call.1} parent=1 // pred_check_branch
      %41 = sbr.rel (0) target = $region13
    $region12: #{tpu_custom_call.1} parent=1 // pred_region
      _
    $region13: #{tpu_custom_call.1} parent=1 // pred_fallthru
      _
    // Predicated region
    $region14: #{tpu_custom_call.1} parent=1 // pred_check
      _
    $region15: #{tpu_custom_call.1} parent=1 // pred_check_branch
      %43 = sbr.rel (0) target = $region17
    $region16: #{tpu_custom_call.1} parent=1 // pred_region
      %s45 = ssub.s32 32768, 32768
      %46 = vsyncadd [#allocation6], %s45
      %s47 = sshll.u32 [#allocation7], 4
      %s48 = int_to_ptr.vmem [resolvable:$true] %s47
      %53 = dma.hbm_to_vmem [thread:$0]  %s3, 32768, %s48, [#allocation6], 512, 512, 32
    $region17: #{tpu_custom_call.1} parent=1 // pred_fallthru
      _
    // Predicated region
    $region18: #{tpu_custom_call.1} parent=1 // pred_check
      _
    $region19: #{tpu_custom_call.1} parent=1 // pred_check_branch
      %55 = sbr.rel (0) target = $region21
    $region20: #{tpu_custom_call.1} parent=1 // pred_region
      _
    $region21: #{tpu_custom_call.1} parent=1 // pred_fallthru
      _
    // Predicated region
    $region22: #{tpu_custom_call.1} parent=1 // pred_check
      _
    $region23: #{tpu_custom_call.1} parent=1 // pred_check_branch
      %57 = sbr.rel (0) target = $region25
    $region24: #{tpu_custom_call.1} parent=1 // pred_region
      %s59 = ssub.s32 32768, 32768
      %60 = vsyncadd [#allocation9], %s59
      %s61 = sshll.u32 [#allocation8], 4
      %s62 = int_to_ptr.vmem [resolvable:$true] %s61
      %67 = dma.hbm_to_vmem [thread:$0]  %s5, 32768, %s62, [#allocation9], 256, 256, 16
    $region25: #{tpu_custom_call.1} parent=1 // pred_fallthru
      _
    // Predicated region
    $region26: #{tpu_custom_call.1} parent=1 // pred_check
      _
    $region27: #{tpu_custom_call.1} parent=1 // pred_check_branch
      %69 = sbr.rel (0) target = $region29
    $region28: #{tpu_custom_call.1} parent=1 // pred_region
      _
    $region29: #{tpu_custom_call.1} parent=1 // pred_fallthru
      _
    // Predicated region
    $region30: #{tpu_custom_call.1} parent=1 // pred_check
      _
    $region31: #{tpu_custom_call.1} parent=1 // pred_check_branch
      %71 = sbr.rel (0) target = $region33
    $region32: #{tpu_custom_call.1} parent=1 // pred_region
      %s73 = ssub.s32 4096, 4096
      %74 = vsyncadd [#allocation9], %s73
      %s75 = sshll.u32 [#allocation10], 4
      %s76 = int_to_ptr.vmem [resolvable:$true] %s75
      %81 = dma.hbm_to_vmem [thread:$0]  %s7, 4096, %s76, [#allocation9], 64, 64, 4
    $region33: #{tpu_custom_call.1} parent=1 // pred_fallthru
      _
    // Predicated region
    $region34: #{tpu_custom_call.1} parent=1 // pred_check
      _
    $region35: #{tpu_custom_call.1} parent=1 // pred_check_branch
      %83 = sbr.rel (0) target = $region37
    $region36: #{tpu_custom_call.1} parent=1 // pred_region
      _
    $region37: #{tpu_custom_call.1} parent=1 // pred_fallthru
      _
    // Predicated region
    $region38: #{tpu_custom_call.1} parent=1 // pred_check
      _
    $region39: #{tpu_custom_call.1} parent=1 // pred_check_branch
      %85 = sbr.rel (0) target = $region41
    $region40: #{tpu_custom_call.1} parent=1 // pred_region
      %86 = dma.done [#allocation3], 128
    $region41: #{tpu_custom_call.1} parent=1 // pred_fallthru
      _
    // Predicated region
    $region42: #{tpu_custom_call.1} parent=1 // pred_check
      _
    $region43: #{tpu_custom_call.1} parent=1 // pred_check_branch
      %88 = sbr.rel (0) target = $region45
    $region44: #{tpu_custom_call.1} parent=1 // pred_region
      %89 = dma.done [#allocation6], 4096
    $region45: #{tpu_custom_call.1} parent=1 // pred_fallthru
      _
    // Predicated region
    $region46: #{tpu_custom_call.1} parent=1 // pred_check
      _
    $region47: #{tpu_custom_call.1} parent=1 // pred_check_branch
      %91 = sbr.rel (0) target = $region49
    $region48: #{tpu_custom_call.1} parent=1 // pred_region
      %92 = dma.done [#allocation6], 32768
    $region49: #{tpu_custom_call.1} parent=1 // pred_fallthru
      _
    // Predicated region
    $region50: #{tpu_custom_call.1} parent=1 // pred_check
      _
    $region51: #{tpu_custom_call.1} parent=1 // pred_check_branch
      %94 = sbr.rel (0) target = $region53
    $region52: #{tpu_custom_call.1} parent=1 // pred_region
      %95 = dma.done [#allocation9], 32768
    $region53: #{tpu_custom_call.1} parent=1 // pred_fallthru
      _
    // Predicated region
    $region54: #{tpu_custom_call.1} parent=1 // pred_check
      _
    $region55: #{tpu_custom_call.1} parent=1 // pred_check_branch
      %97 = sbr.rel (0) target = $region57
    $region56: #{tpu_custom_call.1} parent=1 // pred_region
      %98 = dma.done [#allocation9], 4096
    $region57: #{tpu_custom_call.1} parent=1 // pred_fallthru
      _
    %v100 = vld [vmem:[#allocation2] sm:$0xff]
    %v101 = vpack.c.bf16 %v100, %v100
    %v102 = vld [vmem:[#allocation5] sm:$0xff]
    %v103 = vld [vmem:[#allocation5 + $0x8] sm:$0xff]
    %v104 = vld [vmem:[#allocation5 + $0x10] sm:$0xff]
    %v105 = vld [vmem:[#allocation5 + $0x18] sm:$0xff]
    %v106 = vld [vmem:[#allocation5 + $0x20] sm:$0xff]
    %v107 = vld [vmem:[#allocation5 + $0x28] sm:$0xff]
    %v108 = vld [vmem:[#allocation5 + $0x30] sm:$0xff]
    %v109 = vld [vmem:[#allocation5 + $0x38] sm:$0xff]
    %v110 = vld [vmem:[#allocation5 + $0x40] sm:$0xff]
    %v111 = vld [vmem:[#allocation5 + $0x48] sm:$0xff]
    %v112 = vld [vmem:[#allocation5 + $0x50] sm:$0xff]
    %v113 = vld [vmem:[#allocation5 + $0x58] sm:$0xff]
    %v114 = vld [vmem:[#allocation5 + $0x60] sm:$0xff]
    %v115 = vld [vmem:[#allocation5 + $0x68] sm:$0xff]
    %v116 = vld [vmem:[#allocation5 + $0x70] sm:$0xff]
    %v117 = vld [vmem:[#allocation5 + $0x78] sm:$0xff]
    %v118 = vld [vmem:[#allocation5 + $0x80] sm:$0xff]
    %v119 = vld [vmem:[#allocation5 + $0x88] sm:$0xff]
    %v120 = vld [vmem:[#allocation5 + $0x90] sm:$0xff]
    %v121 = vld [vmem:[#allocation5 + $0x98] sm:$0xff]
    %v122 = vld [vmem:[#allocation5 + $0xa0] sm:$0xff]
    %v123 = vld [vmem:[#allocation5 + $0xa8] sm:$0xff]
    %v124 = vld [vmem:[#allocation5 + $0xb0] sm:$0xff]
    %v125 = vld [vmem:[#allocation5 + $0xb8] sm:$0xff]
    %v126 = vld [vmem:[#allocation5 + $0xc0] sm:$0xff]
    %v127 = vld [vmem:[#allocation5 + $0xc8] sm:$0xff]
    %v128 = vld [vmem:[#allocation5 + $0xd0] sm:$0xff]
    %v129 = vld [vmem:[#allocation5 + $0xd8] sm:$0xff]
    %v130 = vld [vmem:[#allocation5 + $0xe0] sm:$0xff]
    %v131 = vld [vmem:[#allocation5 + $0xe8] sm:$0xff]
    %v132 = vld [vmem:[#allocation5 + $0xf0] sm:$0xff]
    %v133 = vld [vmem:[#allocation5 + $0xf8] sm:$0xff]
    %v134 = vld [vmem:[%s2] sm:$0xf]
    %v136 = vlaneseq
    %v137 = vshrl.u32 %v136, 7
    %v138 = vsub.s32 0, %v137
    %v139 = vrot.slane %v134, %v138
    %v140 = vlaneseq
    %v141 = vshrl.u32 %v140, 7
    %v142 = vsub.s32 1, %v141
    %v143 = vrot.slane %v134, %v142
    %v144 = vlaneseq
    %v145 = vshrl.u32 %v144, 7
    %v146 = vsub.s32 2, %v145
    %v147 = vrot.slane %v134, %v146
    %v148 = vlaneseq
    %v149 = vshrl.u32 %v148, 7
    %v150 = vsub.s32 3, %v149
    %v151 = vrot.slane %v134, %v150
    %v188 = vunpack.c.l.b16 %v102
    %v189 = vunpack.c.h.b16 %v102
    %v190 = vunpack.c.l.b16 %v103
    %v191 = vunpack.c.h.b16 %v103
    %v192 = vunpack.c.l.b16 %v104
    %v193 = vunpack.c.h.b16 %v104
    %v194 = vunpack.c.l.b16 %v105
    %v195 = vunpack.c.h.b16 %v105
    %v196 = vunpack.c.l.b16 %v106
    %v197 = vunpack.c.h.b16 %v106
    %v198 = vunpack.c.l.b16 %v107
    %v199 = vunpack.c.h.b16 %v107
    %v200 = vunpack.c.l.b16 %v108
    %v201 = vunpack.c.h.b16 %v108
    %v202 = vunpack.c.l.b16 %v109
    %v203 = vunpack.c.h.b16 %v109
    %v204 = vunpack.c.l.b16 %v110
    %v205 = vunpack.c.h.b16 %v110
    %v206 = vunpack.c.l.b16 %v111
    %v207 = vunpack.c.h.b16 %v111
    %v208 = vunpack.c.l.b16 %v112
    %v209 = vunpack.c.h.b16 %v112
    %v210 = vunpack.c.l.b16 %v113
    %v211 = vunpack.c.h.b16 %v113
    %v212 = vunpack.c.l.b16 %v114
    %v213 = vunpack.c.h.b16 %v114
    %v214 = vunpack.c.l.b16 %v115
    %v215 = vunpack.c.h.b16 %v115
    %v216 = vunpack.c.l.b16 %v116
    %v217 = vunpack.c.h.b16 %v116
    %v218 = vunpack.c.l.b16 %v117
    %v219 = vunpack.c.h.b16 %v117
    %v220 = vunpack.c.l.b16 %v118
    %v221 = vunpack.c.h.b16 %v118
    %v222 = vunpack.c.l.b16 %v119
    %v223 = vunpack.c.h.b16 %v119
    %v224 = vunpack.c.l.b16 %v120
    %v225 = vunpack.c.h.b16 %v120
    %v226 = vunpack.c.l.b16 %v121
    %v227 = vunpack.c.h.b16 %v121
    %v228 = vunpack.c.l.b16 %v122
    %v229 = vunpack.c.h.b16 %v122
    %v230 = vunpack.c.l.b16 %v123
    %v231 = vunpack.c.h.b16 %v123
    %v232 = vunpack.c.l.b16 %v124
    %v233 = vunpack.c.h.b16 %v124
    %v234 = vunpack.c.l.b16 %v125
    %v235 = vunpack.c.h.b16 %v125
    %v236 = vunpack.c.l.b16 %v126
    %v237 = vunpack.c.h.b16 %v126
    %v238 = vunpack.c.l.b16 %v127
    %v239 = vunpack.c.h.b16 %v127
    %v240 = vunpack.c.l.b16 %v128
    %v241 = vunpack.c.h.b16 %v128
    %v242 = vunpack.c.l.b16 %v129
    %v243 = vunpack.c.h.b16 %v129
    %v244 = vunpack.c.l.b16 %v130
    %v245 = vunpack.c.h.b16 %v130
    %v246 = vunpack.c.l.b16 %v131
    %v247 = vunpack.c.h.b16 %v131
    %v248 = vunpack.c.l.b16 %v132
    %v249 = vunpack.c.h.b16 %v132
    %v250 = vunpack.c.l.b16 %v133
    %v251 = vunpack.c.h.b16 %v133
    %v252 = vpack.c.b16 %v192, %v188
    %v253 = vpack.c.b16 %v193, %v189
    %v254 = vpack.c.b16 %v194, %v190
    %v255 = vpack.c.b16 %v195, %v191
    %v256 = vpack.c.b16 %v200, %v196
    %v257 = vpack.c.b16 %v201, %v197
    %v258 = vpack.c.b16 %v202, %v198
    %v259 = vpack.c.b16 %v203, %v199
    %v260 = vpack.c.b16 %v208, %v204
    %v261 = vpack.c.b16 %v209, %v205
    %v262 = vpack.c.b16 %v210, %v206
    %v263 = vpack.c.b16 %v211, %v207
    %v264 = vpack.c.b16 %v216, %v212
    %v265 = vpack.c.b16 %v217, %v213
    %v266 = vpack.c.b16 %v218, %v214
    %v267 = vpack.c.b16 %v219, %v215
    %v268 = vpack.c.b16 %v224, %v220
    %v269 = vpack.c.b16 %v225, %v221
    %v270 = vpack.c.b16 %v226, %v222
    %v271 = vpack.c.b16 %v227, %v223
    %v272 = vpack.c.b16 %v232, %v228
    %v273 = vpack.c.b16 %v233, %v229
    %v274 = vpack.c.b16 %v234, %v230
    %v275 = vpack.c.b16 %v235, %v231
    %v276 = vpack.c.b16 %v240, %v236
    %v277 = vpack.c.b16 %v241, %v237
    %v278 = vpack.c.b16 %v242, %v238
    %v279 = vpack.c.b16 %v243, %v239
    %v280 = vpack.c.b16 %v248, %v244
    %v281 = vpack.c.b16 %v249, %v245
    %v282 = vpack.c.b16 %v250, %v246
    %v283 = vpack.c.b16 %v251, %v247
    %316 = vmatprep.subr.bf16.mxu0 %v253
    %317 = vmatpush1.bf16.msra.mxu0 %v252
    %318 = vmatprep.subr.bf16.mxu0 %v257
    %319 = vmatpush1.bf16.msra.mxu0 %v256
    %320 = vmatprep.subr.bf16.mxu0 %v261
    %321 = vmatpush1.bf16.msra.mxu0 %v260
    %322 = vmatprep.subr.bf16.mxu0 %v265
    %323 = vmatpush1.bf16.msra.mxu0 %v264
    %324 = vmatprep.subr.bf16.mxu0 %v269
    %325 = vmatpush1.bf16.msra.mxu0 %v268
    %326 = vmatprep.subr.bf16.mxu0 %v273
    %327 = vmatpush1.bf16.msra.mxu0 %v272
    %328 = vmatprep.subr.bf16.mxu0 %v277
    %329 = vmatpush1.bf16.msra.mxu0 %v276
    %330 = vmatprep.subr.bf16.mxu0 %v281
    %331 = vmatpush1.bf16.msra.mxu0 %v280
    %332 = vmatprep.subr.bf16.mxu0 0
    %333 = vmatpush1.bf16.msra.mxu0 0
    %334 = vmatprep.subr.bf16.mxu0 0
    %335 = vmatpush1.bf16.msra.mxu0 0
    %336 = vmatprep.subr.bf16.mxu0 0
    %337 = vmatpush1.bf16.msra.mxu0 0
    %338 = vmatprep.subr.bf16.mxu0 0
    %339 = vmatpush1.bf16.msra.mxu0 0
    %340 = vmatprep.subr.bf16.mxu0 0
    %341 = vmatpush1.bf16.msra.mxu0 0
    %342 = vmatprep.subr.bf16.mxu0 0
    %343 = vmatpush1.bf16.msra.mxu0 0
    %344 = vmatprep.subr.bf16.mxu0 0
    %345 = vmatpush1.bf16.msra.mxu0 0
    %346 = vmatprep.subr.bf16.mxu0 0
    %347 = vmatpush1.bf16.msra.mxu0 0
    %348 = vmatprep.mubr.bf16.mxu0 0
    %349 = vmatmul.mubr.bf16.gmra.mrb[0].mxu0 %v101
    %v350 = vpop.f32.mrb[0].mxu0
    %v351 = vadd.f32 %v139, %v350
    %v352 = vpop.f32.mrb[0].mxu0
    %v353 = vadd.f32 %v143, %v352
    %v354 = vpop.f32.mrb[0].mxu0
    %v355 = vpop.f32.mrb[0].mxu0
    %356 = vdwg.mxu0
    %357 = vmatprep.subr.bf16.mxu0 %v255
    %358 = vmatpush1.bf16.msra.mxu0 %v254
    %359 = vmatprep.subr.bf16.mxu0 %v259
    %360 = vmatpush1.bf16.msra.mxu0 %v258
    %361 = vmatprep.subr.bf16.mxu0 %v263
    %362 = vmatpush1.bf16.msra.mxu0 %v262
    %363 = vmatprep.subr.bf16.mxu0 %v267
    %364 = vmatpush1.bf16.msra.mxu0 %v266
    %365 = vmatprep.subr.bf16.mxu0 %v271
    %366 = vmatpush1.bf16.msra.mxu0 %v270
    %367 = vmatprep.subr.bf16.mxu0 %v275
    %368 = vmatpush1.bf16.msra.mxu0 %v274
    %369 = vmatprep.subr.bf16.mxu0 %v279
    %370 = vmatpush1.bf16.msra.mxu0 %v278
    %371 = vmatprep.subr.bf16.mxu0 %v283
    %372 = vmatpush1.bf16.msra.mxu0 %v282
    %373 = vmatprep.subr.bf16.mxu0 0
    %374 = vmatpush1.bf16.msra.mxu0 0
    %375 = vmatprep.subr.bf16.mxu0 0
    %376 = vmatpush1.bf16.msra.mxu0 0
    %377 = vmatprep.subr.bf16.mxu0 0
    %378 = vmatpush1.bf16.msra.mxu0 0
    %379 = vmatprep.subr.bf16.mxu0 0
    %380 = vmatpush1.bf16.msra.mxu0 0
    %381 = vmatprep.subr.bf16.mxu0 0
    %382 = vmatpush1.bf16.msra.mxu0 0
    %383 = vmatprep.subr.bf16.mxu0 0
    %384 = vmatpush1.bf16.msra.mxu0 0
    %385 = vmatprep.subr.bf16.mxu0 0
    %386 = vmatpush1.bf16.msra.mxu0 0
    %387 = vmatprep.subr.bf16.mxu0 0
    %388 = vmatpush1.bf16.msra.mxu0 0
    %389 = vmatprep.mubr.bf16.mxu0 0
    %390 = vmatmul.mubr.bf16.gmra.mrb[0].mxu0 %v101
    %v391 = vpop.f32.mrb[0].mxu0
    %v392 = vadd.f32 %v147, %v391
    %v393 = vpop.f32.mrb[0].mxu0
    %v394 = vadd.f32 %v151, %v393
    %v395 = vpop.f32.mrb[0].mxu0
    %v396 = vpop.f32.mrb[0].mxu0
    %397 = vdwg.mxu0
    %v398 = vmax.f32 %v351, 0.0
    %v399 = vmax.f32 %v353, 0.0
    %v400 = vmax.f32 %v392, 0.0
    %v401 = vmax.f32 %v394, 0.0
    %v402 = vpack.c.bf16 %v398, %v398
    %v403 = vpack.c.bf16 %v399, %v399
    %v404 = vpack.c.bf16 %v400, %v400
    %v405 = vpack.c.bf16 %v401, %v401
    %v406 = vld [vmem:[#allocation7] sm:$0xff]
    %v407 = vld [vmem:[#allocation7 + $0x8] sm:$0xff]
    %v408 = vld [vmem:[#allocation7 + $0x10] sm:$0xff]
    %v409 = vld [vmem:[#allocation7 + $0x18] sm:$0xff]
    %v410 = vld [vmem:[#allocation7 + $0x20] sm:$0xff]
    %v411 = vld [vmem:[#allocation7 + $0x28] sm:$0xff]
    %v412 = vld [vmem:[#allocation7 + $0x30] sm:$0xff]
    %v413 = vld [vmem:[#allocation7 + $0x38] sm:$0xff]
    %v414 = vld [vmem:[#allocation7 + $0x40] sm:$0xff]
    %v415 = vld [vmem:[#allocation7 + $0x48] sm:$0xff]
    %v416 = vld [vmem:[#allocation7 + $0x50] sm:$0xff]
    %v417 = vld [vmem:[#allocation7 + $0x58] sm:$0xff]
    %v418 = vld [vmem:[#allocation7 + $0x60] sm:$0xff]
    %v419 = vld [vmem:[#allocation7 + $0x68] sm:$0xff]
    %v420 = vld [vmem:[#allocation7 + $0x70] sm:$0xff]
    %v421 = vld [vmem:[#allocation7 + $0x78] sm:$0xff]
    %v422 = vld [vmem:[#allocation7 + $0x80] sm:$0xff]
    %v423 = vld [vmem:[#allocation7 + $0x88] sm:$0xff]
    %v424 = vld [vmem:[#allocation7 + $0x90] sm:$0xff]
    %v425 = vld [vmem:[#allocation7 + $0x98] sm:$0xff]
    %v426 = vld [vmem:[#allocation7 + $0xa0] sm:$0xff]
    %v427 = vld [vmem:[#allocation7 + $0xa8] sm:$0xff]
    %v428 = vld [vmem:[#allocation7 + $0xb0] sm:$0xff]
    %v429 = vld [vmem:[#allocation7 + $0xb8] sm:$0xff]
    %v430 = vld [vmem:[#allocation7 + $0xc0] sm:$0xff]
    %v431 = vld [vmem:[#allocation7 + $0xc8] sm:$0xff]
    %v432 = vld [vmem:[#allocation7 + $0xd0] sm:$0xff]
    %v433 = vld [vmem:[#allocation7 + $0xd8] sm:$0xff]
    %v434 = vld [vmem:[#allocation7 + $0xe0] sm:$0xff]
    %v435 = vld [vmem:[#allocation7 + $0xe8] sm:$0xff]
    %v436 = vld [vmem:[#allocation7 + $0xf0] sm:$0xff]
    %v437 = vld [vmem:[#allocation7 + $0xf8] sm:$0xff]
    %v438 = vld [vmem:[#allocation7 + $0x100] sm:$0xff]
    %v439 = vld [vmem:[#allocation7 + $0x108] sm:$0xff]
    %v440 = vld [vmem:[#allocation7 + $0x110] sm:$0xff]
    %v441 = vld [vmem:[#allocation7 + $0x118] sm:$0xff]
    %v442 = vld [vmem:[#allocation7 + $0x120] sm:$0xff]
    %v443 = vld [vmem:[#allocation7 + $0x128] sm:$0xff]
    %v444 = vld [vmem:[#allocation7 + $0x130] sm:$0xff]
    %v445 = vld [vmem:[#allocation7 + $0x138] sm:$0xff]
    %v446 = vld [vmem:[#allocation7 + $0x140] sm:$0xff]
    %v447 = vld [vmem:[#allocation7 + $0x148] sm:$0xff]
    %v448 = vld [vmem:[#allocation7 + $0x150] sm:$0xff]
    %v449 = vld [vmem:[#allocation7 + $0x158] sm:$0xff]
    %v450 = vld [vmem:[#allocation7 + $0x160] sm:$0xff]
    %v451 = vld [vmem:[#allocation7 + $0x168] sm:$0xff]
    %v452 = vld [vmem:[#allocation7 + $0x170] sm:$0xff]
    %v453 = vld [vmem:[#allocation7 + $0x178] sm:$0xff]
    %v454 = vld [vmem:[#allocation7 + $0x180] sm:$0xff]
    %v455 = vld [vmem:[#allocation7 + $0x188] sm:$0xff]
    %v456 = vld [vmem:[#allocation7 + $0x190] sm:$0xff]
    %v457 = vld [vmem:[#allocation7 + $0x198] sm:$0xff]
    %v458 = vld [vmem:[#allocation7 + $0x1a0] sm:$0xff]
    %v459 = vld [vmem:[#allocation7 + $0x1a8] sm:$0xff]
    %v460 = vld [vmem:[#allocation7 + $0x1b0] sm:$0xff]
    %v461 = vld [vmem:[#allocation7 + $0x1b8] sm:$0xff]
    %v462 = vld [vmem:[#allocation7 + $0x1c0] sm:$0xff]
    %v463 = vld [vmem:[#allocation7 + $0x1c8] sm:$0xff]
    %v464 = vld [vmem:[#allocation7 + $0x1d0] sm:$0xff]
    %v465 = vld [vmem:[#allocation7 + $0x1d8] sm:$0xff]
    %v466 = vld [vmem:[#allocation7 + $0x1e0] sm:$0xff]
    %v467 = vld [vmem:[#allocation7 + $0x1e8] sm:$0xff]
    %v468 = vld [vmem:[#allocation7 + $0x1f0] sm:$0xff]
    %v469 = vld [vmem:[#allocation7 + $0x1f8] sm:$0xff]
    %v470 = vld [vmem:[#allocation7 + $0x200] sm:$0xff]
    %v471 = vld [vmem:[#allocation7 + $0x208] sm:$0xff]
    %v472 = vld [vmem:[#allocation7 + $0x210] sm:$0xff]
    %v473 = vld [vmem:[#allocation7 + $0x218] sm:$0xff]
    %v474 = vld [vmem:[#allocation7 + $0x220] sm:$0xff]
    %v475 = vld [vmem:[#allocation7 + $0x228] sm:$0xff]
    %v476 = vld [vmem:[#allocation7 + $0x230] sm:$0xff]
    %v477 = vld [vmem:[#allocation7 + $0x238] sm:$0xff]
    %v478 = vld [vmem:[#allocation7 + $0x240] sm:$0xff]
    %v479 = vld [vmem:[#allocation7 + $0x248] sm:$0xff]
    %v480 = vld [vmem:[#allocation7 + $0x250] sm:$0xff]
    %v481 = vld [vmem:[#allocation7 + $0x258] sm:$0xff]
    %v482 = vld [vmem:[#allocation7 + $0x260] sm:$0xff]
    %v483 = vld [vmem:[#allocation7 + $0x268] sm:$0xff]
    %v484 = vld [vmem:[#allocation7 + $0x270] sm:$0xff]
    %v485 = vld [vmem:[#allocation7 + $0x278] sm:$0xff]
    %v486 = vld [vmem:[#allocation7 + $0x280] sm:$0xff]
    %v487 = vld [vmem:[#allocation7 + $0x288] sm:$0xff]
    %v488 = vld [vmem:[#allocation7 + $0x290] sm:$0xff]
    %v489 = vld [vmem:[#allocation7 + $0x298] sm:$0xff]
    %v490 = vld [vmem:[#allocation7 + $0x2a0] sm:$0xff]
    %v491 = vld [vmem:[#allocation7 + $0x2a8] sm:$0xff]
    %v492 = vld [vmem:[#allocation7 + $0x2b0] sm:$0xff]
    %v493 = vld [vmem:[#allocation7 + $0x2b8] sm:$0xff]
    %v494 = vld [vmem:[#allocation7 + $0x2c0] sm:$0xff]
    %v495 = vld [vmem:[#allocation7 + $0x2c8] sm:$0xff]
    %v496 = vld [vmem:[#allocation7 + $0x2d0] sm:$0xff]
    %v497 = vld [vmem:[#allocation7 + $0x2d8] sm:$0xff]
    %v498 = vld [vmem:[#allocation7 + $0x2e0] sm:$0xff]
    %v499 = vld [vmem:[#allocation7 + $0x2e8] sm:$0xff]
    %v500 = vld [vmem:[#allocation7 + $0x2f0] sm:$0xff]
    %v501 = vld [vmem:[#allocation7 + $0x2f8] sm:$0xff]
    %v502 = vld [vmem:[#allocation7 + $0x300] sm:$0xff]
    %v503 = vld [vmem:[#allocation7 + $0x308] sm:$0xff]
    %v504 = vld [vmem:[#allocation7 + $0x310] sm:$0xff]
    %v505 = vld [vmem:[#allocation7 + $0x318] sm:$0xff]
    %v506 = vld [vmem:[#allocation7 + $0x320] sm:$0xff]
    %v507 = vld [vmem:[#allocation7 + $0x328] sm:$0xff]
    %v508 = vld [vmem:[#allocation7 + $0x330] sm:$0xff]
    %v509 = vld [vmem:[#allocation7 + $0x338] sm:$0xff]
    %v510 = vld [vmem:[#allocation7 + $0x340] sm:$0xff]
    %v511 = vld [vmem:[#allocation7 + $0x348] sm:$0xff]
    %v512 = vld [vmem:[#allocation7 + $0x350] sm:$0xff]
    %v513 = vld [vmem:[#allocation7 + $0x358] sm:$0xff]
    %v514 = vld [vmem:[#allocation7 + $0x360] sm:$0xff]
    %v515 = vld [vmem:[#allocation7 + $0x368] sm:$0xff]
    %v516 = vld [vmem:[#allocation7 + $0x370] sm:$0xff]
    %v517 = vld [vmem:[#allocation7 + $0x378] sm:$0xff]
    %v518 = vld [vmem:[#allocation7 + $0x380] sm:$0xff]
    %v519 = vld [vmem:[#allocation7 + $0x388] sm:$0xff]
    %v520 = vld [vmem:[#allocation7 + $0x390] sm:$0xff]
    %v521 = vld [vmem:[#allocation7 + $0x398] sm:$0xff]
    %v522 = vld [vmem:[#allocation7 + $0x3a0] sm:$0xff]
    %v523 = vld [vmem:[#allocation7 + $0x3a8] sm:$0xff]
    %v524 = vld [vmem:[#allocation7 + $0x3b0] sm:$0xff]
    %v525 = vld [vmem:[#allocation7 + $0x3b8] sm:$0xff]
    %v526 = vld [vmem:[#allocation7 + $0x3c0] sm:$0xff]
    %v527 = vld [vmem:[#allocation7 + $0x3c8] sm:$0xff]
    %v528 = vld [vmem:[#allocation7 + $0x3d0] sm:$0xff]
    %v529 = vld [vmem:[#allocation7 + $0x3d8] sm:$0xff]
    %v530 = vld [vmem:[#allocation7 + $0x3e0] sm:$0xff]
    %v531 = vld [vmem:[#allocation7 + $0x3e8] sm:$0xff]
    %v532 = vld [vmem:[#allocation7 + $0x3f0] sm:$0xff]
    %v533 = vld [vmem:[#allocation7 + $0x3f8] sm:$0xff]
    %v534 = vld [vmem:[#allocation7 + $0x400] sm:$0xff]
    %v535 = vld [vmem:[#allocation7 + $0x408] sm:$0xff]
    %v536 = vld [vmem:[#allocation7 + $0x410] sm:$0xff]
    %v537 = vld [vmem:[#allocation7 + $0x418] sm:$0xff]
    %v538 = vld [vmem:[#allocation7 + $0x420] sm:$0xff]
    %v539 = vld [vmem:[#allocation7 + $0x428] sm:$0xff]
    %v540 = vld [vmem:[#allocation7 + $0x430] sm:$0xff]
    %v541 = vld [vmem:[#allocation7 + $0x438] sm:$0xff]
    %v542 = vld [vmem:[#allocation7 + $0x440] sm:$0xff]
    %v543 = vld [vmem:[#allocation7 + $0x448] sm:$0xff]
    %v544 = vld [vmem:[#allocation7 + $0x450] sm:$0xff]
    %v545 = vld [vmem:[#allocation7 + $0x458] sm:$0xff]
    %v546 = vld [vmem:[#allocation7 + $0x460] sm:$0xff]
    %v547 = vld [vmem:[#allocation7 + $0x468] sm:$0xff]
    %v548 = vld [vmem:[#allocation7 + $0x470] sm:$0xff]
    %v549 = vld [vmem:[#allocation7 + $0x478] sm:$0xff]
    %v550 = vld [vmem:[#allocation7 + $0x480] sm:$0xff]
    %v551 = vld [vmem:[#allocation7 + $0x488] sm:$0xff]
    %v552 = vld [vmem:[#allocation7 + $0x490] sm:$0xff]
    %v553 = vld [vmem:[#allocation7 + $0x498] sm:$0xff]
    %v554 = vld [vmem:[#allocation7 + $0x4a0] sm:$0xff]
    %v555 = vld [vmem:[#allocation7 + $0x4a8] sm:$0xff]
    %v556 = vld [vmem:[#allocation7 + $0x4b0] sm:$0xff]
    %v557 = vld [vmem:[#allocation7 + $0x4b8] sm:$0xff]
    %v558 = vld [vmem:[#allocation7 + $0x4c0] sm:$0xff]
    %v559 = vld [vmem:[#allocation7 + $0x4c8] sm:$0xff]
    %v560 = vld [vmem:[#allocation7 + $0x4d0] sm:$0xff]
    %v561 = vld [vmem:[#allocation7 + $0x4d8] sm:$0xff]
    %v562 = vld [vmem:[#allocation7 + $0x4e0] sm:$0xff]
    %v563 = vld [vmem:[#allocation7 + $0x4e8] sm:$0xff]
    %v564 = vld [vmem:[#allocation7 + $0x4f0] sm:$0xff]
    %v565 = vld [vmem:[#allocation7 + $0x4f8] sm:$0xff]
    %v566 = vld [vmem:[#allocation7 + $0x500] sm:$0xff]
    %v567 = vld [vmem:[#allocation7 + $0x508] sm:$0xff]
    %v568 = vld [vmem:[#allocation7 + $0x510] sm:$0xff]
    %v569 = vld [vmem:[#allocation7 + $0x518] sm:$0xff]
    %v570 = vld [vmem:[#allocation7 + $0x520] sm:$0xff]
    %v571 = vld [vmem:[#allocation7 + $0x528] sm:$0xff]
    %v572 = vld [vmem:[#allocation7 + $0x530] sm:$0xff]
    %v573 = vld [vmem:[#allocation7 + $0x538] sm:$0xff]
    %v574 = vld [vmem:[#allocation7 + $0x540] sm:$0xff]
    %v575 = vld [vmem:[#allocation7 + $0x548] sm:$0xff]
    %v576 = vld [vmem:[#allocation7 + $0x550] sm:$0xff]
    %v577 = vld [vmem:[#allocation7 + $0x558] sm:$0xff]
    %v578 = vld [vmem:[#allocation7 + $0x560] sm:$0xff]
    %v579 = vld [vmem:[#allocation7 + $0x568] sm:$0xff]
    %v580 = vld [vmem:[#allocation7 + $0x570] sm:$0xff]
    %v581 = vld [vmem:[#allocation7 + $0x578] sm:$0xff]
    %v582 = vld [vmem:[#allocation7 + $0x580] sm:$0xff]
    %v583 = vld [vmem:[#allocation7 + $0x588] sm:$0xff]
    %v584 = vld [vmem:[#allocation7 + $0x590] sm:$0xff]
    %v585 = vld [vmem:[#allocation7 + $0x598] sm:$0xff]
    %v586 = vld [vmem:[#allocation7 + $0x5a0] sm:$0xff]
    %v587 = vld [vmem:[#allocation7 + $0x5a8] sm:$0xff]
    %v588 = vld [vmem:[#allocation7 + $0x5b0] sm:$0xff]
    %v589 = vld [vmem:[#allocation7 + $0x5b8] sm:$0xff]
    %v590 = vld [vmem:[#allocation7 + $0x5c0] sm:$0xff]
    %v591 = vld [vmem:[#allocation7 + $0x5c8] sm:$0xff]
    %v592 = vld [vmem:[#allocation7 + $0x5d0] sm:$0xff]
    %v593 = vld [vmem:[#allocation7 + $0x5d8] sm:$0xff]
    %v594 = vld [vmem:[#allocation7 + $0x5e0] sm:$0xff]
    %v595 = vld [vmem:[#allocation7 + $0x5e8] sm:$0xff]
    %v596 = vld [vmem:[#allocation7 + $0x5f0] sm:$0xff]
    %v597 = vld [vmem:[#allocation7 + $0x5f8] sm:$0xff]
    %v598 = vld [vmem:[#allocation7 + $0x600] sm:$0xff]
    %v599 = vld [vmem:[#allocation7 + $0x608] sm:$0xff]
    %v600 = vld [vmem:[#allocation7 + $0x610] sm:$0xff]
    %v601 = vld [vmem:[#allocation7 + $0x618] sm:$0xff]
    %v602 = vld [vmem:[#allocation7 + $0x620] sm:$0xff]
    %v603 = vld [vmem:[#allocation7 + $0x628] sm:$0xff]
    %v604 = vld [vmem:[#allocation7 + $0x630] sm:$0xff]
    %v605 = vld [vmem:[#allocation7 + $0x638] sm:$0xff]
    %v606 = vld [vmem:[#allocation7 + $0x640] sm:$0xff]
    %v607 = vld [vmem:[#allocation7 + $0x648] sm:$0xff]
    %v608 = vld [vmem:[#allocation7 + $0x650] sm:$0xff]
    %v609 = vld [vmem:[#allocation7 + $0x658] sm:$0xff]
    %v610 = vld [vmem:[#allocation7 + $0x660] sm:$0xff]
    %v611 = vld [vmem:[#allocation7 + $0x668] sm:$0xff]
    %v612 = vld [vmem:[#allocation7 + $0x670] sm:$0xff]
    %v613 = vld [vmem:[#allocation7 + $0x678] sm:$0xff]
    %v614 = vld [vmem:[#allocation7 + $0x680] sm:$0xff]
    %v615 = vld [vmem:[#allocation7 + $0x688] sm:$0xff]
    %v616 = vld [vmem:[#allocation7 + $0x690] sm:$0xff]
    %v617 = vld [vmem:[#allocation7 + $0x698] sm:$0xff]
    %v618 = vld [vmem:[#allocation7 + $0x6a0] sm:$0xff]
    %v619 = vld [vmem:[#allocation7 + $0x6a8] sm:$0xff]
    %v620 = vld [vmem:[#allocation7 + $0x6b0] sm:$0xff]
    %v621 = vld [vmem:[#allocation7 + $0x6b8] sm:$0xff]
    %v622 = vld [vmem:[#allocation7 + $0x6c0] sm:$0xff]
    %v623 = vld [vmem:[#allocation7 + $0x6c8] sm:$0xff]
    %v624 = vld [vmem:[#allocation7 + $0x6d0] sm:$0xff]
    %v625 = vld [vmem:[#allocation7 + $0x6d8] sm:$0xff]
    %v626 = vld [vmem:[#allocation7 + $0x6e0] sm:$0xff]
    %v627 = vld [vmem:[#allocation7 + $0x6e8] sm:$0xff]
    %v628 = vld [vmem:[#allocation7 + $0x6f0] sm:$0xff]
    %v629 = vld [vmem:[#allocation7 + $0x6f8] sm:$0xff]
    %v630 = vld [vmem:[#allocation7 + $0x700] sm:$0xff]
    %v631 = vld [vmem:[#allocation7 + $0x708] sm:$0xff]
    %v632 = vld [vmem:[#allocation7 + $0x710] sm:$0xff]
    %v633 = vld [vmem:[#allocation7 + $0x718] sm:$0xff]
    %v634 = vld [vmem:[#allocation7 + $0x720] sm:$0xff]
    %v635 = vld [vmem:[#allocation7 + $0x728] sm:$0xff]
    %v636 = vld [vmem:[#allocation7 + $0x730] sm:$0xff]
    %v637 = vld [vmem:[#allocation7 + $0x738] sm:$0xff]
    %v638 = vld [vmem:[#allocation7 + $0x740] sm:$0xff]
    %v639 = vld [vmem:[#allocation7 + $0x748] sm:$0xff]
    %v640 = vld [vmem:[#allocation7 + $0x750] sm:$0xff]
    %v641 = vld [vmem:[#allocation7 + $0x758] sm:$0xff]
    %v642 = vld [vmem:[#allocation7 + $0x760] sm:$0xff]
    %v643 = vld [vmem:[#allocation7 + $0x768] sm:$0xff]
    %v644 = vld [vmem:[#allocation7 + $0x770] sm:$0xff]
    %v645 = vld [vmem:[#allocation7 + $0x778] sm:$0xff]
    %v646 = vld [vmem:[#allocation7 + $0x780] sm:$0xff]
    %v647 = vld [vmem:[#allocation7 + $0x788] sm:$0xff]
    %v648 = vld [vmem:[#allocation7 + $0x790] sm:$0xff]
    %v649 = vld [vmem:[#allocation7 + $0x798] sm:$0xff]
    %v650 = vld [vmem:[#allocation7 + $0x7a0] sm:$0xff]
    %v651 = vld [vmem:[#allocation7 + $0x7a8] sm:$0xff]
    %v652 = vld [vmem:[#allocation7 + $0x7b0] sm:$0xff]
    %v653 = vld [vmem:[#allocation7 + $0x7b8] sm:$0xff]
    %v654 = vld [vmem:[#allocation7 + $0x7c0] sm:$0xff]
    %v655 = vld [vmem:[#allocation7 + $0x7c8] sm:$0xff]
    %v656 = vld [vmem:[#allocation7 + $0x7d0] sm:$0xff]
    %v657 = vld [vmem:[#allocation7 + $0x7d8] sm:$0xff]
    %v658 = vld [vmem:[#allocation7 + $0x7e0] sm:$0xff]
    %v659 = vld [vmem:[#allocation7 + $0x7e8] sm:$0xff]
    %v660 = vld [vmem:[#allocation7 + $0x7f0] sm:$0xff]
    %v661 = vld [vmem:[#allocation7 + $0x7f8] sm:$0xff]
    %v662 = vld [vmem:[%s4] sm:$0xff]
    %v664 = vlaneseq
    %v665 = vshrl.u32 %v664, 7
    %v666 = vsub.s32 0, %v665
    %v667 = vrot.slane %v662, %v666
    %v668 = vlaneseq
    %v669 = vshrl.u32 %v668, 7
    %v670 = vsub.s32 1, %v669
    %v671 = vrot.slane %v662, %v670
    %v672 = vlaneseq
    %v673 = vshrl.u32 %v672, 7
    %v674 = vsub.s32 2, %v673
    %v675 = vrot.slane %v662, %v674
    %v676 = vlaneseq
    %v677 = vshrl.u32 %v676, 7
    %v678 = vsub.s32 3, %v677
    %v679 = vrot.slane %v662, %v678
    %v680 = vlaneseq
    %v681 = vshrl.u32 %v680, 7
    %v682 = vsub.s32 4, %v681
    %v683 = vrot.slane %v662, %v682
    %v684 = vlaneseq
    %v685 = vshrl.u32 %v684, 7
    %v686 = vsub.s32 5, %v685
    %v687 = vrot.slane %v662, %v686
    %v688 = vlaneseq
    %v689 = vshrl.u32 %v688, 7
    %v690 = vsub.s32 6, %v689
    %v691 = vrot.slane %v662, %v690
    %v692 = vlaneseq
    %v693 = vshrl.u32 %v692, 7
    %v694 = vsub.s32 7, %v693
    %v695 = vrot.slane %v662, %v694
    %v960 = vunpack.c.l.b16 %v406
    %v961 = vunpack.c.h.b16 %v406
    %v962 = vunpack.c.l.b16 %v407
    %v963 = vunpack.c.h.b16 %v407
    %v964 = vunpack.c.l.b16 %v408
    %v965 = vunpack.c.h.b16 %v408
    %v966 = vunpack.c.l.b16 %v409
    %v967 = vunpack.c.h.b16 %v409
    %v968 = vunpack.c.l.b16 %v410
    %v969 = vunpack.c.h.b16 %v410
    %v970 = vunpack.c.l.b16 %v411
    %v971 = vunpack.c.h.b16 %v411
    %v972 = vunpack.c.l.b16 %v412
    %v973 = vunpack.c.h.b16 %v412
    %v974 = vunpack.c.l.b16 %v413
    %v975 = vunpack.c.h.b16 %v413
    %v976 = vunpack.c.l.b16 %v414
    %v977 = vunpack.c.h.b16 %v414
    %v978 = vunpack.c.l.b16 %v415
    %v979 = vunpack.c.h.b16 %v415
    %v980 = vunpack.c.l.b16 %v416
    %v981 = vunpack.c.h.b16 %v416
    %v982 = vunpack.c.l.b16 %v417
    %v983 = vunpack.c.h.b16 %v417
    %v984 = vunpack.c.l.b16 %v418
    %v985 = vunpack.c.h.b16 %v418
    %v986 = vunpack.c.l.b16 %v419
    %v987 = vunpack.c.h.b16 %v419
    %v988 = vunpack.c.l.b16 %v420
    %v989 = vunpack.c.h.b16 %v420
    %v990 = vunpack.c.l.b16 %v421
    %v991 = vunpack.c.h.b16 %v421
    %v992 = vunpack.c.l.b16 %v422
    %v993 = vunpack.c.h.b16 %v422
    %v994 = vunpack.c.l.b16 %v423
    %v995 = vunpack.c.h.b16 %v423
    %v996 = vunpack.c.l.b16 %v424
    %v997 = vunpack.c.h.b16 %v424
    %v998 = vunpack.c.l.b16 %v425
    %v999 = vunpack.c.h.b16 %v425
    %v1000 = vunpack.c.l.b16 %v426
    %v1001 = vunpack.c.h.b16 %v426
    %v1002 = vunpack.c.l.b16 %v427
    %v1003 = vunpack.c.h.b16 %v427
    %v1004 = vunpack.c.l.b16 %v428
    %v1005 = vunpack.c.h.b16 %v428
    %v1006 = vunpack.c.l.b16 %v429
    %v1007 = vunpack.c.h.b16 %v429
    %v1008 = vunpack.c.l.b16 %v430
    %v1009 = vunpack.c.h.b16 %v430
    %v1010 = vunpack.c.l.b16 %v431
    %v1011 = vunpack.c.h.b16 %v431
    %v1012 = vunpack.c.l.b16 %v432
    %v1013 = vunpack.c.h.b16 %v432
    %v1014 = vunpack.c.l.b16 %v433
    %v1015 = vunpack.c.h.b16 %v433
    %v1016 = vunpack.c.l.b16 %v434
    %v1017 = vunpack.c.h.b16 %v434
    %v1018 = vunpack.c.l.b16 %v435
    %v1019 = vunpack.c.h.b16 %v435
    %v1020 = vunpack.c.l.b16 %v436
    %v1021 = vunpack.c.h.b16 %v436
    %v1022 = vunpack.c.l.b16 %v437
    %v1023 = vunpack.c.h.b16 %v437
    %v1024 = vunpack.c.l.b16 %v438
    %v1025 = vunpack.c.h.b16 %v438
    %v1026 = vunpack.c.l.b16 %v439
    %v1027 = vunpack.c.h.b16 %v439
    %v1028 = vunpack.c.l.b16 %v440
    %v1029 = vunpack.c.h.b16 %v440
    %v1030 = vunpack.c.l.b16 %v441
    %v1031 = vunpack.c.h.b16 %v441
    %v1032 = vunpack.c.l.b16 %v442
    %v1033 = vunpack.c.h.b16 %v442
    %v1034 = vunpack.c.l.b16 %v443
    %v1035 = vunpack.c.h.b16 %v443
    %v1036 = vunpack.c.l.b16 %v444
    %v1037 = vunpack.c.h.b16 %v444
    %v1038 = vunpack.c.l.b16 %v445
    %v1039 = vunpack.c.h.b16 %v445
    %v1040 = vunpack.c.l.b16 %v446
    %v1041 = vunpack.c.h.b16 %v446
    %v1042 = vunpack.c.l.b16 %v447
    %v1043 = vunpack.c.h.b16 %v447
    %v1044 = vunpack.c.l.b16 %v448
    %v1045 = vunpack.c.h.b16 %v448
    %v1046 = vunpack.c.l.b16 %v449
    %v1047 = vunpack.c.h.b16 %v449
    %v1048 = vunpack.c.l.b16 %v450
    %v1049 = vunpack.c.h.b16 %v450
    %v1050 = vunpack.c.l.b16 %v451
    %v1051 = vunpack.c.h.b16 %v451
    %v1052 = vunpack.c.l.b16 %v452
    %v1053 = vunpack.c.h.b16 %v452
    %v1054 = vunpack.c.l.b16 %v453
    %v1055 = vunpack.c.h.b16 %v453
    %v1056 = vunpack.c.l.b16 %v454
    %v1057 = vunpack.c.h.b16 %v454
    %v1058 = vunpack.c.l.b16 %v455
    %v1059 = vunpack.c.h.b16 %v455
    %v1060 = vunpack.c.l.b16 %v456
    %v1061 = vunpack.c.h.b16 %v456
    %v1062 = vunpack.c.l.b16 %v457
    %v1063 = vunpack.c.h.b16 %v457
    %v1064 = vunpack.c.l.b16 %v458
    %v1065 = vunpack.c.h.b16 %v458
    %v1066 = vunpack.c.l.b16 %v459
    %v1067 = vunpack.c.h.b16 %v459
    %v1068 = vunpack.c.l.b16 %v460
    %v1069 = vunpack.c.h.b16 %v460
    %v1070 = vunpack.c.l.b16 %v461
    %v1071 = vunpack.c.h.b16 %v461
    %v1072 = vunpack.c.l.b16 %v462
    %v1073 = vunpack.c.h.b16 %v462
    %v1074 = vunpack.c.l.b16 %v463
    %v1075 = vunpack.c.h.b16 %v463
    %v1076 = vunpack.c.l.b16 %v464
    %v1077 = vunpack.c.h.b16 %v464
    %v1078 = vunpack.c.l.b16 %v465
    %v1079 = vunpack.c.h.b16 %v465
    %v1080 = vunpack.c.l.b16 %v466
    %v1081 = vunpack.c.h.b16 %v466
    %v1082 = vunpack.c.l.b16 %v467
    %v1083 = vunpack.c.h.b16 %v467
    %v1084 = vunpack.c.l.b16 %v468
    %v1085 = vunpack.c.h.b16 %v468
    %v1086 = vunpack.c.l.b16 %v469
    %v1087 = vunpack.c.h.b16 %v469
    %v1088 = vunpack.c.l.b16 %v470
    %v1089 = vunpack.c.h.b16 %v470
    %v1090 = vunpack.c.l.b16 %v471
    %v1091 = vunpack.c.h.b16 %v471
    %v1092 = vunpack.c.l.b16 %v472
    %v1093 = vunpack.c.h.b16 %v472
    %v1094 = vunpack.c.l.b16 %v473
    %v1095 = vunpack.c.h.b16 %v473
    %v1096 = vunpack.c.l.b16 %v474
    %v1097 = vunpack.c.h.b16 %v474
    %v1098 = vunpack.c.l.b16 %v475
    %v1099 = vunpack.c.h.b16 %v475
    %v1100 = vunpack.c.l.b16 %v476
    %v1101 = vunpack.c.h.b16 %v476
    %v1102 = vunpack.c.l.b16 %v477
    %v1103 = vunpack.c.h.b16 %v477
    %v1104 = vunpack.c.l.b16 %v478
    %v1105 = vunpack.c.h.b16 %v478
    %v1106 = vunpack.c.l.b16 %v479
    %v1107 = vunpack.c.h.b16 %v479
    %v1108 = vunpack.c.l.b16 %v480
    %v1109 = vunpack.c.h.b16 %v480
    %v1110 = vunpack.c.l.b16 %v481
    %v1111 = vunpack.c.h.b16 %v481
    %v1112 = vunpack.c.l.b16 %v482
    %v1113 = vunpack.c.h.b16 %v482
    %v1114 = vunpack.c.l.b16 %v483
    %v1115 = vunpack.c.h.b16 %v483
    %v1116 = vunpack.c.l.b16 %v484
    %v1117 = vunpack.c.h.b16 %v484
    %v1118 = vunpack.c.l.b16 %v485
    %v1119 = vunpack.c.h.b16 %v485
    %v1120 = vunpack.c.l.b16 %v486
    %v1121 = vunpack.c.h.b16 %v486
    %v1122 = vunpack.c.l.b16 %v487
    %v1123 = vunpack.c.h.b16 %v487
    %v1124 = vunpack.c.l.b16 %v488
    %v1125 = vunpack.c.h.b16 %v488
    %v1126 = vunpack.c.l.b16 %v489
    %v1127 = vunpack.c.h.b16 %v489
    %v1128 = vunpack.c.l.b16 %v490
    %v1129 = vunpack.c.h.b16 %v490
    %v1130 = vunpack.c.l.b16 %v491
    %v1131 = vunpack.c.h.b16 %v491
    %v1132 = vunpack.c.l.b16 %v492
    %v1133 = vunpack.c.h.b16 %v492
    %v1134 = vunpack.c.l.b16 %v493
    %v1135 = vunpack.c.h.b16 %v493
    %v1136 = vunpack.c.l.b16 %v494
    %v1137 = vunpack.c.h.b16 %v494
    %v1138 = vunpack.c.l.b16 %v495
    %v1139 = vunpack.c.h.b16 %v495
    %v1140 = vunpack.c.l.b16 %v496
    %v1141 = vunpack.c.h.b16 %v496
    %v1142 = vunpack.c.l.b16 %v497
    %v1143 = vunpack.c.h.b16 %v497
    %v1144 = vunpack.c.l.b16 %v498
    %v1145 = vunpack.c.h.b16 %v498
    %v1146 = vunpack.c.l.b16 %v499
    %v1147 = vunpack.c.h.b16 %v499
    %v1148 = vunpack.c.l.b16 %v500
    %v1149 = vunpack.c.h.b16 %v500
    %v1150 = vunpack.c.l.b16 %v501
    %v1151 = vunpack.c.h.b16 %v501
    %v1152 = vunpack.c.l.b16 %v502
    %v1153 = vunpack.c.h.b16 %v502
    %v1154 = vunpack.c.l.b16 %v503
    %v1155 = vunpack.c.h.b16 %v503
    %v1156 = vunpack.c.l.b16 %v504
    %v1157 = vunpack.c.h.b16 %v504
    %v1158 = vunpack.c.l.b16 %v505
    %v1159 = vunpack.c.h.b16 %v505
    %v1160 = vunpack.c.l.b16 %v506
    %v1161 = vunpack.c.h.b16 %v506
    %v1162 = vunpack.c.l.b16 %v507
    %v1163 = vunpack.c.h.b16 %v507
    %v1164 = vunpack.c.l.b16 %v508
    %v1165 = vunpack.c.h.b16 %v508
    %v1166 = vunpack.c.l.b16 %v509
    %v1167 = vunpack.c.h.b16 %v509
    %v1168 = vunpack.c.l.b16 %v510
    %v1169 = vunpack.c.h.b16 %v510
    %v1170 = vunpack.c.l.b16 %v511
    %v1171 = vunpack.c.h.b16 %v511
    %v1172 = vunpack.c.l.b16 %v512
    %v1173 = vunpack.c.h.b16 %v512
    %v1174 = vunpack.c.l.b16 %v513
    %v1175 = vunpack.c.h.b16 %v513
    %v1176 = vunpack.c.l.b16 %v514
    %v1177 = vunpack.c.h.b16 %v514
    %v1178 = vunpack.c.l.b16 %v515
    %v1179 = vunpack.c.h.b16 %v515
    %v1180 = vunpack.c.l.b16 %v516
    %v1181 = vunpack.c.h.b16 %v516
    %v1182 = vunpack.c.l.b16 %v517
    %v1183 = vunpack.c.h.b16 %v517
    %v1184 = vunpack.c.l.b16 %v518
    %v1185 = vunpack.c.h.b16 %v518
    %v1186 = vunpack.c.l.b16 %v519
    %v1187 = vunpack.c.h.b16 %v519
    %v1188 = vunpack.c.l.b16 %v520
    %v1189 = vunpack.c.h.b16 %v520
    %v1190 = vunpack.c.l.b16 %v521
    %v1191 = vunpack.c.h.b16 %v521
    %v1192 = vunpack.c.l.b16 %v522
    %v1193 = vunpack.c.h.b16 %v522
    %v1194 = vunpack.c.l.b16 %v523
    %v1195 = vunpack.c.h.b16 %v523
    %v1196 = vunpack.c.l.b16 %v524
    %v1197 = vunpack.c.h.b16 %v524
    %v1198 = vunpack.c.l.b16 %v525
    %v1199 = vunpack.c.h.b16 %v525
    %v1200 = vunpack.c.l.b16 %v526
    %v1201 = vunpack.c.h.b16 %v526
    %v1202 = vunpack.c.l.b16 %v527
    %v1203 = vunpack.c.h.b16 %v527
    %v1204 = vunpack.c.l.b16 %v528
    %v1205 = vunpack.c.h.b16 %v528
    %v1206 = vunpack.c.l.b16 %v529
    %v1207 = vunpack.c.h.b16 %v529
    %v1208 = vunpack.c.l.b16 %v530
    %v1209 = vunpack.c.h.b16 %v530
    %v1210 = vunpack.c.l.b16 %v531
    %v1211 = vunpack.c.h.b16 %v531
    %v1212 = vunpack.c.l.b16 %v532
    %v1213 = vunpack.c.h.b16 %v532
    %v1214 = vunpack.c.l.b16 %v533
    %v1215 = vunpack.c.h.b16 %v533
    %v1216 = vunpack.c.l.b16 %v534
    %v1217 = vunpack.c.h.b16 %v534
    %v1218 = vunpack.c.l.b16 %v535
    %v1219 = vunpack.c.h.b16 %v535
    %v1220 = vunpack.c.l.b16 %v536
    %v1221 = vunpack.c.h.b16 %v536
    %v1222 = vunpack.c.l.b16 %v537
    %v1223 = vunpack.c.h.b16 %v537
    %v1224 = vunpack.c.l.b16 %v538
    %v1225 = vunpack.c.h.b16 %v538
    %v1226 = vunpack.c.l.b16 %v539
    %v1227 = vunpack.c.h.b16 %v539
    %v1228 = vunpack.c.l.b16 %v540
    %v1229 = vunpack.c.h.b16 %v540
    %v1230 = vunpack.c.l.b16 %v541
    %v1231 = vunpack.c.h.b16 %v541
    %v1232 = vunpack.c.l.b16 %v542
    %v1233 = vunpack.c.h.b16 %v542
    %v1234 = vunpack.c.l.b16 %v543
    %v1235 = vunpack.c.h.b16 %v543
    %v1236 = vunpack.c.l.b16 %v544
    %v1237 = vunpack.c.h.b16 %v544
    %v1238 = vunpack.c.l.b16 %v545
    %v1239 = vunpack.c.h.b16 %v545
    %v1240 = vunpack.c.l.b16 %v546
    %v1241 = vunpack.c.h.b16 %v546
    %v1242 = vunpack.c.l.b16 %v547
    %v1243 = vunpack.c.h.b16 %v547
    %v1244 = vunpack.c.l.b16 %v548
    %v1245 = vunpack.c.h.b16 %v548
    %v1246 = vunpack.c.l.b16 %v549
    %v1247 = vunpack.c.h.b16 %v549
    %v1248 = vunpack.c.l.b16 %v550
    %v1249 = vunpack.c.h.b16 %v550
    %v1250 = vunpack.c.l.b16 %v551
    %v1251 = vunpack.c.h.b16 %v551
    %v1252 = vunpack.c.l.b16 %v552
    %v1253 = vunpack.c.h.b16 %v552
    %v1254 = vunpack.c.l.b16 %v553
    %v1255 = vunpack.c.h.b16 %v553
    %v1256 = vunpack.c.l.b16 %v554
    %v1257 = vunpack.c.h.b16 %v554
    %v1258 = vunpack.c.l.b16 %v555
    %v1259 = vunpack.c.h.b16 %v555
    %v1260 = vunpack.c.l.b16 %v556
    %v1261 = vunpack.c.h.b16 %v556
    %v1262 = vunpack.c.l.b16 %v557
    %v1263 = vunpack.c.h.b16 %v557
    %v1264 = vunpack.c.l.b16 %v558
    %v1265 = vunpack.c.h.b16 %v558
    %v1266 = vunpack.c.l.b16 %v559
    %v1267 = vunpack.c.h.b16 %v559
    %v1268 = vunpack.c.l.b16 %v560
    %v1269 = vunpack.c.h.b16 %v560
    %v1270 = vunpack.c.l.b16 %v561
    %v1271 = vunpack.c.h.b16 %v561
    %v1272 = vunpack.c.l.b16 %v562
    %v1273 = vunpack.c.h.b16 %v562
    %v1274 = vunpack.c.l.b16 %v563
    %v1275 = vunpack.c.h.b16 %v563
    %v1276 = vunpack.c.l.b16 %v564
    %v1277 = vunpack.c.h.b16 %v564
    %v1278 = vunpack.c.l.b16 %v565
    %v1279 = vunpack.c.h.b16 %v565
    %v1280 = vunpack.c.l.b16 %v566
    %v1281 = vunpack.c.h.b16 %v566
    %v1282 = vunpack.c.l.b16 %v567
    %v1283 = vunpack.c.h.b16 %v567
    %v1284 = vunpack.c.l.b16 %v568
    %v1285 = vunpack.c.h.b16 %v568
    %v1286 = vunpack.c.l.b16 %v569
    %v1287 = vunpack.c.h.b16 %v569
    %v1288 = vunpack.c.l.b16 %v570
    %v1289 = vunpack.c.h.b16 %v570
    %v1290 = vunpack.c.l.b16 %v571
    %v1291 = vunpack.c.h.b16 %v571
    %v1292 = vunpack.c.l.b16 %v572
    %v1293 = vunpack.c.h.b16 %v572
    %v1294 = vunpack.c.l.b16 %v573
    %v1295 = vunpack.c.h.b16 %v573
    %v1296 = vunpack.c.l.b16 %v574
    %v1297 = vunpack.c.h.b16 %v574
    %v1298 = vunpack.c.l.b16 %v575
    %v1299 = vunpack.c.h.b16 %v575
    %v1300 = vunpack.c.l.b16 %v576
    %v1301 = vunpack.c.h.b16 %v576
    %v1302 = vunpack.c.l.b16 %v577
    %v1303 = vunpack.c.h.b16 %v577
    %v1304 = vunpack.c.l.b16 %v578
    %v1305 = vunpack.c.h.b16 %v578
    %v1306 = vunpack.c.l.b16 %v579
    %v1307 = vunpack.c.h.b16 %v579
    %v1308 = vunpack.c.l.b16 %v580
    %v1309 = vunpack.c.h.b16 %v580
    %v1310 = vunpack.c.l.b16 %v581
    %v1311 = vunpack.c.h.b16 %v581
    %v1312 = vunpack.c.l.b16 %v582
    %v1313 = vunpack.c.h.b16 %v582
    %v1314 = vunpack.c.l.b16 %v583
    %v1315 = vunpack.c.h.b16 %v583
    %v1316 = vunpack.c.l.b16 %v584
    %v1317 = vunpack.c.h.b16 %v584
    %v1318 = vunpack.c.l.b16 %v585
    %v1319 = vunpack.c.h.b16 %v585
    %v1320 = vunpack.c.l.b16 %v586
    %v1321 = vunpack.c.h.b16 %v586
    %v1322 = vunpack.c.l.b16 %v587
    %v1323 = vunpack.c.h.b16 %v587
    %v1324 = vunpack.c.l.b16 %v588
    %v1325 = vunpack.c.h.b16 %v588
    %v1326 = vunpack.c.l.b16 %v589
    %v1327 = vunpack.c.h.b16 %v589
    %v1328 = vunpack.c.l.b16 %v590
    %v1329 = vunpack.c.h.b16 %v590
    %v1330 = vunpack.c.l.b16 %v591
    %v1331 = vunpack.c.h.b16 %v591
    %v1332 = vunpack.c.l.b16 %v592
    %v1333 = vunpack.c.h.b16 %v592
    %v1334 = vunpack.c.l.b16 %v593
    %v1335 = vunpack.c.h.b16 %v593
    %v1336 = vunpack.c.l.b16 %v594
    %v1337 = vunpack.c.h.b16 %v594
    %v1338 = vunpack.c.l.b16 %v595
    %v1339 = vunpack.c.h.b16 %v595
    %v1340 = vunpack.c.l.b16 %v596
    %v1341 = vunpack.c.h.b16 %v596
    %v1342 = vunpack.c.l.b16 %v597
    %v1343 = vunpack.c.h.b16 %v597
    %v1344 = vunpack.c.l.b16 %v598
    %v1345 = vunpack.c.h.b16 %v598
    %v1346 = vunpack.c.l.b16 %v599
    %v1347 = vunpack.c.h.b16 %v599
    %v1348 = vunpack.c.l.b16 %v600
    %v1349 = vunpack.c.h.b16 %v600
    %v1350 = vunpack.c.l.b16 %v601
    %v1351 = vunpack.c.h.b16 %v601
    %v1352 = vunpack.c.l.b16 %v602
    %v1353 = vunpack.c.h.b16 %v602
    %v1354 = vunpack.c.l.b16 %v603
    %v1355 = vunpack.c.h.b16 %v603
    %v1356 = vunpack.c.l.b16 %v604
    %v1357 = vunpack.c.h.b16 %v604
    %v1358 = vunpack.c.l.b16 %v605
    %v1359 = vunpack.c.h.b16 %v605
    %v1360 = vunpack.c.l.b16 %v606
    %v1361 = vunpack.c.h.b16 %v606
    %v1362 = vunpack.c.l.b16 %v607
    %v1363 = vunpack.c.h.b16 %v607
    %v1364 = vunpack.c.l.b16 %v608
    %v1365 = vunpack.c.h.b16 %v608
    %v1366 = vunpack.c.l.b16 %v609
    %v1367 = vunpack.c.h.b16 %v609
    %v1368 = vunpack.c.l.b16 %v610
    %v1369 = vunpack.c.h.b16 %v610
    %v1370 = vunpack.c.l.b16 %v611
    %v1371 = vunpack.c.h.b16 %v611
    %v1372 = vunpack.c.l.b16 %v612
    %v1373 = vunpack.c.h.b16 %v612
    %v1374 = vunpack.c.l.b16 %v613
    %v1375 = vunpack.c.h.b16 %v613
    %v1376 = vunpack.c.l.b16 %v614
    %v1377 = vunpack.c.h.b16 %v614
    %v1378 = vunpack.c.l.b16 %v615
    %v1379 = vunpack.c.h.b16 %v615
    %v1380 = vunpack.c.l.b16 %v616
    %v1381 = vunpack.c.h.b16 %v616
    %v1382 = vunpack.c.l.b16 %v617
    %v1383 = vunpack.c.h.b16 %v617
    %v1384 = vunpack.c.l.b16 %v618
    %v1385 = vunpack.c.h.b16 %v618
    %v1386 = vunpack.c.l.b16 %v619
    %v1387 = vunpack.c.h.b16 %v619
    %v1388 = vunpack.c.l.b16 %v620
    %v1389 = vunpack.c.h.b16 %v620
    %v1390 = vunpack.c.l.b16 %v621
    %v1391 = vunpack.c.h.b16 %v621
    %v1392 = vunpack.c.l.b16 %v622
    %v1393 = vunpack.c.h.b16 %v622
    %v1394 = vunpack.c.l.b16 %v623
    %v1395 = vunpack.c.h.b16 %v623
    %v1396 = vunpack.c.l.b16 %v624
    %v1397 = vunpack.c.h.b16 %v624
    %v1398 = vunpack.c.l.b16 %v625
    %v1399 = vunpack.c.h.b16 %v625
    %v1400 = vunpack.c.l.b16 %v626
    %v1401 = vunpack.c.h.b16 %v626
    %v1402 = vunpack.c.l.b16 %v627
    %v1403 = vunpack.c.h.b16 %v627
    %v1404 = vunpack.c.l.b16 %v628
    %v1405 = vunpack.c.h.b16 %v628
    %v1406 = vunpack.c.l.b16 %v629
    %v1407 = vunpack.c.h.b16 %v629
    %v1408 = vunpack.c.l.b16 %v630
    %v1409 = vunpack.c.h.b16 %v630
    %v1410 = vunpack.c.l.b16 %v631
    %v1411 = vunpack.c.h.b16 %v631
    %v1412 = vunpack.c.l.b16 %v632
    %v1413 = vunpack.c.h.b16 %v632
    %v1414 = vunpack.c.l.b16 %v633
    %v1415 = vunpack.c.h.b16 %v633
    %v1416 = vunpack.c.l.b16 %v634
    %v1417 = vunpack.c.h.b16 %v634
    %v1418 = vunpack.c.l.b16 %v635
    %v1419 = vunpack.c.h.b16 %v635
    %v1420 = vunpack.c.l.b16 %v636
    %v1421 = vunpack.c.h.b16 %v636
    %v1422 = vunpack.c.l.b16 %v637
    %v1423 = vunpack.c.h.b16 %v637
    %v1424 = vunpack.c.l.b16 %v638
    %v1425 = vunpack.c.h.b16 %v638
    %v1426 = vunpack.c.l.b16 %v639
    %v1427 = vunpack.c.h.b16 %v639
    %v1428 = vunpack.c.l.b16 %v640
    %v1429 = vunpack.c.h.b16 %v640
    %v1430 = vunpack.c.l.b16 %v641
    %v1431 = vunpack.c.h.b16 %v641
    %v1432 = vunpack.c.l.b16 %v642
    %v1433 = vunpack.c.h.b16 %v642
    %v1434 = vunpack.c.l.b16 %v643
    %v1435 = vunpack.c.h.b16 %v643
    %v1436 = vunpack.c.l.b16 %v644
    %v1437 = vunpack.c.h.b16 %v644
    %v1438 = vunpack.c.l.b16 %v645
    %v1439 = vunpack.c.h.b16 %v645
    %v1440 = vunpack.c.l.b16 %v646
    %v1441 = vunpack.c.h.b16 %v646
    %v1442 = vunpack.c.l.b16 %v647
    %v1443 = vunpack.c.h.b16 %v647
    %v1444 = vunpack.c.l.b16 %v648
    %v1445 = vunpack.c.h.b16 %v648
    %v1446 = vunpack.c.l.b16 %v649
    %v1447 = vunpack.c.h.b16 %v649
    %v1448 = vunpack.c.l.b16 %v650
    %v1449 = vunpack.c.h.b16 %v650
    %v1450 = vunpack.c.l.b16 %v651
    %v1451 = vunpack.c.h.b16 %v651
    %v1452 = vunpack.c.l.b16 %v652
    %v1453 = vunpack.c.h.b16 %v652
    %v1454 = vunpack.c.l.b16 %v653
    %v1455 = vunpack.c.h.b16 %v653
    %v1456 = vunpack.c.l.b16 %v654
    %v1457 = vunpack.c.h.b16 %v654
    %v1458 = vunpack.c.l.b16 %v655
    %v1459 = vunpack.c.h.b16 %v655
    %v1460 = vunpack.c.l.b16 %v656
    %v1461 = vunpack.c.h.b16 %v656
    %v1462 = vunpack.c.l.b16 %v657
    %v1463 = vunpack.c.h.b16 %v657
    %v1464 = vunpack.c.l.b16 %v658
    %v1465 = vunpack.c.h.b16 %v658
    %v1466 = vunpack.c.l.b16 %v659
    %v1467 = vunpack.c.h.b16 %v659
    %v1468 = vunpack.c.l.b16 %v660
    %v1469 = vunpack.c.h.b16 %v660
    %v1470 = vunpack.c.l.b16 %v661
    %v1471 = vunpack.c.h.b16 %v661
    %v1472 = vpack.c.b16 %v968, %v960
    %v1473 = vpack.c.b16 %v969, %v961
    %v1474 = vpack.c.b16 %v970, %v962
    %v1475 = vpack.c.b16 %v971, %v963
    %v1476 = vpack.c.b16 %v972, %v964
    %v1477 = vpack.c.b16 %v973, %v965
    %v1478 = vpack.c.b16 %v974, %v966
    %v1479 = vpack.c.b16 %v975, %v967
    %v1480 = vpack.c.b16 %v984, %v976
    %v1481 = vpack.c.b16 %v985, %v977
    %v1482 = vpack.c.b16 %v986, %v978
    %v1483 = vpack.c.b16 %v987, %v979
    %v1484 = vpack.c.b16 %v988, %v980
    %v1485 = vpack.c.b16 %v989, %v981
    %v1486 = vpack.c.b16 %v990, %v982
    %v1487 = vpack.c.b16 %v991, %v983
    %v1488 = vpack.c.b16 %v1000, %v992
    %v1489 = vpack.c.b16 %v1001, %v993
    %v1490 = vpack.c.b16 %v1002, %v994
    %v1491 = vpack.c.b16 %v1003, %v995
    %v1492 = vpack.c.b16 %v1004, %v996
    %v1493 = vpack.c.b16 %v1005, %v997
    %v1494 = vpack.c.b16 %v1006, %v998
    %v1495 = vpack.c.b16 %v1007, %v999
    %v1496 = vpack.c.b16 %v1016, %v1008
    %v1497 = vpack.c.b16 %v1017, %v1009
    %v1498 = vpack.c.b16 %v1018, %v1010
    %v1499 = vpack.c.b16 %v1019, %v1011
    %v1500 = vpack.c.b16 %v1020, %v1012
    %v1501 = vpack.c.b16 %v1021, %v1013
    %v1502 = vpack.c.b16 %v1022, %v1014
    %v1503 = vpack.c.b16 %v1023, %v1015
    %v1504 = vpack.c.b16 %v1032, %v1024
    %v1505 = vpack.c.b16 %v1033, %v1025
    %v1506 = vpack.c.b16 %v1034, %v1026
    %v1507 = vpack.c.b16 %v1035, %v1027
    %v1508 = vpack.c.b16 %v1036, %v1028
    %v1509 = vpack.c.b16 %v1037, %v1029
    %v1510 = vpack.c.b16 %v1038, %v1030
    %v1511 = vpack.c.b16 %v1039, %v1031
    %v1512 = vpack.c.b16 %v1048, %v1040
    %v1513 = vpack.c.b16 %v1049, %v1041
    %v1514 = vpack.c.b16 %v1050, %v1042
    %v1515 = vpack.c.b16 %v1051, %v1043
    %v1516 = vpack.c.b16 %v1052, %v1044
    %v1517 = vpack.c.b16 %v1053, %v1045
    %v1518 = vpack.c.b16 %v1054, %v1046
    %v1519 = vpack.c.b16 %v1055, %v1047
    %v1520 = vpack.c.b16 %v1064, %v1056
    %v1521 = vpack.c.b16 %v1065, %v1057
    %v1522 = vpack.c.b16 %v1066, %v1058
    %v1523 = vpack.c.b16 %v1067, %v1059
    %v1524 = vpack.c.b16 %v1068, %v1060
    %v1525 = vpack.c.b16 %v1069, %v1061
    %v1526 = vpack.c.b16 %v1070, %v1062
    %v1527 = vpack.c.b16 %v1071, %v1063
    %v1528 = vpack.c.b16 %v1080, %v1072
    %v1529 = vpack.c.b16 %v1081, %v1073
    %v1530 = vpack.c.b16 %v1082, %v1074
    %v1531 = vpack.c.b16 %v1083, %v1075
    %v1532 = vpack.c.b16 %v1084, %v1076
    %v1533 = vpack.c.b16 %v1085, %v1077
    %v1534 = vpack.c.b16 %v1086, %v1078
    %v1535 = vpack.c.b16 %v1087, %v1079
    %v1536 = vpack.c.b16 %v1096, %v1088
    %v1537 = vpack.c.b16 %v1097, %v1089
    %v1538 = vpack.c.b16 %v1098, %v1090
    %v1539 = vpack.c.b16 %v1099, %v1091
    %v1540 = vpack.c.b16 %v1100, %v1092
    %v1541 = vpack.c.b16 %v1101, %v1093
    %v1542 = vpack.c.b16 %v1102, %v1094
    %v1543 = vpack.c.b16 %v1103, %v1095
    %v1544 = vpack.c.b16 %v1112, %v1104
    %v1545 = vpack.c.b16 %v1113, %v1105
    %v1546 = vpack.c.b16 %v1114, %v1106
    %v1547 = vpack.c.b16 %v1115, %v1107
    %v1548 = vpack.c.b16 %v1116, %v1108
    %v1549 = vpack.c.b16 %v1117, %v1109
    %v1550 = vpack.c.b16 %v1118, %v1110
    %v1551 = vpack.c.b16 %v1119, %v1111
    %v1552 = vpack.c.b16 %v1128, %v1120
    %v1553 = vpack.c.b16 %v1129, %v1121
    %v1554 = vpack.c.b16 %v1130, %v1122
    %v1555 = vpack.c.b16 %v1131, %v1123
    %v1556 = vpack.c.b16 %v1132, %v1124
    %v1557 = vpack.c.b16 %v1133, %v1125
    %v1558 = vpack.c.b16 %v1134, %v1126
    %v1559 = vpack.c.b16 %v1135, %v1127
    %v1560 = vpack.c.b16 %v1144, %v1136
    %v1561 = vpack.c.b16 %v1145, %v1137
    %v1562 = vpack.c.b16 %v1146, %v1138
    %v1563 = vpack.c.b16 %v1147, %v1139
    %v1564 = vpack.c.b16 %v1148, %v1140
    %v1565 = vpack.c.b16 %v1149, %v1141
    %v1566 = vpack.c.b16 %v1150, %v1142
    %v1567 = vpack.c.b16 %v1151, %v1143
    %v1568 = vpack.c.b16 %v1160, %v1152
    %v1569 = vpack.c.b16 %v1161, %v1153
    %v1570 = vpack.c.b16 %v1162, %v1154
    %v1571 = vpack.c.b16 %v1163, %v1155
    %v1572 = vpack.c.b16 %v1164, %v1156
    %v1573 = vpack.c.b16 %v1165, %v1157
    %v1574 = vpack.c.b16 %v1166, %v1158
    %v1575 = vpack.c.b16 %v1167, %v1159
    %v1576 = vpack.c.b16 %v1176, %v1168
    %v1577 = vpack.c.b16 %v1177, %v1169
    %v1578 = vpack.c.b16 %v1178, %v1170
    %v1579 = vpack.c.b16 %v1179, %v1171
    %v1580 = vpack.c.b16 %v1180, %v1172
    %v1581 = vpack.c.b16 %v1181, %v1173
    %v1582 = vpack.c.b16 %v1182, %v1174
    %v1583 = vpack.c.b16 %v1183, %v1175
    %v1584 = vpack.c.b16 %v1192, %v1184
    %v1585 = vpack.c.b16 %v1193, %v1185
    %v1586 = vpack.c.b16 %v1194, %v1186
    %v1587 = vpack.c.b16 %v1195, %v1187
    %v1588 = vpack.c.b16 %v1196, %v1188
    %v1589 = vpack.c.b16 %v1197, %v1189
    %v1590 = vpack.c.b16 %v1198, %v1190
    %v1591 = vpack.c.b16 %v1199, %v1191
    %v1592 = vpack.c.b16 %v1208, %v1200
    %v1593 = vpack.c.b16 %v1209, %v1201
    %v1594 = vpack.c.b16 %v1210, %v1202
    %v1595 = vpack.c.b16 %v1211, %v1203
    %v1596 = vpack.c.b16 %v1212, %v1204
    %v1597 = vpack.c.b16 %v1213, %v1205
    %v1598 = vpack.c.b16 %v1214, %v1206
    %v1599 = vpack.c.b16 %v1215, %v1207
    %v1600 = vpack.c.b16 %v1224, %v1216
    %v1601 = vpack.c.b16 %v1225, %v1217
    %v1602 = vpack.c.b16 %v1226, %v1218
    %v1603 = vpack.c.b16 %v1227, %v1219
    %v1604 = vpack.c.b16 %v1228, %v1220
    %v1605 = vpack.c.b16 %v1229, %v1221
    %v1606 = vpack.c.b16 %v1230, %v1222
    %v1607 = vpack.c.b16 %v1231, %v1223
    %v1608 = vpack.c.b16 %v1240, %v1232
    %v1609 = vpack.c.b16 %v1241, %v1233
    %v1610 = vpack.c.b16 %v1242, %v1234
    %v1611 = vpack.c.b16 %v1243, %v1235
    %v1612 = vpack.c.b16 %v1244, %v1236
    %v1613 = vpack.c.b16 %v1245, %v1237
    %v1614 = vpack.c.b16 %v1246, %v1238
    %v1615 = vpack.c.b16 %v1247, %v1239
    %v1616 = vpack.c.b16 %v1256, %v1248
    %v1617 = vpack.c.b16 %v1257, %v1249
    %v1618 = vpack.c.b16 %v1258, %v1250
    %v1619 = vpack.c.b16 %v1259, %v1251
    %v1620 = vpack.c.b16 %v1260, %v1252
    %v1621 = vpack.c.b16 %v1261, %v1253
    %v1622 = vpack.c.b16 %v1262, %v1254
    %v1623 = vpack.c.b16 %v1263, %v1255
    %v1624 = vpack.c.b16 %v1272, %v1264
    %v1625 = vpack.c.b16 %v1273, %v1265
    %v1626 = vpack.c.b16 %v1274, %v1266
    %v1627 = vpack.c.b16 %v1275, %v1267
    %v1628 = vpack.c.b16 %v1276, %v1268
    %v1629 = vpack.c.b16 %v1277, %v1269
    %v1630 = vpack.c.b16 %v1278, %v1270
    %v1631 = vpack.c.b16 %v1279, %v1271
    %v1632 = vpack.c.b16 %v1288, %v1280
    %v1633 = vpack.c.b16 %v1289, %v1281
    %v1634 = vpack.c.b16 %v1290, %v1282
    %v1635 = vpack.c.b16 %v1291, %v1283
    %v1636 = vpack.c.b16 %v1292, %v1284
    %v1637 = vpack.c.b16 %v1293, %v1285
    %v1638 = vpack.c.b16 %v1294, %v1286
    %v1639 = vpack.c.b16 %v1295, %v1287
    %v1640 = vpack.c.b16 %v1304, %v1296
    %v1641 = vpack.c.b16 %v1305, %v1297
    %v1642 = vpack.c.b16 %v1306, %v1298
    %v1643 = vpack.c.b16 %v1307, %v1299
    %v1644 = vpack.c.b16 %v1308, %v1300
    %v1645 = vpack.c.b16 %v1309, %v1301
    %v1646 = vpack.c.b16 %v1310, %v1302
    %v1647 = vpack.c.b16 %v1311, %v1303
    %v1648 = vpack.c.b16 %v1320, %v1312
    %v1649 = vpack.c.b16 %v1321, %v1313
    %v1650 = vpack.c.b16 %v1322, %v1314
    %v1651 = vpack.c.b16 %v1323, %v1315
    %v1652 = vpack.c.b16 %v1324, %v1316
    %v1653 = vpack.c.b16 %v1325, %v1317
    %v1654 = vpack.c.b16 %v1326, %v1318
    %v1655 = vpack.c.b16 %v1327, %v1319
    %v1656 = vpack.c.b16 %v1336, %v1328
    %v1657 = vpack.c.b16 %v1337, %v1329
    %v1658 = vpack.c.b16 %v1338, %v1330
    %v1659 = vpack.c.b16 %v1339, %v1331
    %v1660 = vpack.c.b16 %v1340, %v1332
    %v1661 = vpack.c.b16 %v1341, %v1333
    %v1662 = vpack.c.b16 %v1342, %v1334
    %v1663 = vpack.c.b16 %v1343, %v1335
    %v1664 = vpack.c.b16 %v1352, %v1344
    %v1665 = vpack.c.b16 %v1353, %v1345
    %v1666 = vpack.c.b16 %v1354, %v1346
    %v1667 = vpack.c.b16 %v1355, %v1347
    %v1668 = vpack.c.b16 %v1356, %v1348
    %v1669 = vpack.c.b16 %v1357, %v1349
    %v1670 = vpack.c.b16 %v1358, %v1350
    %v1671 = vpack.c.b16 %v1359, %v1351
    %v1672 = vpack.c.b16 %v1368, %v1360
    %v1673 = vpack.c.b16 %v1369, %v1361
    %v1674 = vpack.c.b16 %v1370, %v1362
    %v1675 = vpack.c.b16 %v1371, %v1363
    %v1676 = vpack.c.b16 %v1372, %v1364
    %v1677 = vpack.c.b16 %v1373, %v1365
    %v1678 = vpack.c.b16 %v1374, %v1366
    %v1679 = vpack.c.b16 %v1375, %v1367
    %v1680 = vpack.c.b16 %v1384, %v1376
    %v1681 = vpack.c.b16 %v1385, %v1377
    %v1682 = vpack.c.b16 %v1386, %v1378
    %v1683 = vpack.c.b16 %v1387, %v1379
    %v1684 = vpack.c.b16 %v1388, %v1380
    %v1685 = vpack.c.b16 %v1389, %v1381
    %v1686 = vpack.c.b16 %v1390, %v1382
    %v1687 = vpack.c.b16 %v1391, %v1383
    %v1688 = vpack.c.b16 %v1400, %v1392
    %v1689 = vpack.c.b16 %v1401, %v1393
    %v1690 = vpack.c.b16 %v1402, %v1394
    %v1691 = vpack.c.b16 %v1403, %v1395
    %v1692 = vpack.c.b16 %v1404, %v1396
    %v1693 = vpack.c.b16 %v1405, %v1397
    %v1694 = vpack.c.b16 %v1406, %v1398
    %v1695 = vpack.c.b16 %v1407, %v1399
    %v1696 = vpack.c.b16 %v1416, %v1408
    %v1697 = vpack.c.b16 %v1417, %v1409
    %v1698 = vpack.c.b16 %v1418, %v1410
    %v1699 = vpack.c.b16 %v1419, %v1411
    %v1700 = vpack.c.b16 %v1420, %v1412
    %v1701 = vpack.c.b16 %v1421, %v1413
    %v1702 = vpack.c.b16 %v1422, %v1414
    %v1703 = vpack.c.b16 %v1423, %v1415
    %v1704 = vpack.c.b16 %v1432, %v1424
    %v1705 = vpack.c.b16 %v1433, %v1425
    %v1706 = vpack.c.b16 %v1434, %v1426
    %v1707 = vpack.c.b16 %v1435, %v1427
    %v1708 = vpack.c.b16 %v1436, %v1428
    %v1709 = vpack.c.b16 %v1437, %v1429
    %v1710 = vpack.c.b16 %v1438, %v1430
    %v1711 = vpack.c.b16 %v1439, %v1431
    %v1712 = vpack.c.b16 %v1448, %v1440
    %v1713 = vpack.c.b16 %v1449, %v1441
    %v1714 = vpack.c.b16 %v1450, %v1442
    %v1715 = vpack.c.b16 %v1451, %v1443
    %v1716 = vpack.c.b16 %v1452, %v1444
    %v1717 = vpack.c.b16 %v1453, %v1445
    %v1718 = vpack.c.b16 %v1454, %v1446
    %v1719 = vpack.c.b16 %v1455, %v1447
    %v1720 = vpack.c.b16 %v1464, %v1456
    %v1721 = vpack.c.b16 %v1465, %v1457
    %v1722 = vpack.c.b16 %v1466, %v1458
    %v1723 = vpack.c.b16 %v1467, %v1459
    %v1724 = vpack.c.b16 %v1468, %v1460
    %v1725 = vpack.c.b16 %v1469, %v1461
    %v1726 = vpack.c.b16 %v1470, %v1462
    %v1727 = vpack.c.b16 %v1471, %v1463
    %1984 = vmatprep.subr.bf16.mxu0 %v1473
    %1985 = vmatpush1.bf16.msra.mxu0 %v1472
    %1986 = vmatprep.subr.bf16.mxu0 %v1481
    %1987 = vmatpush1.bf16.msra.mxu0 %v1480
    %1988 = vmatprep.subr.bf16.mxu0 %v1489
    %1989 = vmatpush1.bf16.msra.mxu0 %v1488
    %1990 = vmatprep.subr.bf16.mxu0 %v1497
    %1991 = vmatpush1.bf16.msra.mxu0 %v1496
    %1992 = vmatprep.subr.bf16.mxu0 %v1505
    %1993 = vmatpush1.bf16.msra.mxu0 %v1504
    %1994 = vmatprep.subr.bf16.mxu0 %v1513
    %1995 = vmatpush1.bf16.msra.mxu0 %v1512
    %1996 = vmatprep.subr.bf16.mxu0 %v1521
    %1997 = vmatpush1.bf16.msra.mxu0 %v1520
    %1998 = vmatprep.subr.bf16.mxu0 %v1529
    %1999 = vmatpush1.bf16.msra.mxu0 %v1528
    %2000 = vmatprep.subr.bf16.mxu0 %v1537
    %2001 = vmatpush1.bf16.msra.mxu0 %v1536
    %2002 = vmatprep.subr.bf16.mxu0 %v1545
    %2003 = vmatpush1.bf16.msra.mxu0 %v1544
    %2004 = vmatprep.subr.bf16.mxu0 %v1553
    %2005 = vmatpush1.bf16.msra.mxu0 %v1552
    %2006 = vmatprep.subr.bf16.mxu0 %v1561
    %2007 = vmatpush1.bf16.msra.mxu0 %v1560
    %2008 = vmatprep.subr.bf16.mxu0 %v1569
    %2009 = vmatpush1.bf16.msra.mxu0 %v1568
    %2010 = vmatprep.subr.bf16.mxu0 %v1577
    %2011 = vmatpush1.bf16.msra.mxu0 %v1576
    %2012 = vmatprep.subr.bf16.mxu0 %v1585
    %2013 = vmatpush1.bf16.msra.mxu0 %v1584
    %2014 = vmatprep.subr.bf16.mxu0 %v1593
    %2015 = vmatpush1.bf16.msra.mxu0 %v1592
    %2016 = vmatprep.mubr.bf16.mxu0 %v403
    %2017 = vmatmul.mubr.bf16.gmra.mrb[0].mxu0 %v402
    %v2018 = vpop.f32.mrb[0].mxu0
    %v2019 = vadd.f32 %v667, %v2018
    %v2020 = vpop.f32.mrb[0].mxu0
    %v2021 = vadd.f32 %v671, %v2020
    %v2022 = vpop.f32.mrb[0].mxu0
    %v2023 = vpop.f32.mrb[0].mxu0
    %2024 = vdwg.mxu0
    %2025 = vmatprep.subr.bf16.mxu0 %v1601
    %2026 = vmatpush1.bf16.msra.mxu0 %v1600
    %2027 = vmatprep.subr.bf16.mxu0 %v1609
    %2028 = vmatpush1.bf16.msra.mxu0 %v1608
    %2029 = vmatprep.subr.bf16.mxu0 %v1617
    %2030 = vmatpush1.bf16.msra.mxu0 %v1616
    %2031 = vmatprep.subr.bf16.mxu0 %v1625
    %2032 = vmatpush1.bf16.msra.mxu0 %v1624
    %2033 = vmatprep.subr.bf16.mxu0 %v1633
    %2034 = vmatpush1.bf16.msra.mxu0 %v1632
    %2035 = vmatprep.subr.bf16.mxu0 %v1641
    %2036 = vmatpush1.bf16.msra.mxu0 %v1640
    %2037 = vmatprep.subr.bf16.mxu0 %v1649
    %2038 = vmatpush1.bf16.msra.mxu0 %v1648
    %2039 = vmatprep.subr.bf16.mxu0 %v1657
    %2040 = vmatpush1.bf16.msra.mxu0 %v1656
    %2041 = vmatprep.subr.bf16.mxu0 %v1665
    %2042 = vmatpush1.bf16.msra.mxu0 %v1664
    %2043 = vmatprep.subr.bf16.mxu0 %v1673
    %2044 = vmatpush1.bf16.msra.mxu0 %v1672
    %2045 = vmatprep.subr.bf16.mxu0 %v1681
    %2046 = vmatpush1.bf16.msra.mxu0 %v1680
    %2047 = vmatprep.subr.bf16.mxu0 %v1689
    %2048 = vmatpush1.bf16.msra.mxu0 %v1688
    %2049 = vmatprep.subr.bf16.mxu0 %v1697
    %2050 = vmatpush1.bf16.msra.mxu0 %v1696
    %2051 = vmatprep.subr.bf16.mxu0 %v1705
    %2052 = vmatpush1.bf16.msra.mxu0 %v1704
    %2053 = vmatprep.subr.bf16.mxu0 %v1713
    %2054 = vmatpush1.bf16.msra.mxu0 %v1712
    %2055 = vmatprep.subr.bf16.mxu0 %v1721
    %2056 = vmatpush1.bf16.msra.mxu0 %v1720
    %2057 = vmatprep.mubr.bf16.mxu0 %v405
    %2058 = vmatmul.mubr.bf16.gmra.mrb[0].mxu0 %v404
    %v2059 = vpop.f32.mrb[0].mxu0
    %v2060 = vadd.f32 %v2019, %v2059
    %v2061 = vpop.f32.mrb[0].mxu0
    %v2062 = vadd.f32 %v2021, %v2061
    %v2063 = vpop.f32.mrb[0].mxu0
    %v2064 = vpop.f32.mrb[0].mxu0
    %2065 = vdwg.mxu0
    %2066 = vmatprep.subr.bf16.mxu0 %v1475
    %2067 = vmatpush1.bf16.msra.mxu0 %v1474
    %2068 = vmatprep.subr.bf16.mxu0 %v1483
    %2069 = vmatpush1.bf16.msra.mxu0 %v1482
    %2070 = vmatprep.subr.bf16.mxu0 %v1491
    %2071 = vmatpush1.bf16.msra.mxu0 %v1490
    %2072 = vmatprep.subr.bf16.mxu0 %v1499
    %2073 = vmatpush1.bf16.msra.mxu0 %v1498
    %2074 = vmatprep.subr.bf16.mxu0 %v1507
    %2075 = vmatpush1.bf16.msra.mxu0 %v1506
    %2076 = vmatprep.subr.bf16.mxu0 %v1515
    %2077 = vmatpush1.bf16.msra.mxu0 %v1514
    %2078 = vmatprep.subr.bf16.mxu0 %v1523
    %2079 = vmatpush1.bf16.msra.mxu0 %v1522
    %2080 = vmatprep.subr.bf16.mxu0 %v1531
    %2081 = vmatpush1.bf16.msra.mxu0 %v1530
    %2082 = vmatprep.subr.bf16.mxu0 %v1539
    %2083 = vmatpush1.bf16.msra.mxu0 %v1538
    %2084 = vmatprep.subr.bf16.mxu0 %v1547
    %2085 = vmatpush1.bf16.msra.mxu0 %v1546
    %2086 = vmatprep.subr.bf16.mxu0 %v1555
    %2087 = vmatpush1.bf16.msra.mxu0 %v1554
    %2088 = vmatprep.subr.bf16.mxu0 %v1563
    %2089 = vmatpush1.bf16.msra.mxu0 %v1562
    %2090 = vmatprep.subr.bf16.mxu0 %v1571
    %2091 = vmatpush1.bf16.msra.mxu0 %v1570
    %2092 = vmatprep.subr.bf16.mxu0 %v1579
    %2093 = vmatpush1.bf16.msra.mxu0 %v1578
    %2094 = vmatprep.subr.bf16.mxu0 %v1587
    %2095 = vmatpush1.bf16.msra.mxu0 %v1586
    %2096 = vmatprep.subr.bf16.mxu0 %v1595
    %2097 = vmatpush1.bf16.msra.mxu0 %v1594
    %2098 = vmatprep.mubr.bf16.mxu0 %v403
    %2099 = vmatmul.mubr.bf16.gmra.mrb[0].mxu0 %v402
    %v2100 = vpop.f32.mrb[0].mxu0
    %v2101 = vadd.f32 %v675, %v2100
    %v2102 = vpop.f32.mrb[0].mxu0
    %v2103 = vadd.f32 %v679, %v2102
    %v2104 = vpop.f32.mrb[0].mxu0
    %v2105 = vpop.f32.mrb[0].mxu0
    %2106 = vdwg.mxu0
    %2107 = vmatprep.subr.bf16.mxu0 %v1603
    %2108 = vmatpush1.bf16.msra.mxu0 %v1602
    %2109 = vmatprep.subr.bf16.mxu0 %v1611
    %2110 = vmatpush1.bf16.msra.mxu0 %v1610
    %2111 = vmatprep.subr.bf16.mxu0 %v1619
    %2112 = vmatpush1.bf16.msra.mxu0 %v1618
    %2113 = vmatprep.subr.bf16.mxu0 %v1627
    %2114 = vmatpush1.bf16.msra.mxu0 %v1626
    %2115 = vmatprep.subr.bf16.mxu0 %v1635
    %2116 = vmatpush1.bf16.msra.mxu0 %v1634
    %2117 = vmatprep.subr.bf16.mxu0 %v1643
    %2118 = vmatpush1.bf16.msra.mxu0 %v1642
    %2119 = vmatprep.subr.bf16.mxu0 %v1651
    %2120 = vmatpush1.bf16.msra.mxu0 %v1650
    %2121 = vmatprep.subr.bf16.mxu0 %v1659
    %2122 = vmatpush1.bf16.msra.mxu0 %v1658
    %2123 = vmatprep.subr.bf16.mxu0 %v1667
    %2124 = vmatpush1.bf16.msra.mxu0 %v1666
    %2125 = vmatprep.subr.bf16.mxu0 %v1675
    %2126 = vmatpush1.bf16.msra.mxu0 %v1674
    %2127 = vmatprep.subr.bf16.mxu0 %v1683
    %2128 = vmatpush1.bf16.msra.mxu0 %v1682
    %2129 = vmatprep.subr.bf16.mxu0 %v1691
    %2130 = vmatpush1.bf16.msra.mxu0 %v1690
    %2131 = vmatprep.subr.bf16.mxu0 %v1699
    %2132 = vmatpush1.bf16.msra.mxu0 %v1698
    %2133 = vmatprep.subr.bf16.mxu0 %v1707
    %2134 = vmatpush1.bf16.msra.mxu0 %v1706
    %2135 = vmatprep.subr.bf16.mxu0 %v1715
    %2136 = vmatpush1.bf16.msra.mxu0 %v1714
    %2137 = vmatprep.subr.bf16.mxu0 %v1723
    %2138 = vmatpush1.bf16.msra.mxu0 %v1722
    %2139 = vmatprep.mubr.bf16.mxu0 %v405
    %2140 = vmatmul.mubr.bf16.gmra.mrb[0].mxu0 %v404
    %v2141 = vpop.f32.mrb[0].mxu0
    %v2142 = vadd.f32 %v2101, %v2141
    %v2143 = vpop.f32.mrb[0].mxu0
    %v2144 = vadd.f32 %v2103, %v2143
    %v2145 = vpop.f32.mrb[0].mxu0
    %v2146 = vpop.f32.mrb[0].mxu0
    %2147 = vdwg.mxu0
    %2148 = vmatprep.subr.bf16.mxu0 %v1477
    %2149 = vmatpush1.bf16.msra.mxu0 %v1476
    %2150 = vmatprep.subr.bf16.mxu0 %v1485
    %2151 = vmatpush1.bf16.msra.mxu0 %v1484
    %2152 = vmatprep.subr.bf16.mxu0 %v1493
    %2153 = vmatpush1.bf16.msra.mxu0 %v1492
    %2154 = vmatprep.subr.bf16.mxu0 %v1501
    %2155 = vmatpush1.bf16.msra.mxu0 %v1500
    %2156 = vmatprep.subr.bf16.mxu0 %v1509
    %2157 = vmatpush1.bf16.msra.mxu0 %v1508
    %2158 = vmatprep.subr.bf16.mxu0 %v1517
    %2159 = vmatpush1.bf16.msra.mxu0 %v1516
    %2160 = vmatprep.subr.bf16.mxu0 %v1525
    %2161 = vmatpush1.bf16.msra.mxu0 %v1524
    %2162 = vmatprep.subr.bf16.mxu0 %v1533
    %2163 = vmatpush1.bf16.msra.mxu0 %v1532
    %2164 = vmatprep.subr.bf16.mxu0 %v1541
    %2165 = vmatpush1.bf16.msra.mxu0 %v1540
    %2166 = vmatprep.subr.bf16.mxu0 %v1549
    %2167 = vmatpush1.bf16.msra.mxu0 %v1548
    %2168 = vmatprep.subr.bf16.mxu0 %v1557
    %2169 = vmatpush1.bf16.msra.mxu0 %v1556
    %2170 = vmatprep.subr.bf16.mxu0 %v1565
    %2171 = vmatpush1.bf16.msra.mxu0 %v1564
    %2172 = vmatprep.subr.bf16.mxu0 %v1573
    %2173 = vmatpush1.bf16.msra.mxu0 %v1572
    %2174 = vmatprep.subr.bf16.mxu0 %v1581
    %2175 = vmatpush1.bf16.msra.mxu0 %v1580
    %2176 = vmatprep.subr.bf16.mxu0 %v1589
    %2177 = vmatpush1.bf16.msra.mxu0 %v1588
    %2178 = vmatprep.subr.bf16.mxu0 %v1597
    %2179 = vmatpush1.bf16.msra.mxu0 %v1596
    %2180 = vmatprep.mubr.bf16.mxu0 %v403
    %2181 = vmatmul.mubr.bf16.gmra.mrb[0].mxu0 %v402
    %v2182 = vpop.f32.mrb[0].mxu0
    %v2183 = vadd.f32 %v683, %v2182
    %v2184 = vpop.f32.mrb[0].mxu0
    %v2185 = vadd.f32 %v687, %v2184
    %v2186 = vpop.f32.mrb[0].mxu0
    %v2187 = vpop.f32.mrb[0].mxu0
    %2188 = vdwg.mxu0
    %2189 = vmatprep.subr.bf16.mxu0 %v1605
    %2190 = vmatpush1.bf16.msra.mxu0 %v1604
    %2191 = vmatprep.subr.bf16.mxu0 %v1613
    %2192 = vmatpush1.bf16.msra.mxu0 %v1612
    %2193 = vmatprep.subr.bf16.mxu0 %v1621
    %2194 = vmatpush1.bf16.msra.mxu0 %v1620
    %2195 = vmatprep.subr.bf16.mxu0 %v1629
    %2196 = vmatpush1.bf16.msra.mxu0 %v1628
    %2197 = vmatprep.subr.bf16.mxu0 %v1637
    %2198 = vmatpush1.bf16.msra.mxu0 %v1636
    %2199 = vmatprep.subr.bf16.mxu0 %v1645
    %2200 = vmatpush1.bf16.msra.mxu0 %v1644
    %2201 = vmatprep.subr.bf16.mxu0 %v1653
    %2202 = vmatpush1.bf16.msra.mxu0 %v1652
    %2203 = vmatprep.subr.bf16.mxu0 %v1661
    %2204 = vmatpush1.bf16.msra.mxu0 %v1660
    %2205 = vmatprep.subr.bf16.mxu0 %v1669
    %2206 = vmatpush1.bf16.msra.mxu0 %v1668
    %2207 = vmatprep.subr.bf16.mxu0 %v1677
    %2208 = vmatpush1.bf16.msra.mxu0 %v1676
    %2209 = vmatprep.subr.bf16.mxu0 %v1685
    %2210 = vmatpush1.bf16.msra.mxu0 %v1684
    %2211 = vmatprep.subr.bf16.mxu0 %v1693
    %2212 = vmatpush1.bf16.msra.mxu0 %v1692
    %2213 = vmatprep.subr.bf16.mxu0 %v1701
    %2214 = vmatpush1.bf16.msra.mxu0 %v1700
    %2215 = vmatprep.subr.bf16.mxu0 %v1709
    %2216 = vmatpush1.bf16.msra.mxu0 %v1708
    %2217 = vmatprep.subr.bf16.mxu0 %v1717
    %2218 = vmatpush1.bf16.msra.mxu0 %v1716
    %2219 = vmatprep.subr.bf16.mxu0 %v1725
    %2220 = vmatpush1.bf16.msra.mxu0 %v1724
    %2221 = vmatprep.mubr.bf16.mxu0 %v405
    %2222 = vmatmul.mubr.bf16.gmra.mrb[0].mxu0 %v404
    %v2223 = vpop.f32.mrb[0].mxu0
    %v2224 = vadd.f32 %v2183, %v2223
    %v2225 = vpop.f32.mrb[0].mxu0
    %v2226 = vadd.f32 %v2185, %v2225
    %v2227 = vpop.f32.mrb[0].mxu0
    %v2228 = vpop.f32.mrb[0].mxu0
    %2229 = vdwg.mxu0
    %2230 = vmatprep.subr.bf16.mxu0 %v1479
    %2231 = vmatpush1.bf16.msra.mxu0 %v1478
    %2232 = vmatprep.subr.bf16.mxu0 %v1487
    %2233 = vmatpush1.bf16.msra.mxu0 %v1486
    %2234 = vmatprep.subr.bf16.mxu0 %v1495
    %2235 = vmatpush1.bf16.msra.mxu0 %v1494
    %2236 = vmatprep.subr.bf16.mxu0 %v1503
    %2237 = vmatpush1.bf16.msra.mxu0 %v1502
    %2238 = vmatprep.subr.bf16.mxu0 %v1511
    %2239 = vmatpush1.bf16.msra.mxu0 %v1510
    %2240 = vmatprep.subr.bf16.mxu0 %v1519
    %2241 = vmatpush1.bf16.msra.mxu0 %v1518
    %2242 = vmatprep.subr.bf16.mxu0 %v1527
    %2243 = vmatpush1.bf16.msra.mxu0 %v1526
    %2244 = vmatprep.subr.bf16.mxu0 %v1535
    %2245 = vmatpush1.bf16.msra.mxu0 %v1534
    %2246 = vmatprep.subr.bf16.mxu0 %v1543
    %2247 = vmatpush1.bf16.msra.mxu0 %v1542
    %2248 = vmatprep.subr.bf16.mxu0 %v1551
    %2249 = vmatpush1.bf16.msra.mxu0 %v1550
    %2250 = vmatprep.subr.bf16.mxu0 %v1559
    %2251 = vmatpush1.bf16.msra.mxu0 %v1558
    %2252 = vmatprep.subr.bf16.mxu0 %v1567
    %2253 = vmatpush1.bf16.msra.mxu0 %v1566
    %2254 = vmatprep.subr.bf16.mxu0 %v1575
    %2255 = vmatpush1.bf16.msra.mxu0 %v1574
    %2256 = vmatprep.subr.bf16.mxu0 %v1583
    %2257 = vmatpush1.bf16.msra.mxu0 %v1582
    %2258 = vmatprep.subr.bf16.mxu0 %v1591
    %2259 = vmatpush1.bf16.msra.mxu0 %v1590
    %2260 = vmatprep.subr.bf16.mxu0 %v1599
    %2261 = vmatpush1.bf16.msra.mxu0 %v1598
    %2262 = vmatprep.mubr.bf16.mxu0 %v403
    %2263 = vmatmul.mubr.bf16.gmra.mrb[0].mxu0 %v402
    %v2264 = vpop.f32.mrb[0].mxu0
    %v2265 = vadd.f32 %v691, %v2264
    %v2266 = vpop.f32.mrb[0].mxu0
    %v2267 = vadd.f32 %v695, %v2266
    %v2268 = vpop.f32.mrb[0].mxu0
    %v2269 = vpop.f32.mrb[0].mxu0
    %2270 = vdwg.mxu0
    %2271 = vmatprep.subr.bf16.mxu0 %v1607
    %2272 = vmatpush1.bf16.msra.mxu0 %v1606
    %2273 = vmatprep.subr.bf16.mxu0 %v1615
    %2274 = vmatpush1.bf16.msra.mxu0 %v1614
    %2275 = vmatprep.subr.bf16.mxu0 %v1623
    %2276 = vmatpush1.bf16.msra.mxu0 %v1622
    %2277 = vmatprep.subr.bf16.mxu0 %v1631
    %2278 = vmatpush1.bf16.msra.mxu0 %v1630
    %2279 = vmatprep.subr.bf16.mxu0 %v1639
    %2280 = vmatpush1.bf16.msra.mxu0 %v1638
    %2281 = vmatprep.subr.bf16.mxu0 %v1647
    %2282 = vmatpush1.bf16.msra.mxu0 %v1646
    %2283 = vmatprep.subr.bf16.mxu0 %v1655
    %2284 = vmatpush1.bf16.msra.mxu0 %v1654
    %2285 = vmatprep.subr.bf16.mxu0 %v1663
    %2286 = vmatpush1.bf16.msra.mxu0 %v1662
    %2287 = vmatprep.subr.bf16.mxu0 %v1671
    %2288 = vmatpush1.bf16.msra.mxu0 %v1670
    %2289 = vmatprep.subr.bf16.mxu0 %v1679
    %2290 = vmatpush1.bf16.msra.mxu0 %v1678
    %2291 = vmatprep.subr.bf16.mxu0 %v1687
    %2292 = vmatpush1.bf16.msra.mxu0 %v1686
    %2293 = vmatprep.subr.bf16.mxu0 %v1695
    %2294 = vmatpush1.bf16.msra.mxu0 %v1694
    %2295 = vmatprep.subr.bf16.mxu0 %v1703
    %2296 = vmatpush1.bf16.msra.mxu0 %v1702
    %2297 = vmatprep.subr.bf16.mxu0 %v1711
    %2298 = vmatpush1.bf16.msra.mxu0 %v1710
    %2299 = vmatprep.subr.bf16.mxu0 %v1719
    %2300 = vmatpush1.bf16.msra.mxu0 %v1718
    %2301 = vmatprep.subr.bf16.mxu0 %v1727
    %2302 = vmatpush1.bf16.msra.mxu0 %v1726
    %2303 = vmatprep.mubr.bf16.mxu0 %v405
    %2304 = vmatmul.mubr.bf16.gmra.mrb[0].mxu0 %v404
    %v2305 = vpop.f32.mrb[0].mxu0
    %v2306 = vadd.f32 %v2265, %v2305
    %v2307 = vpop.f32.mrb[0].mxu0
    %v2308 = vadd.f32 %v2267, %v2307
    %v2309 = vpop.f32.mrb[0].mxu0
    %v2310 = vpop.f32.mrb[0].mxu0
    %2311 = vdwg.mxu0
    %v2312 = vmax.f32 %v2060, 0.0
    %v2313 = vmax.f32 %v2062, 0.0
    %v2314 = vmax.f32 %v2142, 0.0
    %v2315 = vmax.f32 %v2144, 0.0
    %v2316 = vmax.f32 %v2224, 0.0
    %v2317 = vmax.f32 %v2226, 0.0
    %v2318 = vmax.f32 %v2306, 0.0
    %v2319 = vmax.f32 %v2308, 0.0
    %v2320 = vpack.c.bf16 %v2312, %v2312
    %v2321 = vpack.c.bf16 %v2313, %v2313
    %v2322 = vpack.c.bf16 %v2314, %v2314
    %v2323 = vpack.c.bf16 %v2315, %v2315
    %v2324 = vpack.c.bf16 %v2316, %v2316
    %v2325 = vpack.c.bf16 %v2317, %v2317
    %v2326 = vpack.c.bf16 %v2318, %v2318
    %v2327 = vpack.c.bf16 %v2319, %v2319
    %v2328 = vld [vmem:[#allocation8] sm:$0xff]
    %v2329 = vld [vmem:[#allocation8 + $0x8] sm:$0xff]
    %v2330 = vld [vmem:[#allocation8 + $0x10] sm:$0xff]
    %v2331 = vld [vmem:[#allocation8 + $0x18] sm:$0xff]
    %v2332 = vld [vmem:[#allocation8 + $0x20] sm:$0xff]
    %v2333 = vld [vmem:[#allocation8 + $0x28] sm:$0xff]
    %v2334 = vld [vmem:[#allocation8 + $0x30] sm:$0xff]
    %v2335 = vld [vmem:[#allocation8 + $0x38] sm:$0xff]
    %v2336 = vld [vmem:[#allocation8 + $0x40] sm:$0xff]
    %v2337 = vld [vmem:[#allocation8 + $0x48] sm:$0xff]
    %v2338 = vld [vmem:[#allocation8 + $0x50] sm:$0xff]
    %v2339 = vld [vmem:[#allocation8 + $0x58] sm:$0xff]
    %v2340 = vld [vmem:[#allocation8 + $0x60] sm:$0xff]
    %v2341 = vld [vmem:[#allocation8 + $0x68] sm:$0xff]
    %v2342 = vld [vmem:[#allocation8 + $0x70] sm:$0xff]
    %v2343 = vld [vmem:[#allocation8 + $0x78] sm:$0xff]
    %v2344 = vld [vmem:[#allocation8 + $0x80] sm:$0xff]
    %v2345 = vld [vmem:[#allocation8 + $0x88] sm:$0xff]
    %v2346 = vld [vmem:[#allocation8 + $0x90] sm:$0xff]
    %v2347 = vld [vmem:[#allocation8 + $0x98] sm:$0xff]
    %v2348 = vld [vmem:[#allocation8 + $0xa0] sm:$0xff]
    %v2349 = vld [vmem:[#allocation8 + $0xa8] sm:$0xff]
    %v2350 = vld [vmem:[#allocation8 + $0xb0] sm:$0xff]
    %v2351 = vld [vmem:[#allocation8 + $0xb8] sm:$0xff]
    %v2352 = vld [vmem:[#allocation8 + $0xc0] sm:$0xff]
    %v2353 = vld [vmem:[#allocation8 + $0xc8] sm:$0xff]
    %v2354 = vld [vmem:[#allocation8 + $0xd0] sm:$0xff]
    %v2355 = vld [vmem:[#allocation8 + $0xd8] sm:$0xff]
    %v2356 = vld [vmem:[#allocation8 + $0xe0] sm:$0xff]
    %v2357 = vld [vmem:[#allocation8 + $0xe8] sm:$0xff]
    %v2358 = vld [vmem:[#allocation8 + $0xf0] sm:$0xff]
    %v2359 = vld [vmem:[#allocation8 + $0xf8] sm:$0xff]
    %v2360 = vld [vmem:[#allocation8 + $0x100] sm:$0xff]
    %v2361 = vld [vmem:[#allocation8 + $0x108] sm:$0xff]
    %v2362 = vld [vmem:[#allocation8 + $0x110] sm:$0xff]
    %v2363 = vld [vmem:[#allocation8 + $0x118] sm:$0xff]
    %v2364 = vld [vmem:[#allocation8 + $0x120] sm:$0xff]
    %v2365 = vld [vmem:[#allocation8 + $0x128] sm:$0xff]
    %v2366 = vld [vmem:[#allocation8 + $0x130] sm:$0xff]
    %v2367 = vld [vmem:[#allocation8 + $0x138] sm:$0xff]
    %v2368 = vld [vmem:[#allocation8 + $0x140] sm:$0xff]
    %v2369 = vld [vmem:[#allocation8 + $0x148] sm:$0xff]
    %v2370 = vld [vmem:[#allocation8 + $0x150] sm:$0xff]
    %v2371 = vld [vmem:[#allocation8 + $0x158] sm:$0xff]
    %v2372 = vld [vmem:[#allocation8 + $0x160] sm:$0xff]
    %v2373 = vld [vmem:[#allocation8 + $0x168] sm:$0xff]
    %v2374 = vld [vmem:[#allocation8 + $0x170] sm:$0xff]
    %v2375 = vld [vmem:[#allocation8 + $0x178] sm:$0xff]
    %v2376 = vld [vmem:[#allocation8 + $0x180] sm:$0xff]
    %v2377 = vld [vmem:[#allocation8 + $0x188] sm:$0xff]
    %v2378 = vld [vmem:[#allocation8 + $0x190] sm:$0xff]
    %v2379 = vld [vmem:[#allocation8 + $0x198] sm:$0xff]
    %v2380 = vld [vmem:[#allocation8 + $0x1a0] sm:$0xff]
    %v2381 = vld [vmem:[#allocation8 + $0x1a8] sm:$0xff]
    %v2382 = vld [vmem:[#allocation8 + $0x1b0] sm:$0xff]
    %v2383 = vld [vmem:[#allocation8 + $0x1b8] sm:$0xff]
    %v2384 = vld [vmem:[#allocation8 + $0x1c0] sm:$0xff]
    %v2385 = vld [vmem:[#allocation8 + $0x1c8] sm:$0xff]
    %v2386 = vld [vmem:[#allocation8 + $0x1d0] sm:$0xff]
    %v2387 = vld [vmem:[#allocation8 + $0x1d8] sm:$0xff]
    %v2388 = vld [vmem:[#allocation8 + $0x1e0] sm:$0xff]
    %v2389 = vld [vmem:[#allocation8 + $0x1e8] sm:$0xff]
    %v2390 = vld [vmem:[#allocation8 + $0x1f0] sm:$0xff]
    %v2391 = vld [vmem:[#allocation8 + $0x1f8] sm:$0xff]
    %v2392 = vld [vmem:[#allocation8 + $0x200] sm:$0xff]
    %v2393 = vld [vmem:[#allocation8 + $0x208] sm:$0xff]
    %v2394 = vld [vmem:[#allocation8 + $0x210] sm:$0xff]
    %v2395 = vld [vmem:[#allocation8 + $0x218] sm:$0xff]
    %v2396 = vld [vmem:[#allocation8 + $0x220] sm:$0xff]
    %v2397 = vld [vmem:[#allocation8 + $0x228] sm:$0xff]
    %v2398 = vld [vmem:[#allocation8 + $0x230] sm:$0xff]
    %v2399 = vld [vmem:[#allocation8 + $0x238] sm:$0xff]
    %v2400 = vld [vmem:[#allocation8 + $0x240] sm:$0xff]
    %v2401 = vld [vmem:[#allocation8 + $0x248] sm:$0xff]
    %v2402 = vld [vmem:[#allocation8 + $0x250] sm:$0xff]
    %v2403 = vld [vmem:[#allocation8 + $0x258] sm:$0xff]
    %v2404 = vld [vmem:[#allocation8 + $0x260] sm:$0xff]
    %v2405 = vld [vmem:[#allocation8 + $0x268] sm:$0xff]
    %v2406 = vld [vmem:[#allocation8 + $0x270] sm:$0xff]
    %v2407 = vld [vmem:[#allocation8 + $0x278] sm:$0xff]
    %v2408 = vld [vmem:[#allocation8 + $0x280] sm:$0xff]
    %v2409 = vld [vmem:[#allocation8 + $0x288] sm:$0xff]
    %v2410 = vld [vmem:[#allocation8 + $0x290] sm:$0xff]
    %v2411 = vld [vmem:[#allocation8 + $0x298] sm:$0xff]
    %v2412 = vld [vmem:[#allocation8 + $0x2a0] sm:$0xff]
    %v2413 = vld [vmem:[#allocation8 + $0x2a8] sm:$0xff]
    %v2414 = vld [vmem:[#allocation8 + $0x2b0] sm:$0xff]
    %v2415 = vld [vmem:[#allocation8 + $0x2b8] sm:$0xff]
    %v2416 = vld [vmem:[#allocation8 + $0x2c0] sm:$0xff]
    %v2417 = vld [vmem:[#allocation8 + $0x2c8] sm:$0xff]
    %v2418 = vld [vmem:[#allocation8 + $0x2d0] sm:$0xff]
    %v2419 = vld [vmem:[#allocation8 + $0x2d8] sm:$0xff]
    %v2420 = vld [vmem:[#allocation8 + $0x2e0] sm:$0xff]
    %v2421 = vld [vmem:[#allocation8 + $0x2e8] sm:$0xff]
    %v2422 = vld [vmem:[#allocation8 + $0x2f0] sm:$0xff]
    %v2423 = vld [vmem:[#allocation8 + $0x2f8] sm:$0xff]
    %v2424 = vld [vmem:[#allocation8 + $0x300] sm:$0xff]
    %v2425 = vld [vmem:[#allocation8 + $0x308] sm:$0xff]
    %v2426 = vld [vmem:[#allocation8 + $0x310] sm:$0xff]
    %v2427 = vld [vmem:[#allocation8 + $0x318] sm:$0xff]
    %v2428 = vld [vmem:[#allocation8 + $0x320] sm:$0xff]
    %v2429 = vld [vmem:[#allocation8 + $0x328] sm:$0xff]
    %v2430 = vld [vmem:[#allocation8 + $0x330] sm:$0xff]
    %v2431 = vld [vmem:[#allocation8 + $0x338] sm:$0xff]
    %v2432 = vld [vmem:[#allocation8 + $0x340] sm:$0xff]
    %v2433 = vld [vmem:[#allocation8 + $0x348] sm:$0xff]
    %v2434 = vld [vmem:[#allocation8 + $0x350] sm:$0xff]
    %v2435 = vld [vmem:[#allocation8 + $0x358] sm:$0xff]
    %v2436 = vld [vmem:[#allocation8 + $0x360] sm:$0xff]
    %v2437 = vld [vmem:[#allocation8 + $0x368] sm:$0xff]
    %v2438 = vld [vmem:[#allocation8 + $0x370] sm:$0xff]
    %v2439 = vld [vmem:[#allocation8 + $0x378] sm:$0xff]
    %v2440 = vld [vmem:[#allocation8 + $0x380] sm:$0xff]
    %v2441 = vld [vmem:[#allocation8 + $0x388] sm:$0xff]
    %v2442 = vld [vmem:[#allocation8 + $0x390] sm:$0xff]
    %v2443 = vld [vmem:[#allocation8 + $0x398] sm:$0xff]
    %v2444 = vld [vmem:[#allocation8 + $0x3a0] sm:$0xff]
    %v2445 = vld [vmem:[#allocation8 + $0x3a8] sm:$0xff]
    %v2446 = vld [vmem:[#allocation8 + $0x3b0] sm:$0xff]
    %v2447 = vld [vmem:[#allocation8 + $0x3b8] sm:$0xff]
    %v2448 = vld [vmem:[#allocation8 + $0x3c0] sm:$0xff]
    %v2449 = vld [vmem:[#allocation8 + $0x3c8] sm:$0xff]
    %v2450 = vld [vmem:[#allocation8 + $0x3d0] sm:$0xff]
    %v2451 = vld [vmem:[#allocation8 + $0x3d8] sm:$0xff]
    %v2452 = vld [vmem:[#allocation8 + $0x3e0] sm:$0xff]
    %v2453 = vld [vmem:[#allocation8 + $0x3e8] sm:$0xff]
    %v2454 = vld [vmem:[#allocation8 + $0x3f0] sm:$0xff]
    %v2455 = vld [vmem:[#allocation8 + $0x3f8] sm:$0xff]
    %v2456 = vld [vmem:[#allocation8 + $0x400] sm:$0xff]
    %v2457 = vld [vmem:[#allocation8 + $0x408] sm:$0xff]
    %v2458 = vld [vmem:[#allocation8 + $0x410] sm:$0xff]
    %v2459 = vld [vmem:[#allocation8 + $0x418] sm:$0xff]
    %v2460 = vld [vmem:[#allocation8 + $0x420] sm:$0xff]
    %v2461 = vld [vmem:[#allocation8 + $0x428] sm:$0xff]
    %v2462 = vld [vmem:[#allocation8 + $0x430] sm:$0xff]
    %v2463 = vld [vmem:[#allocation8 + $0x438] sm:$0xff]
    %v2464 = vld [vmem:[#allocation8 + $0x440] sm:$0xff]
    %v2465 = vld [vmem:[#allocation8 + $0x448] sm:$0xff]
    %v2466 = vld [vmem:[#allocation8 + $0x450] sm:$0xff]
    %v2467 = vld [vmem:[#allocation8 + $0x458] sm:$0xff]
    %v2468 = vld [vmem:[#allocation8 + $0x460] sm:$0xff]
    %v2469 = vld [vmem:[#allocation8 + $0x468] sm:$0xff]
    %v2470 = vld [vmem:[#allocation8 + $0x470] sm:$0xff]
    %v2471 = vld [vmem:[#allocation8 + $0x478] sm:$0xff]
    %v2472 = vld [vmem:[#allocation8 + $0x480] sm:$0xff]
    %v2473 = vld [vmem:[#allocation8 + $0x488] sm:$0xff]
    %v2474 = vld [vmem:[#allocation8 + $0x490] sm:$0xff]
    %v2475 = vld [vmem:[#allocation8 + $0x498] sm:$0xff]
    %v2476 = vld [vmem:[#allocation8 + $0x4a0] sm:$0xff]
    %v2477 = vld [vmem:[#allocation8 + $0x4a8] sm:$0xff]
    %v2478 = vld [vmem:[#allocation8 + $0x4b0] sm:$0xff]
    %v2479 = vld [vmem:[#allocation8 + $0x4b8] sm:$0xff]
    %v2480 = vld [vmem:[#allocation8 + $0x4c0] sm:$0xff]
    %v2481 = vld [vmem:[#allocation8 + $0x4c8] sm:$0xff]
    %v2482 = vld [vmem:[#allocation8 + $0x4d0] sm:$0xff]
    %v2483 = vld [vmem:[#allocation8 + $0x4d8] sm:$0xff]
    %v2484 = vld [vmem:[#allocation8 + $0x4e0] sm:$0xff]
    %v2485 = vld [vmem:[#allocation8 + $0x4e8] sm:$0xff]
    %v2486 = vld [vmem:[#allocation8 + $0x4f0] sm:$0xff]
    %v2487 = vld [vmem:[#allocation8 + $0x4f8] sm:$0xff]
    %v2488 = vld [vmem:[#allocation8 + $0x500] sm:$0xff]
    %v2489 = vld [vmem:[#allocation8 + $0x508] sm:$0xff]
    %v2490 = vld [vmem:[#allocation8 + $0x510] sm:$0xff]
    %v2491 = vld [vmem:[#allocation8 + $0x518] sm:$0xff]
    %v2492 = vld [vmem:[#allocation8 + $0x520] sm:$0xff]
    %v2493 = vld [vmem:[#allocation8 + $0x528] sm:$0xff]
    %v2494 = vld [vmem:[#allocation8 + $0x530] sm:$0xff]
    %v2495 = vld [vmem:[#allocation8 + $0x538] sm:$0xff]
    %v2496 = vld [vmem:[#allocation8 + $0x540] sm:$0xff]
    %v2497 = vld [vmem:[#allocation8 + $0x548] sm:$0xff]
    %v2498 = vld [vmem:[#allocation8 + $0x550] sm:$0xff]
    %v2499 = vld [vmem:[#allocation8 + $0x558] sm:$0xff]
    %v2500 = vld [vmem:[#allocation8 + $0x560] sm:$0xff]
    %v2501 = vld [vmem:[#allocation8 + $0x568] sm:$0xff]
    %v2502 = vld [vmem:[#allocation8 + $0x570] sm:$0xff]
    %v2503 = vld [vmem:[#allocation8 + $0x578] sm:$0xff]
    %v2504 = vld [vmem:[#allocation8 + $0x580] sm:$0xff]
    %v2505 = vld [vmem:[#allocation8 + $0x588] sm:$0xff]
    %v2506 = vld [vmem:[#allocation8 + $0x590] sm:$0xff]
    %v2507 = vld [vmem:[#allocation8 + $0x598] sm:$0xff]
    %v2508 = vld [vmem:[#allocation8 + $0x5a0] sm:$0xff]
    %v2509 = vld [vmem:[#allocation8 + $0x5a8] sm:$0xff]
    %v2510 = vld [vmem:[#allocation8 + $0x5b0] sm:$0xff]
    %v2511 = vld [vmem:[#allocation8 + $0x5b8] sm:$0xff]
    %v2512 = vld [vmem:[#allocation8 + $0x5c0] sm:$0xff]
    %v2513 = vld [vmem:[#allocation8 + $0x5c8] sm:$0xff]
    %v2514 = vld [vmem:[#allocation8 + $0x5d0] sm:$0xff]
    %v2515 = vld [vmem:[#allocation8 + $0x5d8] sm:$0xff]
    %v2516 = vld [vmem:[#allocation8 + $0x5e0] sm:$0xff]
    %v2517 = vld [vmem:[#allocation8 + $0x5e8] sm:$0xff]
    %v2518 = vld [vmem:[#allocation8 + $0x5f0] sm:$0xff]
    %v2519 = vld [vmem:[#allocation8 + $0x5f8] sm:$0xff]
    %v2520 = vld [vmem:[#allocation8 + $0x600] sm:$0xff]
    %v2521 = vld [vmem:[#allocation8 + $0x608] sm:$0xff]
    %v2522 = vld [vmem:[#allocation8 + $0x610] sm:$0xff]
    %v2523 = vld [vmem:[#allocation8 + $0x618] sm:$0xff]
    %v2524 = vld [vmem:[#allocation8 + $0x620] sm:$0xff]
    %v2525 = vld [vmem:[#allocation8 + $0x628] sm:$0xff]
    %v2526 = vld [vmem:[#allocation8 + $0x630] sm:$0xff]
    %v2527 = vld [vmem:[#allocation8 + $0x638] sm:$0xff]
    %v2528 = vld [vmem:[#allocation8 + $0x640] sm:$0xff]
    %v2529 = vld [vmem:[#allocation8 + $0x648] sm:$0xff]
    %v2530 = vld [vmem:[#allocation8 + $0x650] sm:$0xff]
    %v2531 = vld [vmem:[#allocation8 + $0x658] sm:$0xff]
    %v2532 = vld [vmem:[#allocation8 + $0x660] sm:$0xff]
    %v2533 = vld [vmem:[#allocation8 + $0x668] sm:$0xff]
    %v2534 = vld [vmem:[#allocation8 + $0x670] sm:$0xff]
    %v2535 = vld [vmem:[#allocation8 + $0x678] sm:$0xff]
    %v2536 = vld [vmem:[#allocation8 + $0x680] sm:$0xff]
    %v2537 = vld [vmem:[#allocation8 + $0x688] sm:$0xff]
    %v2538 = vld [vmem:[#allocation8 + $0x690] sm:$0xff]
    %v2539 = vld [vmem:[#allocation8 + $0x698] sm:$0xff]
    %v2540 = vld [vmem:[#allocation8 + $0x6a0] sm:$0xff]
    %v2541 = vld [vmem:[#allocation8 + $0x6a8] sm:$0xff]
    %v2542 = vld [vmem:[#allocation8 + $0x6b0] sm:$0xff]
    %v2543 = vld [vmem:[#allocation8 + $0x6b8] sm:$0xff]
    %v2544 = vld [vmem:[#allocation8 + $0x6c0] sm:$0xff]
    %v2545 = vld [vmem:[#allocation8 + $0x6c8] sm:$0xff]
    %v2546 = vld [vmem:[#allocation8 + $0x6d0] sm:$0xff]
    %v2547 = vld [vmem:[#allocation8 + $0x6d8] sm:$0xff]
    %v2548 = vld [vmem:[#allocation8 + $0x6e0] sm:$0xff]
    %v2549 = vld [vmem:[#allocation8 + $0x6e8] sm:$0xff]
    %v2550 = vld [vmem:[#allocation8 + $0x6f0] sm:$0xff]
    %v2551 = vld [vmem:[#allocation8 + $0x6f8] sm:$0xff]
    %v2552 = vld [vmem:[#allocation8 + $0x700] sm:$0xff]
    %v2553 = vld [vmem:[#allocation8 + $0x708] sm:$0xff]
    %v2554 = vld [vmem:[#allocation8 + $0x710] sm:$0xff]
    %v2555 = vld [vmem:[#allocation8 + $0x718] sm:$0xff]
    %v2556 = vld [vmem:[#allocation8 + $0x720] sm:$0xff]
    %v2557 = vld [vmem:[#allocation8 + $0x728] sm:$0xff]
    %v2558 = vld [vmem:[#allocation8 + $0x730] sm:$0xff]
    %v2559 = vld [vmem:[#allocation8 + $0x738] sm:$0xff]
    %v2560 = vld [vmem:[#allocation8 + $0x740] sm:$0xff]
    %v2561 = vld [vmem:[#allocation8 + $0x748] sm:$0xff]
    %v2562 = vld [vmem:[#allocation8 + $0x750] sm:$0xff]
    %v2563 = vld [vmem:[#allocation8 + $0x758] sm:$0xff]
    %v2564 = vld [vmem:[#allocation8 + $0x760] sm:$0xff]
    %v2565 = vld [vmem:[#allocation8 + $0x768] sm:$0xff]
    %v2566 = vld [vmem:[#allocation8 + $0x770] sm:$0xff]
    %v2567 = vld [vmem:[#allocation8 + $0x778] sm:$0xff]
    %v2568 = vld [vmem:[#allocation8 + $0x780] sm:$0xff]
    %v2569 = vld [vmem:[#allocation8 + $0x788] sm:$0xff]
    %v2570 = vld [vmem:[#allocation8 + $0x790] sm:$0xff]
    %v2571 = vld [vmem:[#allocation8 + $0x798] sm:$0xff]
    %v2572 = vld [vmem:[#allocation8 + $0x7a0] sm:$0xff]
    %v2573 = vld [vmem:[#allocation8 + $0x7a8] sm:$0xff]
    %v2574 = vld [vmem:[#allocation8 + $0x7b0] sm:$0xff]
    %v2575 = vld [vmem:[#allocation8 + $0x7b8] sm:$0xff]
    %v2576 = vld [vmem:[#allocation8 + $0x7c0] sm:$0xff]
    %v2577 = vld [vmem:[#allocation8 + $0x7c8] sm:$0xff]
    %v2578 = vld [vmem:[#allocation8 + $0x7d0] sm:$0xff]
    %v2579 = vld [vmem:[#allocation8 + $0x7d8] sm:$0xff]
    %v2580 = vld [vmem:[#allocation8 + $0x7e0] sm:$0xff]
    %v2581 = vld [vmem:[#allocation8 + $0x7e8] sm:$0xff]
    %v2582 = vld [vmem:[#allocation8 + $0x7f0] sm:$0xff]
    %v2583 = vld [vmem:[#allocation8 + $0x7f8] sm:$0xff]
    %v2584 = vld [vmem:[%s6] sm:$0xf]
    %v2586 = vlaneseq
    %v2587 = vshrl.u32 %v2586, 7
    %v2588 = vsub.s32 0, %v2587
    %v2589 = vrot.slane %v2584, %v2588
    %v2590 = vlaneseq
    %v2591 = vshrl.u32 %v2590, 7
    %v2592 = vsub.s32 1, %v2591
    %v2593 = vrot.slane %v2584, %v2592
    %v2594 = vlaneseq
    %v2595 = vshrl.u32 %v2594, 7
    %v2596 = vsub.s32 2, %v2595
    %v2597 = vrot.slane %v2584, %v2596
    %v2598 = vlaneseq
    %v2599 = vshrl.u32 %v2598, 7
    %v2600 = vsub.s32 3, %v2599
    %v2601 = vrot.slane %v2584, %v2600
    %v2862 = vunpack.c.l.b16 %v2328
    %v2863 = vunpack.c.h.b16 %v2328
    %v2864 = vunpack.c.l.b16 %v2329
    %v2865 = vunpack.c.h.b16 %v2329
    %v2866 = vunpack.c.l.b16 %v2330
    %v2867 = vunpack.c.h.b16 %v2330
    %v2868 = vunpack.c.l.b16 %v2331
    %v2869 = vunpack.c.h.b16 %v2331
    %v2870 = vunpack.c.l.b16 %v2332
    %v2871 = vunpack.c.h.b16 %v2332
    %v2872 = vunpack.c.l.b16 %v2333
    %v2873 = vunpack.c.h.b16 %v2333
    %v2874 = vunpack.c.l.b16 %v2334
    %v2875 = vunpack.c.h.b16 %v2334
    %v2876 = vunpack.c.l.b16 %v2335
    %v2877 = vunpack.c.h.b16 %v2335
    %v2878 = vunpack.c.l.b16 %v2336
    %v2879 = vunpack.c.h.b16 %v2336
    %v2880 = vunpack.c.l.b16 %v2337
    %v2881 = vunpack.c.h.b16 %v2337
    %v2882 = vunpack.c.l.b16 %v2338
    %v2883 = vunpack.c.h.b16 %v2338
    %v2884 = vunpack.c.l.b16 %v2339
    %v2885 = vunpack.c.h.b16 %v2339
    %v2886 = vunpack.c.l.b16 %v2340
    %v2887 = vunpack.c.h.b16 %v2340
    %v2888 = vunpack.c.l.b16 %v2341
    %v2889 = vunpack.c.h.b16 %v2341
    %v2890 = vunpack.c.l.b16 %v2342
    %v2891 = vunpack.c.h.b16 %v2342
    %v2892 = vunpack.c.l.b16 %v2343
    %v2893 = vunpack.c.h.b16 %v2343
    %v2894 = vunpack.c.l.b16 %v2344
    %v2895 = vunpack.c.h.b16 %v2344
    %v2896 = vunpack.c.l.b16 %v2345
    %v2897 = vunpack.c.h.b16 %v2345
    %v2898 = vunpack.c.l.b16 %v2346
    %v2899 = vunpack.c.h.b16 %v2346
    %v2900 = vunpack.c.l.b16 %v2347
    %v2901 = vunpack.c.h.b16 %v2347
    %v2902 = vunpack.c.l.b16 %v2348
    %v2903 = vunpack.c.h.b16 %v2348
    %v2904 = vunpack.c.l.b16 %v2349
    %v2905 = vunpack.c.h.b16 %v2349
    %v2906 = vunpack.c.l.b16 %v2350
    %v2907 = vunpack.c.h.b16 %v2350
    %v2908 = vunpack.c.l.b16 %v2351
    %v2909 = vunpack.c.h.b16 %v2351
    %v2910 = vunpack.c.l.b16 %v2352
    %v2911 = vunpack.c.h.b16 %v2352
    %v2912 = vunpack.c.l.b16 %v2353
    %v2913 = vunpack.c.h.b16 %v2353
    %v2914 = vunpack.c.l.b16 %v2354
    %v2915 = vunpack.c.h.b16 %v2354
    %v2916 = vunpack.c.l.b16 %v2355
    %v2917 = vunpack.c.h.b16 %v2355
    %v2918 = vunpack.c.l.b16 %v2356
    %v2919 = vunpack.c.h.b16 %v2356
    %v2920 = vunpack.c.l.b16 %v2357
    %v2921 = vunpack.c.h.b16 %v2357
    %v2922 = vunpack.c.l.b16 %v2358
    %v2923 = vunpack.c.h.b16 %v2358
    %v2924 = vunpack.c.l.b16 %v2359
    %v2925 = vunpack.c.h.b16 %v2359
    %v2926 = vunpack.c.l.b16 %v2360
    %v2927 = vunpack.c.h.b16 %v2360
    %v2928 = vunpack.c.l.b16 %v2361
    %v2929 = vunpack.c.h.b16 %v2361
    %v2930 = vunpack.c.l.b16 %v2362
    %v2931 = vunpack.c.h.b16 %v2362
    %v2932 = vunpack.c.l.b16 %v2363
    %v2933 = vunpack.c.h.b16 %v2363
    %v2934 = vunpack.c.l.b16 %v2364
    %v2935 = vunpack.c.h.b16 %v2364
    %v2936 = vunpack.c.l.b16 %v2365
    %v2937 = vunpack.c.h.b16 %v2365
    %v2938 = vunpack.c.l.b16 %v2366
    %v2939 = vunpack.c.h.b16 %v2366
    %v2940 = vunpack.c.l.b16 %v2367
    %v2941 = vunpack.c.h.b16 %v2367
    %v2942 = vunpack.c.l.b16 %v2368
    %v2943 = vunpack.c.h.b16 %v2368
    %v2944 = vunpack.c.l.b16 %v2369
    %v2945 = vunpack.c.h.b16 %v2369
    %v2946 = vunpack.c.l.b16 %v2370
    %v2947 = vunpack.c.h.b16 %v2370
    %v2948 = vunpack.c.l.b16 %v2371
    %v2949 = vunpack.c.h.b16 %v2371
    %v2950 = vunpack.c.l.b16 %v2372
    %v2951 = vunpack.c.h.b16 %v2372
    %v2952 = vunpack.c.l.b16 %v2373
    %v2953 = vunpack.c.h.b16 %v2373
    %v2954 = vunpack.c.l.b16 %v2374
    %v2955 = vunpack.c.h.b16 %v2374
    %v2956 = vunpack.c.l.b16 %v2375
    %v2957 = vunpack.c.h.b16 %v2375
    %v2958 = vunpack.c.l.b16 %v2376
    %v2959 = vunpack.c.h.b16 %v2376
    %v2960 = vunpack.c.l.b16 %v2377
    %v2961 = vunpack.c.h.b16 %v2377
    %v2962 = vunpack.c.l.b16 %v2378
    %v2963 = vunpack.c.h.b16 %v2378
    %v2964 = vunpack.c.l.b16 %v2379
    %v2965 = vunpack.c.h.b16 %v2379
    %v2966 = vunpack.c.l.b16 %v2380
    %v2967 = vunpack.c.h.b16 %v2380
    %v2968 = vunpack.c.l.b16 %v2381
    %v2969 = vunpack.c.h.b16 %v2381
    %v2970 = vunpack.c.l.b16 %v2382
    %v2971 = vunpack.c.h.b16 %v2382
    %v2972 = vunpack.c.l.b16 %v2383
    %v2973 = vunpack.c.h.b16 %v2383
    %v2974 = vunpack.c.l.b16 %v2384
    %v2975 = vunpack.c.h.b16 %v2384
    %v2976 = vunpack.c.l.b16 %v2385
    %v2977 = vunpack.c.h.b16 %v2385
    %v2978 = vunpack.c.l.b16 %v2386
    %v2979 = vunpack.c.h.b16 %v2386
    %v2980 = vunpack.c.l.b16 %v2387
    %v2981 = vunpack.c.h.b16 %v2387
    %v2982 = vunpack.c.l.b16 %v2388
    %v2983 = vunpack.c.h.b16 %v2388
    %v2984 = vunpack.c.l.b16 %v2389
    %v2985 = vunpack.c.h.b16 %v2389
    %v2986 = vunpack.c.l.b16 %v2390
    %v2987 = vunpack.c.h.b16 %v2390
    %v2988 = vunpack.c.l.b16 %v2391
    %v2989 = vunpack.c.h.b16 %v2391
    %v2990 = vunpack.c.l.b16 %v2392
    %v2991 = vunpack.c.h.b16 %v2392
    %v2992 = vunpack.c.l.b16 %v2393
    %v2993 = vunpack.c.h.b16 %v2393
    %v2994 = vunpack.c.l.b16 %v2394
    %v2995 = vunpack.c.h.b16 %v2394
    %v2996 = vunpack.c.l.b16 %v2395
    %v2997 = vunpack.c.h.b16 %v2395
    %v2998 = vunpack.c.l.b16 %v2396
    %v2999 = vunpack.c.h.b16 %v2396
    %v3000 = vunpack.c.l.b16 %v2397
    %v3001 = vunpack.c.h.b16 %v2397
    %v3002 = vunpack.c.l.b16 %v2398
    %v3003 = vunpack.c.h.b16 %v2398
    %v3004 = vunpack.c.l.b16 %v2399
    %v3005 = vunpack.c.h.b16 %v2399
    %v3006 = vunpack.c.l.b16 %v2400
    %v3007 = vunpack.c.h.b16 %v2400
    %v3008 = vunpack.c.l.b16 %v2401
    %v3009 = vunpack.c.h.b16 %v2401
    %v3010 = vunpack.c.l.b16 %v2402
    %v3011 = vunpack.c.h.b16 %v2402
    %v3012 = vunpack.c.l.b16 %v2403
    %v3013 = vunpack.c.h.b16 %v2403
    %v3014 = vunpack.c.l.b16 %v2404
    %v3015 = vunpack.c.h.b16 %v2404
    %v3016 = vunpack.c.l.b16 %v2405
    %v3017 = vunpack.c.h.b16 %v2405
    %v3018 = vunpack.c.l.b16 %v2406
    %v3019 = vunpack.c.h.b16 %v2406
    %v3020 = vunpack.c.l.b16 %v2407
    %v3021 = vunpack.c.h.b16 %v2407
    %v3022 = vunpack.c.l.b16 %v2408
    %v3023 = vunpack.c.h.b16 %v2408
    %v3024 = vunpack.c.l.b16 %v2409
    %v3025 = vunpack.c.h.b16 %v2409
    %v3026 = vunpack.c.l.b16 %v2410
    %v3027 = vunpack.c.h.b16 %v2410
    %v3028 = vunpack.c.l.b16 %v2411
    %v3029 = vunpack.c.h.b16 %v2411
    %v3030 = vunpack.c.l.b16 %v2412
    %v3031 = vunpack.c.h.b16 %v2412
    %v3032 = vunpack.c.l.b16 %v2413
    %v3033 = vunpack.c.h.b16 %v2413
    %v3034 = vunpack.c.l.b16 %v2414
    %v3035 = vunpack.c.h.b16 %v2414
    %v3036 = vunpack.c.l.b16 %v2415
    %v3037 = vunpack.c.h.b16 %v2415
    %v3038 = vunpack.c.l.b16 %v2416
    %v3039 = vunpack.c.h.b16 %v2416
    %v3040 = vunpack.c.l.b16 %v2417
    %v3041 = vunpack.c.h.b16 %v2417
    %v3042 = vunpack.c.l.b16 %v2418
    %v3043 = vunpack.c.h.b16 %v2418
    %v3044 = vunpack.c.l.b16 %v2419
    %v3045 = vunpack.c.h.b16 %v2419
    %v3046 = vunpack.c.l.b16 %v2420
    %v3047 = vunpack.c.h.b16 %v2420
    %v3048 = vunpack.c.l.b16 %v2421
    %v3049 = vunpack.c.h.b16 %v2421
    %v3050 = vunpack.c.l.b16 %v2422
    %v3051 = vunpack.c.h.b16 %v2422
    %v3052 = vunpack.c.l.b16 %v2423
    %v3053 = vunpack.c.h.b16 %v2423
    %v3054 = vunpack.c.l.b16 %v2424
    %v3055 = vunpack.c.h.b16 %v2424
    %v3056 = vunpack.c.l.b16 %v2425
    %v3057 = vunpack.c.h.b16 %v2425
    %v3058 = vunpack.c.l.b16 %v2426
    %v3059 = vunpack.c.h.b16 %v2426
    %v3060 = vunpack.c.l.b16 %v2427
    %v3061 = vunpack.c.h.b16 %v2427
    %v3062 = vunpack.c.l.b16 %v2428
    %v3063 = vunpack.c.h.b16 %v2428
    %v3064 = vunpack.c.l.b16 %v2429
    %v3065 = vunpack.c.h.b16 %v2429
    %v3066 = vunpack.c.l.b16 %v2430
    %v3067 = vunpack.c.h.b16 %v2430
    %v3068 = vunpack.c.l.b16 %v2431
    %v3069 = vunpack.c.h.b16 %v2431
    %v3070 = vunpack.c.l.b16 %v2432
    %v3071 = vunpack.c.h.b16 %v2432
    %v3072 = vunpack.c.l.b16 %v2433
    %v3073 = vunpack.c.h.b16 %v2433
    %v3074 = vunpack.c.l.b16 %v2434
    %v3075 = vunpack.c.h.b16 %v2434
    %v3076 = vunpack.c.l.b16 %v2435
    %v3077 = vunpack.c.h.b16 %v2435
    %v3078 = vunpack.c.l.b16 %v2436
    %v3079 = vunpack.c.h.b16 %v2436
    %v3080 = vunpack.c.l.b16 %v2437
    %v3081 = vunpack.c.h.b16 %v2437
    %v3082 = vunpack.c.l.b16 %v2438
    %v3083 = vunpack.c.h.b16 %v2438
    %v3084 = vunpack.c.l.b16 %v2439
    %v3085 = vunpack.c.h.b16 %v2439
    %v3086 = vunpack.c.l.b16 %v2440
    %v3087 = vunpack.c.h.b16 %v2440
    %v3088 = vunpack.c.l.b16 %v2441
    %v3089 = vunpack.c.h.b16 %v2441
    %v3090 = vunpack.c.l.b16 %v2442
    %v3091 = vunpack.c.h.b16 %v2442
    %v3092 = vunpack.c.l.b16 %v2443
    %v3093 = vunpack.c.h.b16 %v2443
    %v3094 = vunpack.c.l.b16 %v2444
    %v3095 = vunpack.c.h.b16 %v2444
    %v3096 = vunpack.c.l.b16 %v2445
    %v3097 = vunpack.c.h.b16 %v2445
    %v3098 = vunpack.c.l.b16 %v2446
    %v3099 = vunpack.c.h.b16 %v2446
    %v3100 = vunpack.c.l.b16 %v2447
    %v3101 = vunpack.c.h.b16 %v2447
    %v3102 = vunpack.c.l.b16 %v2448
    %v3103 = vunpack.c.h.b16 %v2448
    %v3104 = vunpack.c.l.b16 %v2449
    %v3105 = vunpack.c.h.b16 %v2449
    %v3106 = vunpack.c.l.b16 %v2450
    %v3107 = vunpack.c.h.b16 %v2450
    %v3108 = vunpack.c.l.b16 %v2451
    %v3109 = vunpack.c.h.b16 %v2451
    %v3110 = vunpack.c.l.b16 %v2452
    %v3111 = vunpack.c.h.b16 %v2452
    %v3112 = vunpack.c.l.b16 %v2453
    %v3113 = vunpack.c.h.b16 %v2453
    %v3114 = vunpack.c.l.b16 %v2454
    %v3115 = vunpack.c.h.b16 %v2454
    %v3116 = vunpack.c.l.b16 %v2455
    %v3117 = vunpack.c.h.b16 %v2455
    %v3118 = vunpack.c.l.b16 %v2456
    %v3119 = vunpack.c.h.b16 %v2456
    %v3120 = vunpack.c.l.b16 %v2457
    %v3121 = vunpack.c.h.b16 %v2457
    %v3122 = vunpack.c.l.b16 %v2458
    %v3123 = vunpack.c.h.b16 %v2458
    %v3124 = vunpack.c.l.b16 %v2459
    %v3125 = vunpack.c.h.b16 %v2459
    %v3126 = vunpack.c.l.b16 %v2460
    %v3127 = vunpack.c.h.b16 %v2460
    %v3128 = vunpack.c.l.b16 %v2461
    %v3129 = vunpack.c.h.b16 %v2461
    %v3130 = vunpack.c.l.b16 %v2462
    %v3131 = vunpack.c.h.b16 %v2462
    %v3132 = vunpack.c.l.b16 %v2463
    %v3133 = vunpack.c.h.b16 %v2463
    %v3134 = vunpack.c.l.b16 %v2464
    %v3135 = vunpack.c.h.b16 %v2464
    %v3136 = vunpack.c.l.b16 %v2465
    %v3137 = vunpack.c.h.b16 %v2465
    %v3138 = vunpack.c.l.b16 %v2466
    %v3139 = vunpack.c.h.b16 %v2466
    %v3140 = vunpack.c.l.b16 %v2467
    %v3141 = vunpack.c.h.b16 %v2467
    %v3142 = vunpack.c.l.b16 %v2468
    %v3143 = vunpack.c.h.b16 %v2468
    %v3144 = vunpack.c.l.b16 %v2469
    %v3145 = vunpack.c.h.b16 %v2469
    %v3146 = vunpack.c.l.b16 %v2470
    %v3147 = vunpack.c.h.b16 %v2470
    %v3148 = vunpack.c.l.b16 %v2471
    %v3149 = vunpack.c.h.b16 %v2471
    %v3150 = vunpack.c.l.b16 %v2472
    %v3151 = vunpack.c.h.b16 %v2472
    %v3152 = vunpack.c.l.b16 %v2473
    %v3153 = vunpack.c.h.b16 %v2473
    %v3154 = vunpack.c.l.b16 %v2474
    %v3155 = vunpack.c.h.b16 %v2474
    %v3156 = vunpack.c.l.b16 %v2475
    %v3157 = vunpack.c.h.b16 %v2475
    %v3158 = vunpack.c.l.b16 %v2476
    %v3159 = vunpack.c.h.b16 %v2476
    %v3160 = vunpack.c.l.b16 %v2477
    %v3161 = vunpack.c.h.b16 %v2477
    %v3162 = vunpack.c.l.b16 %v2478
    %v3163 = vunpack.c.h.b16 %v2478
    %v3164 = vunpack.c.l.b16 %v2479
    %v3165 = vunpack.c.h.b16 %v2479
    %v3166 = vunpack.c.l.b16 %v2480
    %v3167 = vunpack.c.h.b16 %v2480
    %v3168 = vunpack.c.l.b16 %v2481
    %v3169 = vunpack.c.h.b16 %v2481
    %v3170 = vunpack.c.l.b16 %v2482
    %v3171 = vunpack.c.h.b16 %v2482
    %v3172 = vunpack.c.l.b16 %v2483
    %v3173 = vunpack.c.h.b16 %v2483
    %v3174 = vunpack.c.l.b16 %v2484
    %v3175 = vunpack.c.h.b16 %v2484
    %v3176 = vunpack.c.l.b16 %v2485
    %v3177 = vunpack.c.h.b16 %v2485
    %v3178 = vunpack.c.l.b16 %v2486
    %v3179 = vunpack.c.h.b16 %v2486
    %v3180 = vunpack.c.l.b16 %v2487
    %v3181 = vunpack.c.h.b16 %v2487
    %v3182 = vunpack.c.l.b16 %v2488
    %v3183 = vunpack.c.h.b16 %v2488
    %v3184 = vunpack.c.l.b16 %v2489
    %v3185 = vunpack.c.h.b16 %v2489
    %v3186 = vunpack.c.l.b16 %v2490
    %v3187 = vunpack.c.h.b16 %v2490
    %v3188 = vunpack.c.l.b16 %v2491
    %v3189 = vunpack.c.h.b16 %v2491
    %v3190 = vunpack.c.l.b16 %v2492
    %v3191 = vunpack.c.h.b16 %v2492
    %v3192 = vunpack.c.l.b16 %v2493
    %v3193 = vunpack.c.h.b16 %v2493
    %v3194 = vunpack.c.l.b16 %v2494
    %v3195 = vunpack.c.h.b16 %v2494
    %v3196 = vunpack.c.l.b16 %v2495
    %v3197 = vunpack.c.h.b16 %v2495
    %v3198 = vunpack.c.l.b16 %v2496
    %v3199 = vunpack.c.h.b16 %v2496
    %v3200 = vunpack.c.l.b16 %v2497
    %v3201 = vunpack.c.h.b16 %v2497
    %v3202 = vunpack.c.l.b16 %v2498
    %v3203 = vunpack.c.h.b16 %v2498
    %v3204 = vunpack.c.l.b16 %v2499
    %v3205 = vunpack.c.h.b16 %v2499
    %v3206 = vunpack.c.l.b16 %v2500
    %v3207 = vunpack.c.h.b16 %v2500
    %v3208 = vunpack.c.l.b16 %v2501
    %v3209 = vunpack.c.h.b16 %v2501
    %v3210 = vunpack.c.l.b16 %v2502
    %v3211 = vunpack.c.h.b16 %v2502
    %v3212 = vunpack.c.l.b16 %v2503
    %v3213 = vunpack.c.h.b16 %v2503
    %v3214 = vunpack.c.l.b16 %v2504
    %v3215 = vunpack.c.h.b16 %v2504
    %v3216 = vunpack.c.l.b16 %v2505
    %v3217 = vunpack.c.h.b16 %v2505
    %v3218 = vunpack.c.l.b16 %v2506
    %v3219 = vunpack.c.h.b16 %v2506
    %v3220 = vunpack.c.l.b16 %v2507
    %v3221 = vunpack.c.h.b16 %v2507
    %v3222 = vunpack.c.l.b16 %v2508
    %v3223 = vunpack.c.h.b16 %v2508
    %v3224 = vunpack.c.l.b16 %v2509
    %v3225 = vunpack.c.h.b16 %v2509
    %v3226 = vunpack.c.l.b16 %v2510
    %v3227 = vunpack.c.h.b16 %v2510
    %v3228 = vunpack.c.l.b16 %v2511
    %v3229 = vunpack.c.h.b16 %v2511
    %v3230 = vunpack.c.l.b16 %v2512
    %v3231 = vunpack.c.h.b16 %v2512
    %v3232 = vunpack.c.l.b16 %v2513
    %v3233 = vunpack.c.h.b16 %v2513
    %v3234 = vunpack.c.l.b16 %v2514
    %v3235 = vunpack.c.h.b16 %v2514
    %v3236 = vunpack.c.l.b16 %v2515
    %v3237 = vunpack.c.h.b16 %v2515
    %v3238 = vunpack.c.l.b16 %v2516
    %v3239 = vunpack.c.h.b16 %v2516
    %v3240 = vunpack.c.l.b16 %v2517
    %v3241 = vunpack.c.h.b16 %v2517
    %v3242 = vunpack.c.l.b16 %v2518
    %v3243 = vunpack.c.h.b16 %v2518
    %v3244 = vunpack.c.l.b16 %v2519
    %v3245 = vunpack.c.h.b16 %v2519
    %v3246 = vunpack.c.l.b16 %v2520
    %v3247 = vunpack.c.h.b16 %v2520
    %v3248 = vunpack.c.l.b16 %v2521
    %v3249 = vunpack.c.h.b16 %v2521
    %v3250 = vunpack.c.l.b16 %v2522
    %v3251 = vunpack.c.h.b16 %v2522
    %v3252 = vunpack.c.l.b16 %v2523
    %v3253 = vunpack.c.h.b16 %v2523
    %v3254 = vunpack.c.l.b16 %v2524
    %v3255 = vunpack.c.h.b16 %v2524
    %v3256 = vunpack.c.l.b16 %v2525
    %v3257 = vunpack.c.h.b16 %v2525
    %v3258 = vunpack.c.l.b16 %v2526
    %v3259 = vunpack.c.h.b16 %v2526
    %v3260 = vunpack.c.l.b16 %v2527
    %v3261 = vunpack.c.h.b16 %v2527
    %v3262 = vunpack.c.l.b16 %v2528
    %v3263 = vunpack.c.h.b16 %v2528
    %v3264 = vunpack.c.l.b16 %v2529
    %v3265 = vunpack.c.h.b16 %v2529
    %v3266 = vunpack.c.l.b16 %v2530
    %v3267 = vunpack.c.h.b16 %v2530
    %v3268 = vunpack.c.l.b16 %v2531
    %v3269 = vunpack.c.h.b16 %v2531
    %v3270 = vunpack.c.l.b16 %v2532
    %v3271 = vunpack.c.h.b16 %v2532
    %v3272 = vunpack.c.l.b16 %v2533
    %v3273 = vunpack.c.h.b16 %v2533
    %v3274 = vunpack.c.l.b16 %v2534
    %v3275 = vunpack.c.h.b16 %v2534
    %v3276 = vunpack.c.l.b16 %v2535
    %v3277 = vunpack.c.h.b16 %v2535
    %v3278 = vunpack.c.l.b16 %v2536
    %v3279 = vunpack.c.h.b16 %v2536
    %v3280 = vunpack.c.l.b16 %v2537
    %v3281 = vunpack.c.h.b16 %v2537
    %v3282 = vunpack.c.l.b16 %v2538
    %v3283 = vunpack.c.h.b16 %v2538
    %v3284 = vunpack.c.l.b16 %v2539
    %v3285 = vunpack.c.h.b16 %v2539
    %v3286 = vunpack.c.l.b16 %v2540
    %v3287 = vunpack.c.h.b16 %v2540
    %v3288 = vunpack.c.l.b16 %v2541
    %v3289 = vunpack.c.h.b16 %v2541
    %v3290 = vunpack.c.l.b16 %v2542
    %v3291 = vunpack.c.h.b16 %v2542
    %v3292 = vunpack.c.l.b16 %v2543
    %v3293 = vunpack.c.h.b16 %v2543
    %v3294 = vunpack.c.l.b16 %v2544
    %v3295 = vunpack.c.h.b16 %v2544
    %v3296 = vunpack.c.l.b16 %v2545
    %v3297 = vunpack.c.h.b16 %v2545
    %v3298 = vunpack.c.l.b16 %v2546
    %v3299 = vunpack.c.h.b16 %v2546
    %v3300 = vunpack.c.l.b16 %v2547
    %v3301 = vunpack.c.h.b16 %v2547
    %v3302 = vunpack.c.l.b16 %v2548
    %v3303 = vunpack.c.h.b16 %v2548
    %v3304 = vunpack.c.l.b16 %v2549
    %v3305 = vunpack.c.h.b16 %v2549
    %v3306 = vunpack.c.l.b16 %v2550
    %v3307 = vunpack.c.h.b16 %v2550
    %v3308 = vunpack.c.l.b16 %v2551
    %v3309 = vunpack.c.h.b16 %v2551
    %v3310 = vunpack.c.l.b16 %v2552
    %v3311 = vunpack.c.h.b16 %v2552
    %v3312 = vunpack.c.l.b16 %v2553
    %v3313 = vunpack.c.h.b16 %v2553
    %v3314 = vunpack.c.l.b16 %v2554
    %v3315 = vunpack.c.h.b16 %v2554
    %v3316 = vunpack.c.l.b16 %v2555
    %v3317 = vunpack.c.h.b16 %v2555
    %v3318 = vunpack.c.l.b16 %v2556
    %v3319 = vunpack.c.h.b16 %v2556
    %v3320 = vunpack.c.l.b16 %v2557
    %v3321 = vunpack.c.h.b16 %v2557
    %v3322 = vunpack.c.l.b16 %v2558
    %v3323 = vunpack.c.h.b16 %v2558
    %v3324 = vunpack.c.l.b16 %v2559
    %v3325 = vunpack.c.h.b16 %v2559
    %v3326 = vunpack.c.l.b16 %v2560
    %v3327 = vunpack.c.h.b16 %v2560
    %v3328 = vunpack.c.l.b16 %v2561
    %v3329 = vunpack.c.h.b16 %v2561
    %v3330 = vunpack.c.l.b16 %v2562
    %v3331 = vunpack.c.h.b16 %v2562
    %v3332 = vunpack.c.l.b16 %v2563
    %v3333 = vunpack.c.h.b16 %v2563
    %v3334 = vunpack.c.l.b16 %v2564
    %v3335 = vunpack.c.h.b16 %v2564
    %v3336 = vunpack.c.l.b16 %v2565
    %v3337 = vunpack.c.h.b16 %v2565
    %v3338 = vunpack.c.l.b16 %v2566
    %v3339 = vunpack.c.h.b16 %v2566
    %v3340 = vunpack.c.l.b16 %v2567
    %v3341 = vunpack.c.h.b16 %v2567
    %v3342 = vunpack.c.l.b16 %v2568
    %v3343 = vunpack.c.h.b16 %v2568
    %v3344 = vunpack.c.l.b16 %v2569
    %v3345 = vunpack.c.h.b16 %v2569
    %v3346 = vunpack.c.l.b16 %v2570
    %v3347 = vunpack.c.h.b16 %v2570
    %v3348 = vunpack.c.l.b16 %v2571
    %v3349 = vunpack.c.h.b16 %v2571
    %v3350 = vunpack.c.l.b16 %v2572
    %v3351 = vunpack.c.h.b16 %v2572
    %v3352 = vunpack.c.l.b16 %v2573
    %v3353 = vunpack.c.h.b16 %v2573
    %v3354 = vunpack.c.l.b16 %v2574
    %v3355 = vunpack.c.h.b16 %v2574
    %v3356 = vunpack.c.l.b16 %v2575
    %v3357 = vunpack.c.h.b16 %v2575
    %v3358 = vunpack.c.l.b16 %v2576
    %v3359 = vunpack.c.h.b16 %v2576
    %v3360 = vunpack.c.l.b16 %v2577
    %v3361 = vunpack.c.h.b16 %v2577
    %v3362 = vunpack.c.l.b16 %v2578
    %v3363 = vunpack.c.h.b16 %v2578
    %v3364 = vunpack.c.l.b16 %v2579
    %v3365 = vunpack.c.h.b16 %v2579
    %v3366 = vunpack.c.l.b16 %v2580
    %v3367 = vunpack.c.h.b16 %v2580
    %v3368 = vunpack.c.l.b16 %v2581
    %v3369 = vunpack.c.h.b16 %v2581
    %v3370 = vunpack.c.l.b16 %v2582
    %v3371 = vunpack.c.h.b16 %v2582
    %v3372 = vunpack.c.l.b16 %v2583
    %v3373 = vunpack.c.h.b16 %v2583
    %v3374 = vpack.c.b16 %v2866, %v2862
    %v3375 = vpack.c.b16 %v2867, %v2863
    %v3376 = vpack.c.b16 %v2868, %v2864
    %v3377 = vpack.c.b16 %v2869, %v2865
    %v3378 = vpack.c.b16 %v2874, %v2870
    %v3379 = vpack.c.b16 %v2875, %v2871
    %v3380 = vpack.c.b16 %v2876, %v2872
    %v3381 = vpack.c.b16 %v2877, %v2873
    %v3382 = vpack.c.b16 %v2882, %v2878
    %v3383 = vpack.c.b16 %v2883, %v2879
    %v3384 = vpack.c.b16 %v2884, %v2880
    %v3385 = vpack.c.b16 %v2885, %v2881
    %v3386 = vpack.c.b16 %v2890, %v2886
    %v3387 = vpack.c.b16 %v2891, %v2887
    %v3388 = vpack.c.b16 %v2892, %v2888
    %v3389 = vpack.c.b16 %v2893, %v2889
    %v3390 = vpack.c.b16 %v2898, %v2894
    %v3391 = vpack.c.b16 %v2899, %v2895
    %v3392 = vpack.c.b16 %v2900, %v2896
    %v3393 = vpack.c.b16 %v2901, %v2897
    %v3394 = vpack.c.b16 %v2906, %v2902
    %v3395 = vpack.c.b16 %v2907, %v2903
    %v3396 = vpack.c.b16 %v2908, %v2904
    %v3397 = vpack.c.b16 %v2909, %v2905
    %v3398 = vpack.c.b16 %v2914, %v2910
    %v3399 = vpack.c.b16 %v2915, %v2911
    %v3400 = vpack.c.b16 %v2916, %v2912
    %v3401 = vpack.c.b16 %v2917, %v2913
    %v3402 = vpack.c.b16 %v2922, %v2918
    %v3403 = vpack.c.b16 %v2923, %v2919
    %v3404 = vpack.c.b16 %v2924, %v2920
    %v3405 = vpack.c.b16 %v2925, %v2921
    %v3406 = vpack.c.b16 %v2930, %v2926
    %v3407 = vpack.c.b16 %v2931, %v2927
    %v3408 = vpack.c.b16 %v2932, %v2928
    %v3409 = vpack.c.b16 %v2933, %v2929
    %v3410 = vpack.c.b16 %v2938, %v2934
    %v3411 = vpack.c.b16 %v2939, %v2935
    %v3412 = vpack.c.b16 %v2940, %v2936
    %v3413 = vpack.c.b16 %v2941, %v2937
    %v3414 = vpack.c.b16 %v2946, %v2942
    %v3415 = vpack.c.b16 %v2947, %v2943
    %v3416 = vpack.c.b16 %v2948, %v2944
    %v3417 = vpack.c.b16 %v2949, %v2945
    %v3418 = vpack.c.b16 %v2954, %v2950
    %v3419 = vpack.c.b16 %v2955, %v2951
    %v3420 = vpack.c.b16 %v2956, %v2952
    %v3421 = vpack.c.b16 %v2957, %v2953
    %v3422 = vpack.c.b16 %v2962, %v2958
    %v3423 = vpack.c.b16 %v2963, %v2959
    %v3424 = vpack.c.b16 %v2964, %v2960
    %v3425 = vpack.c.b16 %v2965, %v2961
    %v3426 = vpack.c.b16 %v2970, %v2966
    %v3427 = vpack.c.b16 %v2971, %v2967
    %v3428 = vpack.c.b16 %v2972, %v2968
    %v3429 = vpack.c.b16 %v2973, %v2969
    %v3430 = vpack.c.b16 %v2978, %v2974
    %v3431 = vpack.c.b16 %v2979, %v2975
    %v3432 = vpack.c.b16 %v2980, %v2976
    %v3433 = vpack.c.b16 %v2981, %v2977
    %v3434 = vpack.c.b16 %v2986, %v2982
    %v3435 = vpack.c.b16 %v2987, %v2983
    %v3436 = vpack.c.b16 %v2988, %v2984
    %v3437 = vpack.c.b16 %v2989, %v2985
    %v3438 = vpack.c.b16 %v2994, %v2990
    %v3439 = vpack.c.b16 %v2995, %v2991
    %v3440 = vpack.c.b16 %v2996, %v2992
    %v3441 = vpack.c.b16 %v2997, %v2993
    %v3442 = vpack.c.b16 %v3002, %v2998
    %v3443 = vpack.c.b16 %v3003, %v2999
    %v3444 = vpack.c.b16 %v3004, %v3000
    %v3445 = vpack.c.b16 %v3005, %v3001
    %v3446 = vpack.c.b16 %v3010, %v3006
    %v3447 = vpack.c.b16 %v3011, %v3007
    %v3448 = vpack.c.b16 %v3012, %v3008
    %v3449 = vpack.c.b16 %v3013, %v3009
    %v3450 = vpack.c.b16 %v3018, %v3014
    %v3451 = vpack.c.b16 %v3019, %v3015
    %v3452 = vpack.c.b16 %v3020, %v3016
    %v3453 = vpack.c.b16 %v3021, %v3017
    %v3454 = vpack.c.b16 %v3026, %v3022
    %v3455 = vpack.c.b16 %v3027, %v3023
    %v3456 = vpack.c.b16 %v3028, %v3024
    %v3457 = vpack.c.b16 %v3029, %v3025
    %v3458 = vpack.c.b16 %v3034, %v3030
    %v3459 = vpack.c.b16 %v3035, %v3031
    %v3460 = vpack.c.b16 %v3036, %v3032
    %v3461 = vpack.c.b16 %v3037, %v3033
    %v3462 = vpack.c.b16 %v3042, %v3038
    %v3463 = vpack.c.b16 %v3043, %v3039
    %v3464 = vpack.c.b16 %v3044, %v3040
    %v3465 = vpack.c.b16 %v3045, %v3041
    %v3466 = vpack.c.b16 %v3050, %v3046
    %v3467 = vpack.c.b16 %v3051, %v3047
    %v3468 = vpack.c.b16 %v3052, %v3048
    %v3469 = vpack.c.b16 %v3053, %v3049
    %v3470 = vpack.c.b16 %v3058, %v3054
    %v3471 = vpack.c.b16 %v3059, %v3055
    %v3472 = vpack.c.b16 %v3060, %v3056
    %v3473 = vpack.c.b16 %v3061, %v3057
    %v3474 = vpack.c.b16 %v3066, %v3062
    %v3475 = vpack.c.b16 %v3067, %v3063
    %v3476 = vpack.c.b16 %v3068, %v3064
    %v3477 = vpack.c.b16 %v3069, %v3065
    %v3478 = vpack.c.b16 %v3074, %v3070
    %v3479 = vpack.c.b16 %v3075, %v3071
    %v3480 = vpack.c.b16 %v3076, %v3072
    %v3481 = vpack.c.b16 %v3077, %v3073
    %v3482 = vpack.c.b16 %v3082, %v3078
    %v3483 = vpack.c.b16 %v3083, %v3079
    %v3484 = vpack.c.b16 %v3084, %v3080
    %v3485 = vpack.c.b16 %v3085, %v3081
    %v3486 = vpack.c.b16 %v3090, %v3086
    %v3487 = vpack.c.b16 %v3091, %v3087
    %v3488 = vpack.c.b16 %v3092, %v3088
    %v3489 = vpack.c.b16 %v3093, %v3089
    %v3490 = vpack.c.b16 %v3098, %v3094
    %v3491 = vpack.c.b16 %v3099, %v3095
    %v3492 = vpack.c.b16 %v3100, %v3096
    %v3493 = vpack.c.b16 %v3101, %v3097
    %v3494 = vpack.c.b16 %v3106, %v3102
    %v3495 = vpack.c.b16 %v3107, %v3103
    %v3496 = vpack.c.b16 %v3108, %v3104
    %v3497 = vpack.c.b16 %v3109, %v3105
    %v3498 = vpack.c.b16 %v3114, %v3110
    %v3499 = vpack.c.b16 %v3115, %v3111
    %v3500 = vpack.c.b16 %v3116, %v3112
    %v3501 = vpack.c.b16 %v3117, %v3113
    %v3502 = vpack.c.b16 %v3122, %v3118
    %v3503 = vpack.c.b16 %v3123, %v3119
    %v3504 = vpack.c.b16 %v3124, %v3120
    %v3505 = vpack.c.b16 %v3125, %v3121
    %v3506 = vpack.c.b16 %v3130, %v3126
    %v3507 = vpack.c.b16 %v3131, %v3127
    %v3508 = vpack.c.b16 %v3132, %v3128
    %v3509 = vpack.c.b16 %v3133, %v3129
    %v3510 = vpack.c.b16 %v3138, %v3134
    %v3511 = vpack.c.b16 %v3139, %v3135
    %v3512 = vpack.c.b16 %v3140, %v3136
    %v3513 = vpack.c.b16 %v3141, %v3137
    %v3514 = vpack.c.b16 %v3146, %v3142
    %v3515 = vpack.c.b16 %v3147, %v3143
    %v3516 = vpack.c.b16 %v3148, %v3144
    %v3517 = vpack.c.b16 %v3149, %v3145
    %v3518 = vpack.c.b16 %v3154, %v3150
    %v3519 = vpack.c.b16 %v3155, %v3151
    %v3520 = vpack.c.b16 %v3156, %v3152
    %v3521 = vpack.c.b16 %v3157, %v3153
    %v3522 = vpack.c.b16 %v3162, %v3158
    %v3523 = vpack.c.b16 %v3163, %v3159
    %v3524 = vpack.c.b16 %v3164, %v3160
    %v3525 = vpack.c.b16 %v3165, %v3161
    %v3526 = vpack.c.b16 %v3170, %v3166
    %v3527 = vpack.c.b16 %v3171, %v3167
    %v3528 = vpack.c.b16 %v3172, %v3168
    %v3529 = vpack.c.b16 %v3173, %v3169
    %v3530 = vpack.c.b16 %v3178, %v3174
    %v3531 = vpack.c.b16 %v3179, %v3175
    %v3532 = vpack.c.b16 %v3180, %v3176
    %v3533 = vpack.c.b16 %v3181, %v3177
    %v3534 = vpack.c.b16 %v3186, %v3182
    %v3535 = vpack.c.b16 %v3187, %v3183
    %v3536 = vpack.c.b16 %v3188, %v3184
    %v3537 = vpack.c.b16 %v3189, %v3185
    %v3538 = vpack.c.b16 %v3194, %v3190
    %v3539 = vpack.c.b16 %v3195, %v3191
    %v3540 = vpack.c.b16 %v3196, %v3192
    %v3541 = vpack.c.b16 %v3197, %v3193
    %v3542 = vpack.c.b16 %v3202, %v3198
    %v3543 = vpack.c.b16 %v3203, %v3199
    %v3544 = vpack.c.b16 %v3204, %v3200
    %v3545 = vpack.c.b16 %v3205, %v3201
    %v3546 = vpack.c.b16 %v3210, %v3206
    %v3547 = vpack.c.b16 %v3211, %v3207
    %v3548 = vpack.c.b16 %v3212, %v3208
    %v3549 = vpack.c.b16 %v3213, %v3209
    %v3550 = vpack.c.b16 %v3218, %v3214
    %v3551 = vpack.c.b16 %v3219, %v3215
    %v3552 = vpack.c.b16 %v3220, %v3216
    %v3553 = vpack.c.b16 %v3221, %v3217
    %v3554 = vpack.c.b16 %v3226, %v3222
    %v3555 = vpack.c.b16 %v3227, %v3223
    %v3556 = vpack.c.b16 %v3228, %v3224
    %v3557 = vpack.c.b16 %v3229, %v3225
    %v3558 = vpack.c.b16 %v3234, %v3230
    %v3559 = vpack.c.b16 %v3235, %v3231
    %v3560 = vpack.c.b16 %v3236, %v3232
    %v3561 = vpack.c.b16 %v3237, %v3233
    %v3562 = vpack.c.b16 %v3242, %v3238
    %v3563 = vpack.c.b16 %v3243, %v3239
    %v3564 = vpack.c.b16 %v3244, %v3240
    %v3565 = vpack.c.b16 %v3245, %v3241
    %v3566 = vpack.c.b16 %v3250, %v3246
    %v3567 = vpack.c.b16 %v3251, %v3247
    %v3568 = vpack.c.b16 %v3252, %v3248
    %v3569 = vpack.c.b16 %v3253, %v3249
    %v3570 = vpack.c.b16 %v3258, %v3254
    %v3571 = vpack.c.b16 %v3259, %v3255
    %v3572 = vpack.c.b16 %v3260, %v3256
    %v3573 = vpack.c.b16 %v3261, %v3257
    %v3574 = vpack.c.b16 %v3266, %v3262
    %v3575 = vpack.c.b16 %v3267, %v3263
    %v3576 = vpack.c.b16 %v3268, %v3264
    %v3577 = vpack.c.b16 %v3269, %v3265
    %v3578 = vpack.c.b16 %v3274, %v3270
    %v3579 = vpack.c.b16 %v3275, %v3271
    %v3580 = vpack.c.b16 %v3276, %v3272
    %v3581 = vpack.c.b16 %v3277, %v3273
    %v3582 = vpack.c.b16 %v3282, %v3278
    %v3583 = vpack.c.b16 %v3283, %v3279
    %v3584 = vpack.c.b16 %v3284, %v3280
    %v3585 = vpack.c.b16 %v3285, %v3281
    %v3586 = vpack.c.b16 %v3290, %v3286
    %v3587 = vpack.c.b16 %v3291, %v3287
    %v3588 = vpack.c.b16 %v3292, %v3288
    %v3589 = vpack.c.b16 %v3293, %v3289
    %v3590 = vpack.c.b16 %v3298, %v3294
    %v3591 = vpack.c.b16 %v3299, %v3295
    %v3592 = vpack.c.b16 %v3300, %v3296
    %v3593 = vpack.c.b16 %v3301, %v3297
    %v3594 = vpack.c.b16 %v3306, %v3302
    %v3595 = vpack.c.b16 %v3307, %v3303
    %v3596 = vpack.c.b16 %v3308, %v3304
    %v3597 = vpack.c.b16 %v3309, %v3305
    %v3598 = vpack.c.b16 %v3314, %v3310
    %v3599 = vpack.c.b16 %v3315, %v3311
    %v3600 = vpack.c.b16 %v3316, %v3312
    %v3601 = vpack.c.b16 %v3317, %v3313
    %v3602 = vpack.c.b16 %v3322, %v3318
    %v3603 = vpack.c.b16 %v3323, %v3319
    %v3604 = vpack.c.b16 %v3324, %v3320
    %v3605 = vpack.c.b16 %v3325, %v3321
    %v3606 = vpack.c.b16 %v3330, %v3326
    %v3607 = vpack.c.b16 %v3331, %v3327
    %v3608 = vpack.c.b16 %v3332, %v3328
    %v3609 = vpack.c.b16 %v3333, %v3329
    %v3610 = vpack.c.b16 %v3338, %v3334
    %v3611 = vpack.c.b16 %v3339, %v3335
    %v3612 = vpack.c.b16 %v3340, %v3336
    %v3613 = vpack.c.b16 %v3341, %v3337
    %v3614 = vpack.c.b16 %v3346, %v3342
    %v3615 = vpack.c.b16 %v3347, %v3343
    %v3616 = vpack.c.b16 %v3348, %v3344
    %v3617 = vpack.c.b16 %v3349, %v3345
    %v3618 = vpack.c.b16 %v3354, %v3350
    %v3619 = vpack.c.b16 %v3355, %v3351
    %v3620 = vpack.c.b16 %v3356, %v3352
    %v3621 = vpack.c.b16 %v3357, %v3353
    %v3622 = vpack.c.b16 %v3362, %v3358
    %v3623 = vpack.c.b16 %v3363, %v3359
    %v3624 = vpack.c.b16 %v3364, %v3360
    %v3625 = vpack.c.b16 %v3365, %v3361
    %v3626 = vpack.c.b16 %v3370, %v3366
    %v3627 = vpack.c.b16 %v3371, %v3367
    %v3628 = vpack.c.b16 %v3372, %v3368
    %v3629 = vpack.c.b16 %v3373, %v3369
    %3886 = vmatprep.subr.bf16.mxu0 %v3375
    %3887 = vmatpush1.bf16.msra.mxu0 %v3374
    %3888 = vmatprep.subr.bf16.mxu0 %v3379
    %3889 = vmatpush1.bf16.msra.mxu0 %v3378
    %3890 = vmatprep.subr.bf16.mxu0 %v3383
    %3891 = vmatpush1.bf16.msra.mxu0 %v3382
    %3892 = vmatprep.subr.bf16.mxu0 %v3387
    %3893 = vmatpush1.bf16.msra.mxu0 %v3386
    %3894 = vmatprep.subr.bf16.mxu0 %v3391
    %3895 = vmatpush1.bf16.msra.mxu0 %v3390
    %3896 = vmatprep.subr.bf16.mxu0 %v3395
    %3897 = vmatpush1.bf16.msra.mxu0 %v3394
    %3898 = vmatprep.subr.bf16.mxu0 %v3399
    %3899 = vmatpush1.bf16.msra.mxu0 %v3398
    %3900 = vmatprep.subr.bf16.mxu0 %v3403
    %3901 = vmatpush1.bf16.msra.mxu0 %v3402
    %3902 = vmatprep.subr.bf16.mxu0 %v3407
    %3903 = vmatpush1.bf16.msra.mxu0 %v3406
    %3904 = vmatprep.subr.bf16.mxu0 %v3411
    %3905 = vmatpush1.bf16.msra.mxu0 %v3410
    %3906 = vmatprep.subr.bf16.mxu0 %v3415
    %3907 = vmatpush1.bf16.msra.mxu0 %v3414
    %3908 = vmatprep.subr.bf16.mxu0 %v3419
    %3909 = vmatpush1.bf16.msra.mxu0 %v3418
    %3910 = vmatprep.subr.bf16.mxu0 %v3423
    %3911 = vmatpush1.bf16.msra.mxu0 %v3422
    %3912 = vmatprep.subr.bf16.mxu0 %v3427
    %3913 = vmatpush1.bf16.msra.mxu0 %v3426
    %3914 = vmatprep.subr.bf16.mxu0 %v3431
    %3915 = vmatpush1.bf16.msra.mxu0 %v3430
    %3916 = vmatprep.subr.bf16.mxu0 %v3435
    %3917 = vmatpush1.bf16.msra.mxu0 %v3434
    %3918 = vmatprep.mubr.bf16.mxu0 %v2321
    %3919 = vmatmul.mubr.bf16.gmra.mrb[0].mxu0 %v2320
    %v3920 = vpop.f32.mrb[0].mxu0
    %v3921 = vadd.f32 %v2589, %v3920
    %v3922 = vpop.f32.mrb[0].mxu0
    %v3923 = vadd.f32 %v2593, %v3922
    %v3924 = vpop.f32.mrb[0].mxu0
    %v3925 = vpop.f32.mrb[0].mxu0
    %3926 = vdwg.mxu0
    %3927 = vmatprep.subr.bf16.mxu0 %v3439
    %3928 = vmatpush1.bf16.msra.mxu0 %v3438
    %3929 = vmatprep.subr.bf16.mxu0 %v3443
    %3930 = vmatpush1.bf16.msra.mxu0 %v3442
    %3931 = vmatprep.subr.bf16.mxu0 %v3447
    %3932 = vmatpush1.bf16.msra.mxu0 %v3446
    %3933 = vmatprep.subr.bf16.mxu0 %v3451
    %3934 = vmatpush1.bf16.msra.mxu0 %v3450
    %3935 = vmatprep.subr.bf16.mxu0 %v3455
    %3936 = vmatpush1.bf16.msra.mxu0 %v3454
    %3937 = vmatprep.subr.bf16.mxu0 %v3459
    %3938 = vmatpush1.bf16.msra.mxu0 %v3458
    %3939 = vmatprep.subr.bf16.mxu0 %v3463
    %3940 = vmatpush1.bf16.msra.mxu0 %v3462
    %3941 = vmatprep.subr.bf16.mxu0 %v3467
    %3942 = vmatpush1.bf16.msra.mxu0 %v3466
    %3943 = vmatprep.subr.bf16.mxu0 %v3471
    %3944 = vmatpush1.bf16.msra.mxu0 %v3470
    %3945 = vmatprep.subr.bf16.mxu0 %v3475
    %3946 = vmatpush1.bf16.msra.mxu0 %v3474
    %3947 = vmatprep.subr.bf16.mxu0 %v3479
    %3948 = vmatpush1.bf16.msra.mxu0 %v3478
    %3949 = vmatprep.subr.bf16.mxu0 %v3483
    %3950 = vmatpush1.bf16.msra.mxu0 %v3482
    %3951 = vmatprep.subr.bf16.mxu0 %v3487
    %3952 = vmatpush1.bf16.msra.mxu0 %v3486
    %3953 = vmatprep.subr.bf16.mxu0 %v3491
    %3954 = vmatpush1.bf16.msra.mxu0 %v3490
    %3955 = vmatprep.subr.bf16.mxu0 %v3495
    %3956 = vmatpush1.bf16.msra.mxu0 %v3494
    %3957 = vmatprep.subr.bf16.mxu0 %v3499
    %3958 = vmatpush1.bf16.msra.mxu0 %v3498
    %3959 = vmatprep.mubr.bf16.mxu0 %v2323
    %3960 = vmatmul.mubr.bf16.gmra.mrb[0].mxu0 %v2322
    %v3961 = vpop.f32.mrb[0].mxu0
    %v3962 = vadd.f32 %v3921, %v3961
    %v3963 = vpop.f32.mrb[0].mxu0
    %v3964 = vadd.f32 %v3923, %v3963
    %v3965 = vpop.f32.mrb[0].mxu0
    %v3966 = vpop.f32.mrb[0].mxu0
    %3967 = vdwg.mxu0
    %3968 = vmatprep.subr.bf16.mxu0 %v3503
    %3969 = vmatpush1.bf16.msra.mxu0 %v3502
    %3970 = vmatprep.subr.bf16.mxu0 %v3507
    %3971 = vmatpush1.bf16.msra.mxu0 %v3506
    %3972 = vmatprep.subr.bf16.mxu0 %v3511
    %3973 = vmatpush1.bf16.msra.mxu0 %v3510
    %3974 = vmatprep.subr.bf16.mxu0 %v3515
    %3975 = vmatpush1.bf16.msra.mxu0 %v3514
    %3976 = vmatprep.subr.bf16.mxu0 %v3519
    %3977 = vmatpush1.bf16.msra.mxu0 %v3518
    %3978 = vmatprep.subr.bf16.mxu0 %v3523
    %3979 = vmatpush1.bf16.msra.mxu0 %v3522
    %3980 = vmatprep.subr.bf16.mxu0 %v3527
    %3981 = vmatpush1.bf16.msra.mxu0 %v3526
    %3982 = vmatprep.subr.bf16.mxu0 %v3531
    %3983 = vmatpush1.bf16.msra.mxu0 %v3530
    %3984 = vmatprep.subr.bf16.mxu0 %v3535
    %3985 = vmatpush1.bf16.msra.mxu0 %v3534
    %3986 = vmatprep.subr.bf16.mxu0 %v3539
    %3987 = vmatpush1.bf16.msra.mxu0 %v3538
    %3988 = vmatprep.subr.bf16.mxu0 %v3543
    %3989 = vmatpush1.bf16.msra.mxu0 %v3542
    %3990 = vmatprep.subr.bf16.mxu0 %v3547
    %3991 = vmatpush1.bf16.msra.mxu0 %v3546
    %3992 = vmatprep.subr.bf16.mxu0 %v3551
    %3993 = vmatpush1.bf16.msra.mxu0 %v3550
    %3994 = vmatprep.subr.bf16.mxu0 %v3555
    %3995 = vmatpush1.bf16.msra.mxu0 %v3554
    %3996 = vmatprep.subr.bf16.mxu0 %v3559
    %3997 = vmatpush1.bf16.msra.mxu0 %v3558
    %3998 = vmatprep.subr.bf16.mxu0 %v3563
    %3999 = vmatpush1.bf16.msra.mxu0 %v3562
    %4000 = vmatprep.mubr.bf16.mxu0 %v2325
    %4001 = vmatmul.mubr.bf16.gmra.mrb[0].mxu0 %v2324
    %v4002 = vpop.f32.mrb[0].mxu0
    %v4003 = vadd.f32 %v3962, %v4002
    %v4004 = vpop.f32.mrb[0].mxu0
    %v4005 = vadd.f32 %v3964, %v4004
    %v4006 = vpop.f32.mrb[0].mxu0
    %v4007 = vpop.f32.mrb[0].mxu0
    %4008 = vdwg.mxu0
    %4009 = vmatprep.subr.bf16.mxu0 %v3567
    %4010 = vmatpush1.bf16.msra.mxu0 %v3566
    %4011 = vmatprep.subr.bf16.mxu0 %v3571
    %4012 = vmatpush1.bf16.msra.mxu0 %v3570
    %4013 = vmatprep.subr.bf16.mxu0 %v3575
    %4014 = vmatpush1.bf16.msra.mxu0 %v3574
    %4015 = vmatprep.subr.bf16.mxu0 %v3579
    %4016 = vmatpush1.bf16.msra.mxu0 %v3578
    %4017 = vmatprep.subr.bf16.mxu0 %v3583
    %4018 = vmatpush1.bf16.msra.mxu0 %v3582
    %4019 = vmatprep.subr.bf16.mxu0 %v3587
    %4020 = vmatpush1.bf16.msra.mxu0 %v3586
    %4021 = vmatprep.subr.bf16.mxu0 %v3591
    %4022 = vmatpush1.bf16.msra.mxu0 %v3590
    %4023 = vmatprep.subr.bf16.mxu0 %v3595
    %4024 = vmatpush1.bf16.msra.mxu0 %v3594
    %4025 = vmatprep.subr.bf16.mxu0 %v3599
    %4026 = vmatpush1.bf16.msra.mxu0 %v3598
    %4027 = vmatprep.subr.bf16.mxu0 %v3603
    %4028 = vmatpush1.bf16.msra.mxu0 %v3602
    %4029 = vmatprep.subr.bf16.mxu0 %v3607
    %4030 = vmatpush1.bf16.msra.mxu0 %v3606
    %4031 = vmatprep.subr.bf16.mxu0 %v3611
    %4032 = vmatpush1.bf16.msra.mxu0 %v3610
    %4033 = vmatprep.subr.bf16.mxu0 %v3615
    %4034 = vmatpush1.bf16.msra.mxu0 %v3614
    %4035 = vmatprep.subr.bf16.mxu0 %v3619
    %4036 = vmatpush1.bf16.msra.mxu0 %v3618
    %4037 = vmatprep.subr.bf16.mxu0 %v3623
    %4038 = vmatpush1.bf16.msra.mxu0 %v3622
    %4039 = vmatprep.subr.bf16.mxu0 %v3627
    %4040 = vmatpush1.bf16.msra.mxu0 %v3626
    %4041 = vmatprep.mubr.bf16.mxu0 %v2327
    %4042 = vmatmul.mubr.bf16.gmra.mrb[0].mxu0 %v2326
    %v4043 = vpop.f32.mrb[0].mxu0
    %v4044 = vadd.f32 %v4003, %v4043
    %v4045 = vpop.f32.mrb[0].mxu0
    %v4046 = vadd.f32 %v4005, %v4045
    %v4047 = vpop.f32.mrb[0].mxu0
    %v4048 = vpop.f32.mrb[0].mxu0
    %4049 = vdwg.mxu0
    %4050 = vmatprep.subr.bf16.mxu0 %v3377
    %4051 = vmatpush1.bf16.msra.mxu0 %v3376
    %4052 = vmatprep.subr.bf16.mxu0 %v3381
    %4053 = vmatpush1.bf16.msra.mxu0 %v3380
    %4054 = vmatprep.subr.bf16.mxu0 %v3385
    %4055 = vmatpush1.bf16.msra.mxu0 %v3384
    %4056 = vmatprep.subr.bf16.mxu0 %v3389
    %4057 = vmatpush1.bf16.msra.mxu0 %v3388
    %4058 = vmatprep.subr.bf16.mxu0 %v3393
    %4059 = vmatpush1.bf16.msra.mxu0 %v3392
    %4060 = vmatprep.subr.bf16.mxu0 %v3397
    %4061 = vmatpush1.bf16.msra.mxu0 %v3396
    %4062 = vmatprep.subr.bf16.mxu0 %v3401
    %4063 = vmatpush1.bf16.msra.mxu0 %v3400
    %4064 = vmatprep.subr.bf16.mxu0 %v3405
    %4065 = vmatpush1.bf16.msra.mxu0 %v3404
    %4066 = vmatprep.subr.bf16.mxu0 %v3409
    %4067 = vmatpush1.bf16.msra.mxu0 %v3408
    %4068 = vmatprep.subr.bf16.mxu0 %v3413
    %4069 = vmatpush1.bf16.msra.mxu0 %v3412
    %4070 = vmatprep.subr.bf16.mxu0 %v3417
    %4071 = vmatpush1.bf16.msra.mxu0 %v3416
    %4072 = vmatprep.subr.bf16.mxu0 %v3421
    %4073 = vmatpush1.bf16.msra.mxu0 %v3420
    %4074 = vmatprep.subr.bf16.mxu0 %v3425
    %4075 = vmatpush1.bf16.msra.mxu0 %v3424
    %4076 = vmatprep.subr.bf16.mxu0 %v3429
    %4077 = vmatpush1.bf16.msra.mxu0 %v3428
    %4078 = vmatprep.subr.bf16.mxu0 %v3433
    %4079 = vmatpush1.bf16.msra.mxu0 %v3432
    %4080 = vmatprep.subr.bf16.mxu0 %v3437
    %4081 = vmatpush1.bf16.msra.mxu0 %v3436
    %4082 = vmatprep.mubr.bf16.mxu0 %v2321
    %4083 = vmatmul.mubr.bf16.gmra.mrb[0].mxu0 %v2320
    %v4084 = vpop.f32.mrb[0].mxu0
    %v4085 = vadd.f32 %v2597, %v4084
    %v4086 = vpop.f32.mrb[0].mxu0
    %v4087 = vadd.f32 %v2601, %v4086
    %v4088 = vpop.f32.mrb[0].mxu0
    %v4089 = vpop.f32.mrb[0].mxu0
    %4090 = vdwg.mxu0
    %4091 = vmatprep.subr.bf16.mxu0 %v3441
    %4092 = vmatpush1.bf16.msra.mxu0 %v3440
    %4093 = vmatprep.subr.bf16.mxu0 %v3445
    %4094 = vmatpush1.bf16.msra.mxu0 %v3444
    %4095 = vmatprep.subr.bf16.mxu0 %v3449
    %4096 = vmatpush1.bf16.msra.mxu0 %v3448
    %4097 = vmatprep.subr.bf16.mxu0 %v3453
    %4098 = vmatpush1.bf16.msra.mxu0 %v3452
    %4099 = vmatprep.subr.bf16.mxu0 %v3457
    %4100 = vmatpush1.bf16.msra.mxu0 %v3456
    %4101 = vmatprep.subr.bf16.mxu0 %v3461
    %4102 = vmatpush1.bf16.msra.mxu0 %v3460
    %4103 = vmatprep.subr.bf16.mxu0 %v3465
    %4104 = vmatpush1.bf16.msra.mxu0 %v3464
    %4105 = vmatprep.subr.bf16.mxu0 %v3469
    %4106 = vmatpush1.bf16.msra.mxu0 %v3468
    %4107 = vmatprep.subr.bf16.mxu0 %v3473
    %4108 = vmatpush1.bf16.msra.mxu0 %v3472
    %4109 = vmatprep.subr.bf16.mxu0 %v3477
    %4110 = vmatpush1.bf16.msra.mxu0 %v3476
    %4111 = vmatprep.subr.bf16.mxu0 %v3481
    %4112 = vmatpush1.bf16.msra.mxu0 %v3480
    %4113 = vmatprep.subr.bf16.mxu0 %v3485
    %4114 = vmatpush1.bf16.msra.mxu0 %v3484
    %4115 = vmatprep.subr.bf16.mxu0 %v3489
    %4116 = vmatpush1.bf16.msra.mxu0 %v3488
    %4117 = vmatprep.subr.bf16.mxu0 %v3493
    %4118 = vmatpush1.bf16.msra.mxu0 %v3492
    %4119 = vmatprep.subr.bf16.mxu0 %v3497
    %4120 = vmatpush1.bf16.msra.mxu0 %v3496
    %4121 = vmatprep.subr.bf16.mxu0 %v3501
    %4122 = vmatpush1.bf16.msra.mxu0 %v3500
    %4123 = vmatprep.mubr.bf16.mxu0 %v2323
    %4124 = vmatmul.mubr.bf16.gmra.mrb[0].mxu0 %v2322
    %v4125 = vpop.f32.mrb[0].mxu0
    %v4126 = vadd.f32 %v4085, %v4125
    %v4127 = vpop.f32.mrb[0].mxu0
    %v4128 = vadd.f32 %v4087, %v4127
    %v4129 = vpop.f32.mrb[0].mxu0
    %v4130 = vpop.f32.mrb[0].mxu0
    %4131 = vdwg.mxu0
    %4132 = vmatprep.subr.bf16.mxu0 %v3505
    %4133 = vmatpush1.bf16.msra.mxu0 %v3504
    %4134 = vmatprep.subr.bf16.mxu0 %v3509
    %4135 = vmatpush1.bf16.msra.mxu0 %v3508
    %4136 = vmatprep.subr.bf16.mxu0 %v3513
    %4137 = vmatpush1.bf16.msra.mxu0 %v3512
    %4138 = vmatprep.subr.bf16.mxu0 %v3517
    %4139 = vmatpush1.bf16.msra.mxu0 %v3516
    %4140 = vmatprep.subr.bf16.mxu0 %v3521
    %4141 = vmatpush1.bf16.msra.mxu0 %v3520
    %4142 = vmatprep.subr.bf16.mxu0 %v3525
    %4143 = vmatpush1.bf16.msra.mxu0 %v3524
    %4144 = vmatprep.subr.bf16.mxu0 %v3529
    %4145 = vmatpush1.bf16.msra.mxu0 %v3528
    %4146 = vmatprep.subr.bf16.mxu0 %v3533
    %4147 = vmatpush1.bf16.msra.mxu0 %v3532
    %4148 = vmatprep.subr.bf16.mxu0 %v3537
    %4149 = vmatpush1.bf16.msra.mxu0 %v3536
    %4150 = vmatprep.subr.bf16.mxu0 %v3541
    %4151 = vmatpush1.bf16.msra.mxu0 %v3540
    %4152 = vmatprep.subr.bf16.mxu0 %v3545
    %4153 = vmatpush1.bf16.msra.mxu0 %v3544
    %4154 = vmatprep.subr.bf16.mxu0 %v3549
    %4155 = vmatpush1.bf16.msra.mxu0 %v3548
    %4156 = vmatprep.subr.bf16.mxu0 %v3553
    %4157 = vmatpush1.bf16.msra.mxu0 %v3552
    %4158 = vmatprep.subr.bf16.mxu0 %v3557
    %4159 = vmatpush1.bf16.msra.mxu0 %v3556
    %4160 = vmatprep.subr.bf16.mxu0 %v3561
    %4161 = vmatpush1.bf16.msra.mxu0 %v3560
    %4162 = vmatprep.subr.bf16.mxu0 %v3565
    %4163 = vmatpush1.bf16.msra.mxu0 %v3564
    %4164 = vmatprep.mubr.bf16.mxu0 %v2325
    %4165 = vmatmul.mubr.bf16.gmra.mrb[0].mxu0 %v2324
    %v4166 = vpop.f32.mrb[0].mxu0
    %v4167 = vadd.f32 %v4126, %v4166
    %v4168 = vpop.f32.mrb[0].mxu0
    %v4169 = vadd.f32 %v4128, %v4168
    %v4170 = vpop.f32.mrb[0].mxu0
    %v4171 = vpop.f32.mrb[0].mxu0
    %4172 = vdwg.mxu0
    %4173 = vmatprep.subr.bf16.mxu0 %v3569
    %4174 = vmatpush1.bf16.msra.mxu0 %v3568
    %4175 = vmatprep.subr.bf16.mxu0 %v3573
    %4176 = vmatpush1.bf16.msra.mxu0 %v3572
    %4177 = vmatprep.subr.bf16.mxu0 %v3577
    %4178 = vmatpush1.bf16.msra.mxu0 %v3576
    %4179 = vmatprep.subr.bf16.mxu0 %v3581
    %4180 = vmatpush1.bf16.msra.mxu0 %v3580
    %4181 = vmatprep.subr.bf16.mxu0 %v3585
    %4182 = vmatpush1.bf16.msra.mxu0 %v3584
    %4183 = vmatprep.subr.bf16.mxu0 %v3589
    %4184 = vmatpush1.bf16.msra.mxu0 %v3588
    %4185 = vmatprep.subr.bf16.mxu0 %v3593
    %4186 = vmatpush1.bf16.msra.mxu0 %v3592
    %4187 = vmatprep.subr.bf16.mxu0 %v3597
    %4188 = vmatpush1.bf16.msra.mxu0 %v3596
    %4189 = vmatprep.subr.bf16.mxu0 %v3601
    %4190 = vmatpush1.bf16.msra.mxu0 %v3600
    %4191 = vmatprep.subr.bf16.mxu0 %v3605
    %4192 = vmatpush1.bf16.msra.mxu0 %v3604
    %4193 = vmatprep.subr.bf16.mxu0 %v3609
    %4194 = vmatpush1.bf16.msra.mxu0 %v3608
    %4195 = vmatprep.subr.bf16.mxu0 %v3613
    %4196 = vmatpush1.bf16.msra.mxu0 %v3612
    %4197 = vmatprep.subr.bf16.mxu0 %v3617
    %4198 = vmatpush1.bf16.msra.mxu0 %v3616
    %4199 = vmatprep.subr.bf16.mxu0 %v3621
    %4200 = vmatpush1.bf16.msra.mxu0 %v3620
    %4201 = vmatprep.subr.bf16.mxu0 %v3625
    %4202 = vmatpush1.bf16.msra.mxu0 %v3624
    %4203 = vmatprep.subr.bf16.mxu0 %v3629
    %4204 = vmatpush1.bf16.msra.mxu0 %v3628
    %4205 = vmatprep.mubr.bf16.mxu0 %v2327
    %4206 = vmatmul.mubr.bf16.gmra.mrb[0].mxu0 %v2326
    %v4207 = vpop.f32.mrb[0].mxu0
    %v4208 = vadd.f32 %v4167, %v4207
    %v4209 = vpop.f32.mrb[0].mxu0
    %v4210 = vadd.f32 %v4169, %v4209
    %v4211 = vpop.f32.mrb[0].mxu0
    %v4212 = vpop.f32.mrb[0].mxu0
    %4213 = vdwg.mxu0
    %v4214 = vmax.f32 %v4044, 0.0
    %v4215 = vmax.f32 %v4046, 0.0
    %v4216 = vmax.f32 %v4208, 0.0
    %v4217 = vmax.f32 %v4210, 0.0
    %v4218 = vpack.c.bf16 %v4214, %v4214
    %v4219 = vpack.c.bf16 %v4215, %v4215
    %v4220 = vpack.c.bf16 %v4216, %v4216
    %v4221 = vpack.c.bf16 %v4217, %v4217
    %v4222 = vld [vmem:[#allocation10] sm:$0xf]
    %v4223 = vld [vmem:[#allocation10 + $0x4] sm:$0xf]
    %v4224 = vld [vmem:[#allocation10 + $0x8] sm:$0xf]
    %v4225 = vld [vmem:[#allocation10 + $0xc] sm:$0xf]
    %v4226 = vld [vmem:[#allocation10 + $0x10] sm:$0xf]
    %v4227 = vld [vmem:[#allocation10 + $0x14] sm:$0xf]
    %v4228 = vld [vmem:[#allocation10 + $0x18] sm:$0xf]
    %v4229 = vld [vmem:[#allocation10 + $0x1c] sm:$0xf]
    %v4230 = vld [vmem:[#allocation10 + $0x20] sm:$0xf]
    %v4231 = vld [vmem:[#allocation10 + $0x24] sm:$0xf]
    %v4232 = vld [vmem:[#allocation10 + $0x28] sm:$0xf]
    %v4233 = vld [vmem:[#allocation10 + $0x2c] sm:$0xf]
    %v4234 = vld [vmem:[#allocation10 + $0x30] sm:$0xf]
    %v4235 = vld [vmem:[#allocation10 + $0x34] sm:$0xf]
    %v4236 = vld [vmem:[#allocation10 + $0x38] sm:$0xf]
    %v4237 = vld [vmem:[#allocation10 + $0x3c] sm:$0xf]
    %v4238 = vld [vmem:[#allocation10 + $0x40] sm:$0xf]
    %v4239 = vld [vmem:[#allocation10 + $0x44] sm:$0xf]
    %v4240 = vld [vmem:[#allocation10 + $0x48] sm:$0xf]
    %v4241 = vld [vmem:[#allocation10 + $0x4c] sm:$0xf]
    %v4242 = vld [vmem:[#allocation10 + $0x50] sm:$0xf]
    %v4243 = vld [vmem:[#allocation10 + $0x54] sm:$0xf]
    %v4244 = vld [vmem:[#allocation10 + $0x58] sm:$0xf]
    %v4245 = vld [vmem:[#allocation10 + $0x5c] sm:$0xf]
    %v4246 = vld [vmem:[#allocation10 + $0x60] sm:$0xf]
    %v4247 = vld [vmem:[#allocation10 + $0x64] sm:$0xf]
    %v4248 = vld [vmem:[#allocation10 + $0x68] sm:$0xf]
    %v4249 = vld [vmem:[#allocation10 + $0x6c] sm:$0xf]
    %v4250 = vld [vmem:[#allocation10 + $0x70] sm:$0xf]
    %v4251 = vld [vmem:[#allocation10 + $0x74] sm:$0xf]
    %v4252 = vld [vmem:[#allocation10 + $0x78] sm:$0xf]
    %v4253 = vld [vmem:[#allocation10 + $0x7c] sm:$0xf]
    %v4254 = vld [vmem:[#allocation10 + $0x80] sm:$0xf]
    %v4255 = vld [vmem:[#allocation10 + $0x84] sm:$0xf]
    %v4256 = vld [vmem:[#allocation10 + $0x88] sm:$0xf]
    %v4257 = vld [vmem:[#allocation10 + $0x8c] sm:$0xf]
    %v4258 = vld [vmem:[#allocation10 + $0x90] sm:$0xf]
    %v4259 = vld [vmem:[#allocation10 + $0x94] sm:$0xf]
    %v4260 = vld [vmem:[#allocation10 + $0x98] sm:$0xf]
    %v4261 = vld [vmem:[#allocation10 + $0x9c] sm:$0xf]
    %v4262 = vld [vmem:[#allocation10 + $0xa0] sm:$0xf]
    %v4263 = vld [vmem:[#allocation10 + $0xa4] sm:$0xf]
    %v4264 = vld [vmem:[#allocation10 + $0xa8] sm:$0xf]
    %v4265 = vld [vmem:[#allocation10 + $0xac] sm:$0xf]
    %v4266 = vld [vmem:[#allocation10 + $0xb0] sm:$0xf]
    %v4267 = vld [vmem:[#allocation10 + $0xb4] sm:$0xf]
    %v4268 = vld [vmem:[#allocation10 + $0xb8] sm:$0xf]
    %v4269 = vld [vmem:[#allocation10 + $0xbc] sm:$0xf]
    %v4270 = vld [vmem:[#allocation10 + $0xc0] sm:$0xf]
    %v4271 = vld [vmem:[#allocation10 + $0xc4] sm:$0xf]
    %v4272 = vld [vmem:[#allocation10 + $0xc8] sm:$0xf]
    %v4273 = vld [vmem:[#allocation10 + $0xcc] sm:$0xf]
    %v4274 = vld [vmem:[#allocation10 + $0xd0] sm:$0xf]
    %v4275 = vld [vmem:[#allocation10 + $0xd4] sm:$0xf]
    %v4276 = vld [vmem:[#allocation10 + $0xd8] sm:$0xf]
    %v4277 = vld [vmem:[#allocation10 + $0xdc] sm:$0xf]
    %v4278 = vld [vmem:[#allocation10 + $0xe0] sm:$0xf]
    %v4279 = vld [vmem:[#allocation10 + $0xe4] sm:$0xf]
    %v4280 = vld [vmem:[#allocation10 + $0xe8] sm:$0xf]
    %v4281 = vld [vmem:[#allocation10 + $0xec] sm:$0xf]
    %v4282 = vld [vmem:[#allocation10 + $0xf0] sm:$0xf]
    %v4283 = vld [vmem:[#allocation10 + $0xf4] sm:$0xf]
    %v4284 = vld [vmem:[#allocation10 + $0xf8] sm:$0xf]
    %v4285 = vld [vmem:[#allocation10 + $0xfc] sm:$0xf]
    %v4286 = vld [vmem:[%s8] sm:$0x1]
    %v4288 = vlaneseq
    %v4289 = vshrl.u32 %v4288, 7
    %v4290 = vsub.s32 0, %v4289
    %v4291 = vrot.slane %v4286, %v4290
    %v4357 = vunpack.c.l.b16 %v4222
    %v4358 = vunpack.c.l.b16 %v4223
    %v4359 = vunpack.c.l.b16 %v4224
    %v4360 = vunpack.c.l.b16 %v4225
    %v4361 = vunpack.c.l.b16 %v4226
    %v4362 = vunpack.c.l.b16 %v4227
    %v4363 = vunpack.c.l.b16 %v4228
    %v4364 = vunpack.c.l.b16 %v4229
    %v4365 = vunpack.c.l.b16 %v4230
    %v4366 = vunpack.c.l.b16 %v4231
    %v4367 = vunpack.c.l.b16 %v4232
    %v4368 = vunpack.c.l.b16 %v4233
    %v4369 = vunpack.c.l.b16 %v4234
    %v4370 = vunpack.c.l.b16 %v4235
    %v4371 = vunpack.c.l.b16 %v4236
    %v4372 = vunpack.c.l.b16 %v4237
    %v4373 = vunpack.c.l.b16 %v4238
    %v4374 = vunpack.c.l.b16 %v4239
    %v4375 = vunpack.c.l.b16 %v4240
    %v4376 = vunpack.c.l.b16 %v4241
    %v4377 = vunpack.c.l.b16 %v4242
    %v4378 = vunpack.c.l.b16 %v4243
    %v4379 = vunpack.c.l.b16 %v4244
    %v4380 = vunpack.c.l.b16 %v4245
    %v4381 = vunpack.c.l.b16 %v4246
    %v4382 = vunpack.c.l.b16 %v4247
    %v4383 = vunpack.c.l.b16 %v4248
    %v4384 = vunpack.c.l.b16 %v4249
    %v4385 = vunpack.c.l.b16 %v4250
    %v4386 = vunpack.c.l.b16 %v4251
    %v4387 = vunpack.c.l.b16 %v4252
    %v4388 = vunpack.c.l.b16 %v4253
    %v4389 = vunpack.c.l.b16 %v4254
    %v4390 = vunpack.c.l.b16 %v4255
    %v4391 = vunpack.c.l.b16 %v4256
    %v4392 = vunpack.c.l.b16 %v4257
    %v4393 = vunpack.c.l.b16 %v4258
    %v4394 = vunpack.c.l.b16 %v4259
    %v4395 = vunpack.c.l.b16 %v4260
    %v4396 = vunpack.c.l.b16 %v4261
    %v4397 = vunpack.c.l.b16 %v4262
    %v4398 = vunpack.c.l.b16 %v4263
    %v4399 = vunpack.c.l.b16 %v4264
    %v4400 = vunpack.c.l.b16 %v4265
    %v4401 = vunpack.c.l.b16 %v4266
    %v4402 = vunpack.c.l.b16 %v4267
    %v4403 = vunpack.c.l.b16 %v4268
    %v4404 = vunpack.c.l.b16 %v4269
    %v4405 = vunpack.c.l.b16 %v4270
    %v4406 = vunpack.c.l.b16 %v4271
    %v4407 = vunpack.c.l.b16 %v4272
    %v4408 = vunpack.c.l.b16 %v4273
    %v4409 = vunpack.c.l.b16 %v4274
    %v4410 = vunpack.c.l.b16 %v4275
    %v4411 = vunpack.c.l.b16 %v4276
    %v4412 = vunpack.c.l.b16 %v4277
    %v4413 = vunpack.c.l.b16 %v4278
    %v4414 = vunpack.c.l.b16 %v4279
    %v4415 = vunpack.c.l.b16 %v4280
    %v4416 = vunpack.c.l.b16 %v4281
    %v4417 = vunpack.c.l.b16 %v4282
    %v4418 = vunpack.c.l.b16 %v4283
    %v4419 = vunpack.c.l.b16 %v4284
    %v4420 = vunpack.c.l.b16 %v4285
    %v4421 = vpack.c.b16 %v4358, %v4357
    %v4422 = vpack.c.b16 %v4360, %v4359
    %v4423 = vpack.c.b16 %v4362, %v4361
    %v4424 = vpack.c.b16 %v4364, %v4363
    %v4425 = vpack.c.b16 %v4366, %v4365
    %v4426 = vpack.c.b16 %v4368, %v4367
    %v4427 = vpack.c.b16 %v4370, %v4369
    %v4428 = vpack.c.b16 %v4372, %v4371
    %v4429 = vpack.c.b16 %v4374, %v4373
    %v4430 = vpack.c.b16 %v4376, %v4375
    %v4431 = vpack.c.b16 %v4378, %v4377
    %v4432 = vpack.c.b16 %v4380, %v4379
    %v4433 = vpack.c.b16 %v4382, %v4381
    %v4434 = vpack.c.b16 %v4384, %v4383
    %v4435 = vpack.c.b16 %v4386, %v4385
    %v4436 = vpack.c.b16 %v4388, %v4387
    %v4437 = vpack.c.b16 %v4390, %v4389
    %v4438 = vpack.c.b16 %v4392, %v4391
    %v4439 = vpack.c.b16 %v4394, %v4393
    %v4440 = vpack.c.b16 %v4396, %v4395
    %v4441 = vpack.c.b16 %v4398, %v4397
    %v4442 = vpack.c.b16 %v4400, %v4399
    %v4443 = vpack.c.b16 %v4402, %v4401
    %v4444 = vpack.c.b16 %v4404, %v4403
    %v4445 = vpack.c.b16 %v4406, %v4405
    %v4446 = vpack.c.b16 %v4408, %v4407
    %v4447 = vpack.c.b16 %v4410, %v4409
    %v4448 = vpack.c.b16 %v4412, %v4411
    %v4449 = vpack.c.b16 %v4414, %v4413
    %v4450 = vpack.c.b16 %v4416, %v4415
    %v4451 = vpack.c.b16 %v4418, %v4417
    %v4452 = vpack.c.b16 %v4420, %v4419
    %4485 = vmatprep.subr.bf16.mxu0 0
    %4486 = vmatpush1.bf16.msra.mxu0 %v4421
    %4487 = vmatprep.subr.bf16.mxu0 0
    %4488 = vmatpush1.bf16.msra.mxu0 %v4422
    %4489 = vmatprep.subr.bf16.mxu0 0
    %4490 = vmatpush1.bf16.msra.mxu0 %v4423
    %4491 = vmatprep.subr.bf16.mxu0 0
    %4492 = vmatpush1.bf16.msra.mxu0 %v4424
    %4493 = vmatprep.subr.bf16.mxu0 0
    %4494 = vmatpush1.bf16.msra.mxu0 %v4425
    %4495 = vmatprep.subr.bf16.mxu0 0
    %4496 = vmatpush1.bf16.msra.mxu0 %v4426
    %4497 = vmatprep.subr.bf16.mxu0 0
    %4498 = vmatpush1.bf16.msra.mxu0 %v4427
    %4499 = vmatprep.subr.bf16.mxu0 0
    %4500 = vmatpush1.bf16.msra.mxu0 %v4428
    %4501 = vmatprep.subr.bf16.mxu0 0
    %4502 = vmatpush1.bf16.msra.mxu0 %v4429
    %4503 = vmatprep.subr.bf16.mxu0 0
    %4504 = vmatpush1.bf16.msra.mxu0 %v4430
    %4505 = vmatprep.subr.bf16.mxu0 0
    %4506 = vmatpush1.bf16.msra.mxu0 %v4431
    %4507 = vmatprep.subr.bf16.mxu0 0
    %4508 = vmatpush1.bf16.msra.mxu0 %v4432
    %4509 = vmatprep.subr.bf16.mxu0 0
    %4510 = vmatpush1.bf16.msra.mxu0 %v4433
    %4511 = vmatprep.subr.bf16.mxu0 0
    %4512 = vmatpush1.bf16.msra.mxu0 %v4434
    %4513 = vmatprep.subr.bf16.mxu0 0
    %4514 = vmatpush1.bf16.msra.mxu0 %v4435
    %4515 = vmatprep.subr.bf16.mxu0 0
    %4516 = vmatpush1.bf16.msra.mxu0 %v4436
    %4517 = vmatprep.mubr.bf16.mxu0 %v4219
    %4518 = vmatmul.mubr.bf16.gmra.mrb[0].mxu0 %v4218
    %v4519 = vpop.f32.mrb[0].mxu0
    %v4520 = vadd.f32 %v4291, %v4519
    %v4521 = vpop.f32.mrb[0].mxu0
    %v4522 = vpop.f32.mrb[0].mxu0
    %v4523 = vpop.f32.mrb[0].mxu0
    %4524 = vdwg.mxu0
    %4525 = vmatprep.subr.bf16.mxu0 0
    %4526 = vmatpush1.bf16.msra.mxu0 %v4437
    %4527 = vmatprep.subr.bf16.mxu0 0
    %4528 = vmatpush1.bf16.msra.mxu0 %v4438
    %4529 = vmatprep.subr.bf16.mxu0 0
    %4530 = vmatpush1.bf16.msra.mxu0 %v4439
    %4531 = vmatprep.subr.bf16.mxu0 0
    %4532 = vmatpush1.bf16.msra.mxu0 %v4440
    %4533 = vmatprep.subr.bf16.mxu0 0
    %4534 = vmatpush1.bf16.msra.mxu0 %v4441
    %4535 = vmatprep.subr.bf16.mxu0 0
    %4536 = vmatpush1.bf16.msra.mxu0 %v4442
    %4537 = vmatprep.subr.bf16.mxu0 0
    %4538 = vmatpush1.bf16.msra.mxu0 %v4443
    %4539 = vmatprep.subr.bf16.mxu0 0
    %4540 = vmatpush1.bf16.msra.mxu0 %v4444
    %4541 = vmatprep.subr.bf16.mxu0 0
    %4542 = vmatpush1.bf16.msra.mxu0 %v4445
    %4543 = vmatprep.subr.bf16.mxu0 0
    %4544 = vmatpush1.bf16.msra.mxu0 %v4446
    %4545 = vmatprep.subr.bf16.mxu0 0
    %4546 = vmatpush1.bf16.msra.mxu0 %v4447
    %4547 = vmatprep.subr.bf16.mxu0 0
    %4548 = vmatpush1.bf16.msra.mxu0 %v4448
    %4549 = vmatprep.subr.bf16.mxu0 0
    %4550 = vmatpush1.bf16.msra.mxu0 %v4449
    %4551 = vmatprep.subr.bf16.mxu0 0
    %4552 = vmatpush1.bf16.msra.mxu0 %v4450
    %4553 = vmatprep.subr.bf16.mxu0 0
    %4554 = vmatpush1.bf16.msra.mxu0 %v4451
    %4555 = vmatprep.subr.bf16.mxu0 0
    %4556 = vmatpush1.bf16.msra.mxu0 %v4452
    %4557 = vmatprep.mubr.bf16.mxu0 %v4221
    %4558 = vmatmul.mubr.bf16.gmra.mrb[0].mxu0 %v4220
    %v4559 = vpop.f32.mrb[0].mxu0
    %v4560 = vadd.f32 %v4520, %v4559
    %v4561 = vpop.f32.mrb[0].mxu0
    %v4562 = vpop.f32.mrb[0].mxu0
    %v4563 = vpop.f32.mrb[0].mxu0
    %4564 = vdwg.mxu0
    %4565 = vst [vmem:[#allocation11] sm:$0xff] %v4560
    // Predicated region
    $region58: #{tpu_custom_call.1} parent=1 // pred_check
      _
    $region59: #{tpu_custom_call.1} parent=1 // pred_check_branch
      %4567 = sbr.rel (0) target = $region61
    $region60: #{tpu_custom_call.1} parent=1 // pred_region
      %s4569 = ssub.s32 128, 128
      %4570 = vsyncadd [#allocation4], %s4569
      %s4572 = sshll.u32 [#allocation11], 4
      %s4573 = int_to_ptr.vmem [resolvable:$true] %s4572
      %4575 = dma.vmem_to_hbm [thread:$0]  %s4573, 128, %s9, [#allocation4]
    $region61: #{tpu_custom_call.1} parent=1 // pred_fallthru
      _
    // Predicated region
    $region62: #{tpu_custom_call.1} parent=1 // pred_check
      _
    $region63: #{tpu_custom_call.1} parent=1 // pred_check_branch
      %4577 = sbr.rel (0) target = $region65
    $region64: #{tpu_custom_call.1} parent=1 // pred_region
      %4578 = dma.done [#allocation4], 128
    $region65: #{tpu_custom_call.1} parent=1 // pred_fallthru
      _
    %4579 = vsyncpa [#allocation3], 1
    %4580 = vsyncpa [#allocation6], 1
    %4581 = vsyncpa [#allocation9], 1
    %4582 = vsyncpa [#allocation4], 1

</llo_original>
